<compile_context>
chip_gen: v7x
topology: tpu7x:2x2x1
jax: 0.10.0
libtpu: 0.0.40
codegen_flags: <defaults>
</compile_context>

<pallas_src>
import functools

import jax
import jax.numpy as jnp
from jax.experimental import pallas as pl
from jax.experimental.pallas import tpu as pltpu

LANE = 128
_M_GRID_THRESHOLD = 4096   # rows; below this one whole-array VMEM block is cheaper
_M_TILE = 512              # M tile for the large-batch grid path


def _round_up(n, m):
    return ((n + m - 1) // m) * m


def _vmem_spec():
    return pl.BlockSpec(memory_space=pltpu.MemorySpace.VMEM)


# ---------------------------------------------------------------------------
# Pallas kernels
# ---------------------------------------------------------------------------
def _gemm_bias_relu_kernel(x_ref, w_ref, b_ref, o_ref):
    acc = jnp.dot(x_ref[...], w_ref[...], preferred_element_type=jnp.float32)
    o_ref[...] = jnp.maximum(acc + b_ref[...], 0.0).astype(o_ref.dtype)


def _conv3_fc_head_kernel(p_ref, w3_ref, b3_ref, fcw_ref, fcb_ref,
                          wh_ref, bh_ref, o_ref, h_acc):
    """Fused conv3 (per-position GEMM) + fc (LeakyReLU) + head.

    p_ref:   (P, BP, K3)  bf16  conv3 im2col patches (P = 7*7 positions)
    w3_ref:  (K3, C3)     bf16  b3_ref: (1, C3) f32
    fcw_ref: (P, C3, HID) bf16  fcb_ref: (1, HID) f32
    wh_ref:  (HID, NAp)   bf16  bh_ref: (1, NAp) f32
    o_ref:   (BP, NAp)    f32
    h_acc:   (BP, HID)    f32 scratch -- the 512-wide hidden never touches HBM
    """
    n_pos = p_ref.shape[0]
    h_acc[...] = jnp.zeros_like(h_acc)

    def body(p, carry):
        z = jnp.dot(p_ref[p], w3_ref[...], preferred_element_type=jnp.float32)
        z = jnp.maximum(z + b3_ref[...], 0.0).astype(jnp.bfloat16)        # conv3 ReLU
        h_acc[...] += jnp.dot(z, fcw_ref[p], preferred_element_type=jnp.float32)
        return carry

    jax.lax.fori_loop(0, n_pos, body, 0)

    h = h_acc[...] + fcb_ref[...]
    h = jnp.maximum(h, 0.01 * h)                                          # LeakyReLU(0.01)
    q = jnp.dot(h.astype(jnp.bfloat16), wh_ref[...],
                preferred_element_type=jnp.float32)
    o_ref[...] = (q + bh_ref[...]).astype(o_ref.dtype)


# ---------------------------------------------------------------------------
# GEMM wrapper (small-batch whole-array block / large-batch M-tiled grid)
# ---------------------------------------------------------------------------
def gemm_bias_relu(x, w, b, out_dtype=jnp.bfloat16):
    """relu(x @ w + b); x:(M,K), w:(K,N) bf16, b:(1,N) f32; lane-dense output."""
    M, K = x.shape
    N = w.shape[1]
    x = x.astype(jnp.bfloat16)

    if M < _M_GRID_THRESHOLD:
        # Tiny batch: one VMEM block per array, no per-grid-step overhead.
        return pl.pallas_call(
            _gemm_bias_relu_kernel,
            out_shape=jax.ShapeDtypeStruct((M, N), out_dtype),
            in_specs=[_vmem_spec()] * 3,
            out_specs=_vmem_spec(),
        )(x, w, b)

    # Training-sized batch: tile M, shard across TensorCores (v7x megacore),
    # grid-invariant weights, double-buffered patch DMA.
    Mp = _round_up(M, _M_TILE)
    if Mp != M:
        x = jnp.pad(x, ((0, Mp - M), (0, 0)))
    y = pl.pallas_call(
        _gemm_bias_relu_kernel,
        out_shape=jax.ShapeDtypeStruct((Mp, N), out_dtype),
        grid=(Mp // _M_TILE,),
        in_specs=[pl.BlockSpec((_M_TILE, K), lambda i: (i, 0)),
                  pl.BlockSpec((K, N), lambda i: (0, 0)),
                  pl.BlockSpec((1, N), lambda i: (0, 0))],
        out_specs=pl.BlockSpec((_M_TILE, N), lambda i: (i, 0)),
        compiler_params=pltpu.CompilerParams(
            dimension_semantics=("parallel",)),
    )(x, w, b)
    return y[:M] if Mp != M else y


# ---------------------------------------------------------------------------
# Conv-as-GEMM glue (NHWC, no per-layer layout shuffles)
# ---------------------------------------------------------------------------
def _im2col_nhwc(x, kh, kw, stride):
    """x:(B,H,W,C) -> (B*OH*OW, kh*kw*C) patches, feature order (i, j, c).

    When kw == 2*stride the width windows are built from two (stride*C)-wide
    groups instead of kw separate C-wide slices, so every concatenated chunk
    is >= stride*C lanes (32 for conv1) -- avoids many narrow XLA copies.
    """
    B, H, W, C = x.shape
    OH = (H - kh) // stride + 1
    OW = (W - kw) // stride + 1
    if kw == 2 * stride and W % stride == 0 and W // stride >= OW + 1:
        xg = x.reshape(B, H, W // stride, stride * C)
        z = jnp.concatenate([xg[:, :, :OW, :], xg[:, :, 1:OW + 1, :]], axis=-1)
        cols = [z[:, i:i + stride * OH:stride, :, :] for i in range(kh)]
    else:
        cols = [x[:, i:i + stride * OH:stride, j:j + stride * OW:stride, :]
                for i in range(kh) for j in range(kw)]
    p = jnp.concatenate(cols, axis=-1)                 # (B, OH, OW, kh*kw*C)
    return p.reshape(B * OH * OW, kh * kw * C), OH, OW


def conv2d_relu_nhwc(x, w_mat, b_row, kh, kw, stride):
    """Valid conv + ReLU on NHWC input via im2col + Pallas GEMM (bf16 out)."""
    B = x.shape[0]
    patches, OH, OW = _im2col_nhwc(x, kh, kw, stride)
    y = gemm_bias_relu(patches, w_mat, b_row)          # (B*OH*OW, OCp), lane-dense
    return y.reshape(B, OH, OW, w_mat.shape[1])


def conv3_fc_head(x, w3, b3, fc_w3, fc_b, head_w, head_b):
    """Fused conv3 + fc + head.  x: (B, 9, 9, 128) NHWC -> (B, NAp) f32."""
    B = x.shape[0]
    patches, OH, OW = _im2col_nhwc(x, 3, 3, 1)         # (B*P, K3)
    P = OH * OW
    K3 = patches.shape[1]
    assert P == fc_w3.shape[0], (P, fc_w3.shape)
    BP = _round_up(B, 8)
    patches = patches.reshape(B, P, K3).transpose(1, 0, 2)      # (P, B, K3)
    if BP != B:
        patches = jnp.pad(patches, ((0, 0), (0, BP - B), (0, 0)))
    patches = patches.astype(jnp.bfloat16)

    hid = fc_w3.shape[2]
    nap = head_w.shape[1]
    q = pl.pallas_call(
        _conv3_fc_head_kernel,
        out_shape=jax.ShapeDtypeStruct((BP, nap), jnp.float32),
        in_specs=[_vmem_spec()] * 7,
        out_specs=_vmem_spec(),
        scratch_shapes=[pltpu.VMEM((BP, hid), jnp.float32)],
    )(patches, w3, b3, fc_w3, fc_b, head_w, head_b)
    return q[:B]


# ---------------------------------------------------------------------------
# One-time parameter prep (hoisted out of the forward pass)
# ---------------------------------------------------------------------------
def _prep_conv(w, b, icp, ocp):
    """PyTorch OIHW conv weight -> (kh*kw*icp, ocp) bf16 GEMM matrix + f32 bias."""
    oc, ic, kh, kw = w.shape
    w = jnp.pad(w, ((0, ocp - oc), (0, icp - ic), (0, 0), (0, 0)))
    w_mat = w.transpose(2, 3, 1, 0).reshape(kh * kw * icp, ocp).astype(jnp.bfloat16)
    b_row = jnp.pad(b, (0, ocp - oc)).reshape(1, ocp).astype(jnp.float32)
    return w_mat, b_row


def prepare_params(params):
    """Pad / permute / cast weights once at init; the forward takes this dict."""
    c_in = params["conv1_w"].shape[1]
    w1, b1 = _prep_conv(params["conv1_w"], params["conv1_b"], c_in, LANE)
    w2, b2 = _prep_conv(params["conv2_w"], params["conv2_b"], LANE, LANE)
    # conv3's output never reaches HBM (fused with fc/head), so its output
    # channels stay at the real 64: the fc weight keeps its real 3136xHID size.
    oc3 = params["conv3_w"].shape[0]
    w3, b3 = _prep_conv(params["conv3_w"], params["conv3_b"], LANE, oc3)

    hidden, flat = params["fc_w"].shape                # (512, 3136)
    sp = int(round((flat // oc3) ** 0.5))              # 7 (pins input to 84x84)
    assert flat == oc3 * sp * sp, (flat, oc3, sp)
    # PyTorch flattens NCHW (c, h, w); reindex to (p, c, n) so the fused kernel
    # contracts over the 64 channels at each of the P = sp*sp positions.
    fc_w3 = (params["fc_w"].reshape(hidden, oc3, sp, sp)
             .transpose(2, 3, 1, 0).reshape(sp * sp, oc3, hidden)
             .astype(jnp.bfloat16))
    fc_b = params["fc_b"].reshape(1, hidden).astype(jnp.float32)

    na = params["head_w"].shape[0]
    nap = _round_up(na, LANE)
    head_w = jnp.pad(params["head_w"].T, ((0, 0), (0, nap - na))).astype(jnp.bfloat16)
    head_b = jnp.pad(params["head_b"], (0, nap - na)).reshape(1, nap).astype(jnp.float32)

    return dict(w1=w1, b1=b1, w2=w2, b2=b2, w3=w3, b3=b3,
                fc_w3=fc_w3, fc_b=fc_b, head_w=head_w, head_b=head_b)


# ---------------------------------------------------------------------------
# DQN forward (matches the PyTorch module semantics)
# ---------------------------------------------------------------------------
@functools.partial(jax.jit, static_argnames=("num_actions",))
def dqn_forward(prep, x, *, num_actions):
    """Forward pass. `prep` = prepare_params(raw_params), computed once at init."""
    x = x.transpose(0, 2, 3, 1)                                  # NCHW -> NHWC (once)
    x = conv2d_relu_nhwc(x, prep["w1"], prep["b1"], 8, 8, 4)     # (B, 20, 20, 128)
    x = conv2d_relu_nhwc(x, prep["w2"], prep["b2"], 4, 4, 2)     # (B,  9,  9, 128)
    q = conv3_fc_head(x, prep["w3"], prep["b3"], prep["fc_w3"], prep["fc_b"],
                      prep["head_w"], prep["head_b"])            # (B, NAp) f32
    return q[:, :num_actions]


# Pure-JAX reference for correctness checking.
def dqn_reference(params, x):
    def conv(x, w, b, s):
        y = jax.lax.conv_general_dilated(
            x, w, (s, s), "VALID", dimension_numbers=("NCHW", "OIHW", "NCHW"))
        return jax.nn.relu(y + b[None, :, None, None])

    x = conv(x, params["conv1_w"], params["conv1_b"], 4)
    x = conv(x, params["conv2_w"], params["conv2_b"], 2)
    x = conv(x, params["conv3_w"], params["conv3_b"], 1)
    x = x.reshape(x.shape[0], -1)
    x = jnp.dot(x, params["fc_w"].T) + params["fc_b"]
    x = jnp.where(x >= 0.0, x, 0.01 * x)
    return jnp.dot(x, params["head_w"].T) + params["head_b"]


def init_params(key, channels, num_actions):
    ks = jax.random.split(key, 10)

    def w_init(k, shape, fan_in):
        return (jax.random.normal(k, shape, jnp.float32) / jnp.sqrt(fan_in)).astype(jnp.float32)

    return {
        "conv1_w": w_init(ks[0], (32, channels, 8, 8), channels * 64),
        "conv1_b": w_init(ks[1], (32,), channels * 64),
        "conv2_w": w_init(ks[2], (64, 32, 4, 4), 32 * 16),
        "conv2_b": w_init(ks[3], (64,), 32 * 16),
        "conv3_w": w_init(ks[4], (64, 64, 3, 3), 64 * 9),
        "conv3_b": w_init(ks[5], (64,), 64 * 9),
        "fc_w": w_init(ks[6], (512, 3136), 3136),
        "fc_b": w_init(ks[7], (512,), 3136),
        "head_w": w_init(ks[8], (num_actions, 512), 512),
        "head_b": w_init(ks[9], (num_actions,), 512),
    }


if __name__ == "__main__":
    # fc expects 3136 = 64*7*7 features, which pins the input spatial size to
    # 84x84 (standard Atari DQN).  Batch and channel counts kept small.
    B, C, H, W = 2, 4, 84, 84
    NUM_ACTIONS = 6

    key = jax.random.PRNGKey(0)
    pkey, xkey = jax.random.split(key)
    params = init_params(pkey, C, NUM_ACTIONS)
    x = jax.random.normal(xkey, (B, C, H, W), jnp.float32)

    prep = jax.block_until_ready(prepare_params(params))   # one-time, outside forward

    q = jax.block_until_ready(dqn_forward(prep, x, num_actions=NUM_ACTIONS))
    q_ref = jax.block_until_ready(jax.jit(dqn_reference)(params, x))

    assert q.shape == (B, NUM_ACTIONS), q.shape
    assert bool(jnp.all(jnp.isfinite(q)))
    # Both paths use bf16 MXU inputs with f32 accumulation.
    assert jnp.allclose(q, q_ref, rtol=3e-2, atol=3e-2), (q, q_ref)

    print("KERNEL_OK")
</pallas_src>

<mosaic_0001>
module attributes {stable_mosaic.version = 11 : i64} {
  func.func @_gemm_bias_relu_kernel(%arg0: memref<800x256xbf16, #tpu.memory_space<vmem>>, %arg1: memref<256x128xbf16, #tpu.memory_space<vmem>>, %arg2: memref<1x128xf32, #tpu.memory_space<vmem>>, %arg3: memref<800x128xbf16, #tpu.memory_space<vmem>>) attributes {dimension_semantics = [], scalar_prefetch = 0 : i64, scratch_operands = 0 : i64, tpu.core_type = #tpu.core_type<tc>} {
    %c0 = arith.constant 0 : index
    %c0_0 = arith.constant 0 : index
    %0 = vector.load %arg0[%c0, %c0_0] : memref<800x256xbf16, #tpu.memory_space<vmem>>, vector<800x256xbf16>
    %c0_1 = arith.constant 0 : index
    %c0_2 = arith.constant 0 : index
    %1 = vector.load %arg1[%c0_1, %c0_2] : memref<256x128xbf16, #tpu.memory_space<vmem>>, vector<256x128xbf16>
    %cst = arith.constant dense<0.000000e+00> : vector<800x128xf32>
    %2 = tpu.matmul %0, %1, %cst {dimension_numbers = #tpu.dot_dimension_numbers<[1], [0], [0], [1], [0, 0, 1, 1], [], []>} : vector<800x256xbf16>, vector<256x128xbf16>, vector<800x128xf32> -> vector<800x128xf32>
    %c0_3 = arith.constant 0 : index
    %c0_4 = arith.constant 0 : index
    %3 = vector.load %arg2[%c0_3, %c0_4] : memref<1x128xf32, #tpu.memory_space<vmem>>, vector<1x128xf32>
    %4 = vector.broadcast %3 : vector<1x128xf32> to vector<800x128xf32>
    %5 = arith.addf %2, %4 : vector<800x128xf32>
    %cst_5 = arith.constant 0.000000e+00 : f32
    %6 = vector.broadcast %cst_5 : f32 to vector<800x128xf32>
    %7 = arith.maximumf %5, %6 : vector<800x128xf32>
    %8 = arith.truncf %7 : vector<800x128xf32> to vector<800x128xbf16>
    %c0_6 = arith.constant 0 : index
    %c0_7 = arith.constant 0 : index
    %9 = vector.load %arg3[%c0_6, %c0_7] : memref<800x128xbf16, #tpu.memory_space<vmem>>, vector<800x128xbf16>
    tpu.vector_store %arg3[%c0_6, %c0_7], %8 {strides = array<i32>} : memref<800x128xbf16, #tpu.memory_space<vmem>>, vector<800x128xbf16>,
    return
  }
}

module attributes {stable_mosaic.version = 11 : i64} {
  func.func @_gemm_bias_relu_kernel(%arg0: memref<162x2048xbf16, #tpu.memory_space<vmem>>, %arg1: memref<2048x128xbf16, #tpu.memory_space<vmem>>, %arg2: memref<1x128xf32, #tpu.memory_space<vmem>>, %arg3: memref<162x128xbf16, #tpu.memory_space<vmem>>) attributes {dimension_semantics = [], scalar_prefetch = 0 : i64, scratch_operands = 0 : i64, tpu.core_type = #tpu.core_type<tc>} {
    %c0 = arith.constant 0 : index
    %c0_0 = arith.constant 0 : index
    %0 = vector.load %arg0[%c0, %c0_0] : memref<162x2048xbf16, #tpu.memory_space<vmem>>, vector<162x2048xbf16>
    %c0_1 = arith.constant 0 : index
    %c0_2 = arith.constant 0 : index
    %1 = vector.load %arg1[%c0_1, %c0_2] : memref<2048x128xbf16, #tpu.memory_space<vmem>>, vector<2048x128xbf16>
    %cst = arith.constant dense<0.000000e+00> : vector<162x128xf32>
    %2 = tpu.matmul %0, %1, %cst {dimension_numbers = #tpu.dot_dimension_numbers<[1], [0], [0], [1], [0, 0, 1, 1], [], []>} : vector<162x2048xbf16>, vector<2048x128xbf16>, vector<162x128xf32> -> vector<162x128xf32>
    %c0_3 = arith.constant 0 : index
    %c0_4 = arith.constant 0 : index
    %3 = vector.load %arg2[%c0_3, %c0_4] : memref<1x128xf32, #tpu.memory_space<vmem>>, vector<1x128xf32>
    %4 = vector.broadcast %3 : vector<1x128xf32> to vector<162x128xf32>
    %5 = arith.addf %2, %4 : vector<162x128xf32>
    %cst_5 = arith.constant 0.000000e+00 : f32
    %6 = vector.broadcast %cst_5 : f32 to vector<162x128xf32>
    %7 = arith.maximumf %5, %6 : vector<162x128xf32>
    %8 = arith.truncf %7 : vector<162x128xf32> to vector<162x128xbf16>
    %c0_6 = arith.constant 0 : index
    %c0_7 = arith.constant 0 : index
    %9 = vector.load %arg3[%c0_6, %c0_7] : memref<162x128xbf16, #tpu.memory_space<vmem>>, vector<162x128xbf16>
    tpu.vector_store %arg3[%c0_6, %c0_7], %8 {strides = array<i32>} : memref<162x128xbf16, #tpu.memory_space<vmem>>, vector<162x128xbf16>,
    return
  }
}

module attributes {stable_mosaic.version = 11 : i64} {
  func.func @_conv3_fc_head_kernel(%arg0: memref<49x8x1152xbf16, #tpu.memory_space<vmem>>, %arg1: memref<1152x64xbf16, #tpu.memory_space<vmem>>, %arg2: memref<1x64xf32, #tpu.memory_space<vmem>>, %arg3: memref<49x64x512xbf16, #tpu.memory_space<vmem>>, %arg4: memref<1x512xf32, #tpu.memory_space<vmem>>, %arg5: memref<512x128xbf16, #tpu.memory_space<vmem>>, %arg6: memref<1x128xf32, #tpu.memory_space<vmem>>, %arg7: memref<8x128xf32, #tpu.memory_space<vmem>>, %arg8: memref<8x512xf32, #tpu.memory_space<vmem>>) attributes {dimension_semantics = [], scalar_prefetch = 0 : i64, scratch_operands = 1 : i64, tpu.core_type = #tpu.core_type<tc>} {
    %cst = arith.constant 0.000000e+00 : f32
    %0 = vector.broadcast %cst : f32 to vector<8x512xf32>
    %c0 = arith.constant 0 : index
    %c0_0 = arith.constant 0 : index
    %1 = vector.load %arg8[%c0, %c0_0] : memref<8x512xf32, #tpu.memory_space<vmem>>, vector<8x512xf32>
    tpu.vector_store %arg8[%c0, %c0_0], %0 {strides = array<i32>} : memref<8x512xf32, #tpu.memory_space<vmem>>, vector<8x512xf32>,
    %c0_i32 = arith.constant 0 : i32
    %c49_i32 = arith.constant 49 : i32
    %2 = arith.addi %c0_i32, %c49_i32 : i32
    %c1_i32 = arith.constant 1 : i32
    scf.for %arg9 = %c0_i32 to %2 step %c1_i32  : i32 {
      %17 = arith.index_cast %arg9 : i32 to index
      %c0_14 = arith.constant 0 : index
      %c0_15 = arith.constant 0 : index
      %18 = vector.load %arg0[%17, %c0_14, %c0_15] : memref<49x8x1152xbf16, #tpu.memory_space<vmem>>, vector<1x8x1152xbf16>
      %19 = vector.shape_cast %18 : vector<1x8x1152xbf16> to vector<8x1152xbf16>
      %c0_16 = arith.constant 0 : index
      %c0_17 = arith.constant 0 : index
      %20 = vector.load %arg1[%c0_16, %c0_17] : memref<1152x64xbf16, #tpu.memory_space<vmem>>, vector<1152x64xbf16>
      %cst_18 = arith.constant dense<0.000000e+00> : vector<8x64xf32>
      %21 = tpu.matmul %19, %20, %cst_18 {dimension_numbers = #tpu.dot_dimension_numbers<[1], [0], [0], [1], [0, 0, 1, 1], [], []>} : vector<8x1152xbf16>, vector<1152x64xbf16>, vector<8x64xf32> -> vector<8x64xf32>
      %c0_19 = arith.constant 0 : index
      %c0_20 = arith.constant 0 : index
      %22 = vector.load %arg2[%c0_19, %c0_20] : memref<1x64xf32, #tpu.memory_space<vmem>>, vector<1x64xf32>
      %23 = vector.broadcast %22 : vector<1x64xf32> to vector<8x64xf32>
      %24 = arith.addf %21, %23 : vector<8x64xf32>
      %cst_21 = arith.constant 0.000000e+00 : f32
      %25 = vector.broadcast %cst_21 : f32 to vector<8x64xf32>
      %26 = arith.maximumf %24, %25 : vector<8x64xf32>
      %27 = arith.truncf %26 : vector<8x64xf32> to vector<8x64xbf16>
      %c0_22 = arith.constant 0 : index
      %c0_23 = arith.constant 0 : index
      %28 = vector.load %arg8[%c0_22, %c0_23] : memref<8x512xf32, #tpu.memory_space<vmem>>, vector<8x512xf32>
      %29 = arith.index_cast %arg9 : i32 to index
      %c0_24 = arith.constant 0 : index
      %c0_25 = arith.constant 0 : index
      %30 = vector.load %arg3[%29, %c0_24, %c0_25] : memref<49x64x512xbf16, #tpu.memory_space<vmem>>, vector<1x64x512xbf16>
      %31 = vector.shape_cast %30 : vector<1x64x512xbf16> to vector<64x512xbf16>
      %cst_26 = arith.constant dense<0.000000e+00> : vector<8x512xf32>
      %32 = tpu.matmul %27, %31, %cst_26 {dimension_numbers = #tpu.dot_dimension_numbers<[1], [0], [0], [1], [0, 0, 1, 1], [], []>} : vector<8x64xbf16>, vector<64x512xbf16>, vector<8x512xf32> -> vector<8x512xf32>
      %33 = arith.addf %28, %32 : vector<8x512xf32>
      %c0_27 = arith.constant 0 : index
      %c0_28 = arith.constant 0 : index
      %34 = vector.load %arg8[%c0_27, %c0_28] : memref<8x512xf32, #tpu.memory_space<vmem>>, vector<8x512xf32>
      tpu.vector_store %arg8[%c0_27, %c0_28], %33 {strides = array<i32>} : memref<8x512xf32, #tpu.memory_space<vmem>>, vector<8x512xf32>,
    }
    %c49_i32_1 = arith.constant 49 : i32
    %c0_2 = arith.constant 0 : index
    %c0_3 = arith.constant 0 : index
    %3 = vector.load %arg8[%c0_2, %c0_3] : memref<8x512xf32, #tpu.memory_space<vmem>>, vector<8x512xf32>
    %c0_4 = arith.constant 0 : index
    %c0_5 = arith.constant 0 : index
    %4 = vector.load %arg4[%c0_4, %c0_5] : memref<1x512xf32, #tpu.memory_space<vmem>>, vector<1x512xf32>
    %5 = vector.broadcast %4 : vector<1x512xf32> to vector<8x512xf32>
    %6 = arith.addf %3, %5 : vector<8x512xf32>
    %cst_6 = arith.constant 0.00999999977 : f32
    %7 = vector.broadcast %cst_6 : f32 to vector<8x512xf32>
    %8 = arith.mulf %7, %6 : vector<8x512xf32>
    %9 = arith.maximumf %6, %8 : vector<8x512xf32>
    %10 = arith.truncf %9 : vector<8x512xf32> to vector<8x512xbf16>
    %c0_7 = arith.constant 0 : index
    %c0_8 = arith.constant 0 : index
    %11 = vector.load %arg5[%c0_7, %c0_8] : memref<512x128xbf16, #tpu.memory_space<vmem>>, vector<512x128xbf16>
    %cst_9 = arith.constant dense<0.000000e+00> : vector<8x128xf32>
    %12 = tpu.matmul %10, %11, %cst_9 {dimension_numbers = #tpu.dot_dimension_numbers<[1], [0], [0], [1], [0, 0, 1, 1], [], []>} : vector<8x512xbf16>, vector<512x128xbf16>, vector<8x128xf32> -> vector<8x128xf32>
    %c0_10 = arith.constant 0 : index
    %c0_11 = arith.constant 0 : index
    %13 = vector.load %arg6[%c0_10, %c0_11] : memref<1x128xf32, #tpu.memory_space<vmem>>, vector<1x128xf32>
    %14 = vector.broadcast %13 : vector<1x128xf32> to vector<8x128xf32>
    %15 = arith.addf %12, %14 : vector<8x128xf32>
    %c0_12 = arith.constant 0 : index
    %c0_13 = arith.constant 0 : index
    %16 = vector.load %arg7[%c0_12, %c0_13] : memref<8x128xf32, #tpu.memory_space<vmem>>, vector<8x128xf32>
    tpu.vector_store %arg7[%c0_12, %c0_13], %15 {strides = array<i32>} : memref<8x128xf32, #tpu.memory_space<vmem>>, vector<8x128xf32>,
    return
  }
}

</mosaic_0001>

<llo_original>
// kernel: dqn_forward.3
$region0: #{dqn_forward.3}
  #allocation0 [shape = 'u32[]', space=smem, size = 0x4, offset = 0x4, fixed_abs, tag = 'smem constant byte address 0x4 - core index']
  #allocation1 [shape = 'u32[144,128]{1,0:T(1,128)}', space=vmem, size = 0x12000, scoped, tag = 'internal scratch']
  %s0 = inlined_call_operand.vmem [shape: bf16[800,256], index: 0, kind: input, shape index: {}]
  %s1 = inlined_call_operand.vmem [shape: bf16[256,128], index: 1, kind: input, shape index: {}]
  %s2 = inlined_call_operand.vmem [shape: f32[1,128], index: 2, kind: input, shape index: {}]
  %s3 = inlined_call_operand.vmem [shape: bf16[800,128], index: 3, kind: output, shape index: {}]
  %s4 = sld [smem:[#allocation0]]
  $region22: #{dqn_forward.3} parent=0
    _
  %s6 = ssub.s32 1, %s4
  %s7 = scalar_select 0, %s6, %s4
  // Predicated region
  $region2: #{dqn_forward.3} parent=0 // pred_check
    _
  $region3: #{dqn_forward.3} parent=0 // pred_check_branch
    %9 = sbr.rel (0) target = $region5
  $region4: #{dqn_forward.3} parent=0 // pred_region
    _
  $region5: #{dqn_forward.3} parent=0 // pred_fallthru
    _
  // Predicated region
  $region6: #{dqn_forward.3} parent=0 // pred_check
    _
  $region7: #{dqn_forward.3} parent=0 // pred_check_branch
    %11 = sbr.rel (0) target = $region9
  $region8: #{dqn_forward.3} parent=0 // pred_region
    _
  $region9: #{dqn_forward.3} parent=0 // pred_fallthru
    _
  // Predicated region
  $region10: #{dqn_forward.3} parent=0 // pred_check
    _
  $region11: #{dqn_forward.3} parent=0 // pred_check_branch
    %13 = sbr.rel (0) target = $region13
  $region12: #{dqn_forward.3} parent=0 // pred_region
    _
  $region13: #{dqn_forward.3} parent=0 // pred_fallthru
    _
  %v15 = vld [vmem:[%s0] sm:$0xff]
  %v16 = vld [vmem:[%s0 + $0x8] sm:$0xff]
  %v17 = vld [vmem:[%s0 + $0x10] sm:$0xff]
  %v18 = vld [vmem:[%s0 + $0x18] sm:$0xff]
  %v19 = vld [vmem:[%s0 + $0x20] sm:$0xff]
  %v20 = vld [vmem:[%s0 + $0x28] sm:$0xff]
  %v21 = vld [vmem:[%s0 + $0x30] sm:$0xff]
  %v22 = vld [vmem:[%s0 + $0x38] sm:$0xff]
  %v23 = vld [vmem:[%s0 + $0x40] sm:$0xff]
  %v24 = vld [vmem:[%s0 + $0x48] sm:$0xff]
  %v25 = vld [vmem:[%s0 + $0x50] sm:$0xff]
  %v26 = vld [vmem:[%s0 + $0x58] sm:$0xff]
  %v27 = vld [vmem:[%s0 + $0x60] sm:$0xff]
  %v28 = vld [vmem:[%s0 + $0x68] sm:$0xff]
  %v29 = vld [vmem:[%s0 + $0x70] sm:$0xff]
  %v30 = vld [vmem:[%s0 + $0x78] sm:$0xff]
  %v31 = vld [vmem:[%s0 + $0x80] sm:$0xff]
  %v32 = vld [vmem:[%s0 + $0x88] sm:$0xff]
  %v33 = vld [vmem:[%s0 + $0x90] sm:$0xff]
  %v34 = vld [vmem:[%s0 + $0x98] sm:$0xff]
  %v35 = vld [vmem:[%s0 + $0xa0] sm:$0xff]
  %v36 = vld [vmem:[%s0 + $0xa8] sm:$0xff]
  %v37 = vld [vmem:[%s0 + $0xb0] sm:$0xff]
  %v38 = vld [vmem:[%s0 + $0xb8] sm:$0xff]
  %v39 = vld [vmem:[%s0 + $0xc0] sm:$0xff]
  %v40 = vld [vmem:[%s0 + $0xc8] sm:$0xff]
  %v41 = vld [vmem:[%s0 + $0xd0] sm:$0xff]
  %v42 = vld [vmem:[%s0 + $0xd8] sm:$0xff]
  %v43 = vld [vmem:[%s0 + $0xe0] sm:$0xff]
  %v44 = vld [vmem:[%s0 + $0xe8] sm:$0xff]
  %v45 = vld [vmem:[%s0 + $0xf0] sm:$0xff]
  %v46 = vld [vmem:[%s0 + $0xf8] sm:$0xff]
  %v47 = vld [vmem:[%s0 + $0x100] sm:$0xff]
  %v48 = vld [vmem:[%s0 + $0x108] sm:$0xff]
  %v49 = vld [vmem:[%s0 + $0x110] sm:$0xff]
  %v50 = vld [vmem:[%s0 + $0x118] sm:$0xff]
  %v51 = vld [vmem:[%s0 + $0x120] sm:$0xff]
  %v52 = vld [vmem:[%s0 + $0x128] sm:$0xff]
  %v53 = vld [vmem:[%s0 + $0x130] sm:$0xff]
  %v54 = vld [vmem:[%s0 + $0x138] sm:$0xff]
  %v55 = vld [vmem:[%s0 + $0x140] sm:$0xff]
  %v56 = vld [vmem:[%s0 + $0x148] sm:$0xff]
  %v57 = vld [vmem:[%s0 + $0x150] sm:$0xff]
  %v58 = vld [vmem:[%s0 + $0x158] sm:$0xff]
  %v59 = vld [vmem:[%s0 + $0x160] sm:$0xff]
  %v60 = vld [vmem:[%s0 + $0x168] sm:$0xff]
  %v61 = vld [vmem:[%s0 + $0x170] sm:$0xff]
  %v62 = vld [vmem:[%s0 + $0x178] sm:$0xff]
  %v63 = vld [vmem:[%s0 + $0x180] sm:$0xff]
  %v64 = vld [vmem:[%s0 + $0x188] sm:$0xff]
  %v65 = vld [vmem:[%s0 + $0x190] sm:$0xff]
  %v66 = vld [vmem:[%s0 + $0x198] sm:$0xff]
  %v67 = vld [vmem:[%s0 + $0x1a0] sm:$0xff]
  %v68 = vld [vmem:[%s0 + $0x1a8] sm:$0xff]
  %v69 = vld [vmem:[%s0 + $0x1b0] sm:$0xff]
  %v70 = vld [vmem:[%s0 + $0x1b8] sm:$0xff]
  %v71 = vld [vmem:[%s0 + $0x1c0] sm:$0xff]
  %v72 = vld [vmem:[%s0 + $0x1c8] sm:$0xff]
  %v73 = vld [vmem:[%s0 + $0x1d0] sm:$0xff]
  %v74 = vld [vmem:[%s0 + $0x1d8] sm:$0xff]
  %v75 = vld [vmem:[%s0 + $0x1e0] sm:$0xff]
  %v76 = vld [vmem:[%s0 + $0x1e8] sm:$0xff]
  %v77 = vld [vmem:[%s0 + $0x1f0] sm:$0xff]
  %v78 = vld [vmem:[%s0 + $0x1f8] sm:$0xff]
  %v79 = vld [vmem:[%s0 + $0x200] sm:$0xff]
  %v80 = vld [vmem:[%s0 + $0x208] sm:$0xff]
  %v81 = vld [vmem:[%s0 + $0x210] sm:$0xff]
  %v82 = vld [vmem:[%s0 + $0x218] sm:$0xff]
  %v83 = vld [vmem:[%s0 + $0x220] sm:$0xff]
  %v84 = vld [vmem:[%s0 + $0x228] sm:$0xff]
  %v85 = vld [vmem:[%s0 + $0x230] sm:$0xff]
  %v86 = vld [vmem:[%s0 + $0x238] sm:$0xff]
  %v87 = vld [vmem:[%s0 + $0x240] sm:$0xff]
  %v88 = vld [vmem:[%s0 + $0x248] sm:$0xff]
  %v89 = vld [vmem:[%s0 + $0x250] sm:$0xff]
  %v90 = vld [vmem:[%s0 + $0x258] sm:$0xff]
  %v91 = vld [vmem:[%s0 + $0x260] sm:$0xff]
  %v92 = vld [vmem:[%s0 + $0x268] sm:$0xff]
  %v93 = vld [vmem:[%s0 + $0x270] sm:$0xff]
  %v94 = vld [vmem:[%s0 + $0x278] sm:$0xff]
  %v95 = vld [vmem:[%s0 + $0x280] sm:$0xff]
  %v96 = vld [vmem:[%s0 + $0x288] sm:$0xff]
  %v97 = vld [vmem:[%s0 + $0x290] sm:$0xff]
  %v98 = vld [vmem:[%s0 + $0x298] sm:$0xff]
  %v99 = vld [vmem:[%s0 + $0x2a0] sm:$0xff]
  %v100 = vld [vmem:[%s0 + $0x2a8] sm:$0xff]
  %v101 = vld [vmem:[%s0 + $0x2b0] sm:$0xff]
  %v102 = vld [vmem:[%s0 + $0x2b8] sm:$0xff]
  %v103 = vld [vmem:[%s0 + $0x2c0] sm:$0xff]
  %v104 = vld [vmem:[%s0 + $0x2c8] sm:$0xff]
  %v105 = vld [vmem:[%s0 + $0x2d0] sm:$0xff]
  %v106 = vld [vmem:[%s0 + $0x2d8] sm:$0xff]
  %v107 = vld [vmem:[%s0 + $0x2e0] sm:$0xff]
  %v108 = vld [vmem:[%s0 + $0x2e8] sm:$0xff]
  %v109 = vld [vmem:[%s0 + $0x2f0] sm:$0xff]
  %v110 = vld [vmem:[%s0 + $0x2f8] sm:$0xff]
  %v111 = vld [vmem:[%s0 + $0x300] sm:$0xff]
  %v112 = vld [vmem:[%s0 + $0x308] sm:$0xff]
  %v113 = vld [vmem:[%s0 + $0x310] sm:$0xff]
  %v114 = vld [vmem:[%s0 + $0x318] sm:$0xff]
  %v115 = vld [vmem:[%s1] sm:$0xf]
  %v116 = vld [vmem:[%s1 + $0x4] sm:$0xf]
  %v117 = vld [vmem:[%s1 + $0x8] sm:$0xf]
  %v118 = vld [vmem:[%s1 + $0xc] sm:$0xf]
  %v119 = vld [vmem:[%s1 + $0x10] sm:$0xf]
  %v120 = vld [vmem:[%s1 + $0x14] sm:$0xf]
  %v121 = vld [vmem:[%s1 + $0x18] sm:$0xf]
  %v122 = vld [vmem:[%s1 + $0x1c] sm:$0xf]
  %v123 = vld [vmem:[%s1 + $0x20] sm:$0xf]
  %v124 = vld [vmem:[%s1 + $0x24] sm:$0xf]
  %v125 = vld [vmem:[%s1 + $0x28] sm:$0xf]
  %v126 = vld [vmem:[%s1 + $0x2c] sm:$0xf]
  %v127 = vld [vmem:[%s1 + $0x30] sm:$0xf]
  %v128 = vld [vmem:[%s1 + $0x34] sm:$0xf]
  %v129 = vld [vmem:[%s1 + $0x38] sm:$0xf]
  %v130 = vld [vmem:[%s1 + $0x3c] sm:$0xf]
  %v131 = vld [vmem:[%s1 + $0x40] sm:$0xf]
  %v132 = vld [vmem:[%s1 + $0x44] sm:$0xf]
  %v133 = vld [vmem:[%s1 + $0x48] sm:$0xf]
  %v134 = vld [vmem:[%s1 + $0x4c] sm:$0xf]
  %v135 = vld [vmem:[%s1 + $0x50] sm:$0xf]
  %v136 = vld [vmem:[%s1 + $0x54] sm:$0xf]
  %v137 = vld [vmem:[%s1 + $0x58] sm:$0xf]
  %v138 = vld [vmem:[%s1 + $0x5c] sm:$0xf]
  %v139 = vld [vmem:[%s1 + $0x60] sm:$0xf]
  %v140 = vld [vmem:[%s1 + $0x64] sm:$0xf]
  %v141 = vld [vmem:[%s1 + $0x68] sm:$0xf]
  %v142 = vld [vmem:[%s1 + $0x6c] sm:$0xf]
  %v143 = vld [vmem:[%s1 + $0x70] sm:$0xf]
  %v144 = vld [vmem:[%s1 + $0x74] sm:$0xf]
  %v145 = vld [vmem:[%s1 + $0x78] sm:$0xf]
  %v146 = vld [vmem:[%s1 + $0x7c] sm:$0xf]
  %v147 = vld [vmem:[%s2] sm:$0x1]
  %v149 = vlaneseq
  %v150 = vshrl.u32 %v149, 7
  %v151 = vsub.s32 0, %v150
  %v152 = vrot.slane %v147, %v151
  %v254 = vunpack.c.l.b16 %v15
  %v255 = vunpack.c.h.b16 %v15
  %v256 = vunpack.c.l.b16 %v16
  %v257 = vunpack.c.h.b16 %v16
  %v258 = vunpack.c.l.b16 %v17
  %v259 = vunpack.c.h.b16 %v17
  %v260 = vunpack.c.l.b16 %v18
  %v261 = vunpack.c.h.b16 %v18
  %v262 = vunpack.c.l.b16 %v19
  %v263 = vunpack.c.h.b16 %v19
  %v264 = vunpack.c.l.b16 %v20
  %v265 = vunpack.c.h.b16 %v20
  %v266 = vunpack.c.l.b16 %v21
  %v267 = vunpack.c.h.b16 %v21
  %v268 = vunpack.c.l.b16 %v22
  %v269 = vunpack.c.h.b16 %v22
  %v270 = vunpack.c.l.b16 %v23
  %v271 = vunpack.c.h.b16 %v23
  %v272 = vunpack.c.l.b16 %v24
  %v273 = vunpack.c.h.b16 %v24
  %v274 = vunpack.c.l.b16 %v25
  %v275 = vunpack.c.h.b16 %v25
  %v276 = vunpack.c.l.b16 %v26
  %v277 = vunpack.c.h.b16 %v26
  %v278 = vunpack.c.l.b16 %v27
  %v279 = vunpack.c.h.b16 %v27
  %v280 = vunpack.c.l.b16 %v28
  %v281 = vunpack.c.h.b16 %v28
  %v282 = vunpack.c.l.b16 %v29
  %v283 = vunpack.c.h.b16 %v29
  %v284 = vunpack.c.l.b16 %v30
  %v285 = vunpack.c.h.b16 %v30
  %v286 = vunpack.c.l.b16 %v31
  %v287 = vunpack.c.h.b16 %v31
  %v288 = vunpack.c.l.b16 %v32
  %v289 = vunpack.c.h.b16 %v32
  %v290 = vunpack.c.l.b16 %v33
  %v291 = vunpack.c.h.b16 %v33
  %v292 = vunpack.c.l.b16 %v34
  %v293 = vunpack.c.h.b16 %v34
  %v294 = vunpack.c.l.b16 %v35
  %v295 = vunpack.c.h.b16 %v35
  %v296 = vunpack.c.l.b16 %v36
  %v297 = vunpack.c.h.b16 %v36
  %v298 = vunpack.c.l.b16 %v37
  %v299 = vunpack.c.h.b16 %v37
  %v300 = vunpack.c.l.b16 %v38
  %v301 = vunpack.c.h.b16 %v38
  %v302 = vunpack.c.l.b16 %v39
  %v303 = vunpack.c.h.b16 %v39
  %v304 = vunpack.c.l.b16 %v40
  %v305 = vunpack.c.h.b16 %v40
  %v306 = vunpack.c.l.b16 %v41
  %v307 = vunpack.c.h.b16 %v41
  %v308 = vunpack.c.l.b16 %v42
  %v309 = vunpack.c.h.b16 %v42
  %v310 = vunpack.c.l.b16 %v43
  %v311 = vunpack.c.h.b16 %v43
  %v312 = vunpack.c.l.b16 %v44
  %v313 = vunpack.c.h.b16 %v44
  %v314 = vunpack.c.l.b16 %v45
  %v315 = vunpack.c.h.b16 %v45
  %v316 = vunpack.c.l.b16 %v46
  %v317 = vunpack.c.h.b16 %v46
  %v318 = vunpack.c.l.b16 %v47
  %v319 = vunpack.c.h.b16 %v47
  %v320 = vunpack.c.l.b16 %v48
  %v321 = vunpack.c.h.b16 %v48
  %v322 = vunpack.c.l.b16 %v49
  %v323 = vunpack.c.h.b16 %v49
  %v324 = vunpack.c.l.b16 %v50
  %v325 = vunpack.c.h.b16 %v50
  %v326 = vunpack.c.l.b16 %v51
  %v327 = vunpack.c.h.b16 %v51
  %v328 = vunpack.c.l.b16 %v52
  %v329 = vunpack.c.h.b16 %v52
  %v330 = vunpack.c.l.b16 %v53
  %v331 = vunpack.c.h.b16 %v53
  %v332 = vunpack.c.l.b16 %v54
  %v333 = vunpack.c.h.b16 %v54
  %v334 = vunpack.c.l.b16 %v55
  %v335 = vunpack.c.h.b16 %v55
  %v336 = vunpack.c.l.b16 %v56
  %v337 = vunpack.c.h.b16 %v56
  %v338 = vunpack.c.l.b16 %v57
  %v339 = vunpack.c.h.b16 %v57
  %v340 = vunpack.c.l.b16 %v58
  %v341 = vunpack.c.h.b16 %v58
  %v342 = vunpack.c.l.b16 %v59
  %v343 = vunpack.c.h.b16 %v59
  %v344 = vunpack.c.l.b16 %v60
  %v345 = vunpack.c.h.b16 %v60
  %v346 = vunpack.c.l.b16 %v61
  %v347 = vunpack.c.h.b16 %v61
  %v348 = vunpack.c.l.b16 %v62
  %v349 = vunpack.c.h.b16 %v62
  %v350 = vunpack.c.l.b16 %v63
  %v351 = vunpack.c.h.b16 %v63
  %v352 = vunpack.c.l.b16 %v64
  %v353 = vunpack.c.h.b16 %v64
  %v354 = vunpack.c.l.b16 %v65
  %v355 = vunpack.c.h.b16 %v65
  %v356 = vunpack.c.l.b16 %v66
  %v357 = vunpack.c.h.b16 %v66
  %v358 = vunpack.c.l.b16 %v67
  %v359 = vunpack.c.h.b16 %v67
  %v360 = vunpack.c.l.b16 %v68
  %v361 = vunpack.c.h.b16 %v68
  %v362 = vunpack.c.l.b16 %v69
  %v363 = vunpack.c.h.b16 %v69
  %v364 = vunpack.c.l.b16 %v70
  %v365 = vunpack.c.h.b16 %v70
  %v366 = vunpack.c.l.b16 %v71
  %v367 = vunpack.c.h.b16 %v71
  %v368 = vunpack.c.l.b16 %v72
  %v369 = vunpack.c.h.b16 %v72
  %v370 = vunpack.c.l.b16 %v73
  %v371 = vunpack.c.h.b16 %v73
  %v372 = vunpack.c.l.b16 %v74
  %v373 = vunpack.c.h.b16 %v74
  %v374 = vunpack.c.l.b16 %v75
  %v375 = vunpack.c.h.b16 %v75
  %v376 = vunpack.c.l.b16 %v76
  %v377 = vunpack.c.h.b16 %v76
  %v378 = vunpack.c.l.b16 %v77
  %v379 = vunpack.c.h.b16 %v77
  %v380 = vunpack.c.l.b16 %v78
  %v381 = vunpack.c.h.b16 %v78
  %v382 = vunpack.c.l.b16 %v79
  %v383 = vunpack.c.h.b16 %v79
  %v384 = vunpack.c.l.b16 %v80
  %v385 = vunpack.c.h.b16 %v80
  %v386 = vunpack.c.l.b16 %v81
  %v387 = vunpack.c.h.b16 %v81
  %v388 = vunpack.c.l.b16 %v82
  %v389 = vunpack.c.h.b16 %v82
  %v390 = vunpack.c.l.b16 %v83
  %v391 = vunpack.c.h.b16 %v83
  %v392 = vunpack.c.l.b16 %v84
  %v393 = vunpack.c.h.b16 %v84
  %v394 = vunpack.c.l.b16 %v85
  %v395 = vunpack.c.h.b16 %v85
  %v396 = vunpack.c.l.b16 %v86
  %v397 = vunpack.c.h.b16 %v86
  %v398 = vunpack.c.l.b16 %v87
  %v399 = vunpack.c.h.b16 %v87
  %v400 = vunpack.c.l.b16 %v88
  %v401 = vunpack.c.h.b16 %v88
  %v402 = vunpack.c.l.b16 %v89
  %v403 = vunpack.c.h.b16 %v89
  %v404 = vunpack.c.l.b16 %v90
  %v405 = vunpack.c.h.b16 %v90
  %v406 = vunpack.c.l.b16 %v91
  %v407 = vunpack.c.h.b16 %v91
  %v408 = vunpack.c.l.b16 %v92
  %v409 = vunpack.c.h.b16 %v92
  %v410 = vunpack.c.l.b16 %v93
  %v411 = vunpack.c.h.b16 %v93
  %v412 = vunpack.c.l.b16 %v94
  %v413 = vunpack.c.h.b16 %v94
  %v414 = vunpack.c.l.b16 %v95
  %v415 = vunpack.c.h.b16 %v95
  %v416 = vunpack.c.l.b16 %v96
  %v417 = vunpack.c.h.b16 %v96
  %v418 = vunpack.c.l.b16 %v97
  %v419 = vunpack.c.h.b16 %v97
  %v420 = vunpack.c.l.b16 %v98
  %v421 = vunpack.c.h.b16 %v98
  %v422 = vunpack.c.l.b16 %v99
  %v423 = vunpack.c.h.b16 %v99
  %v424 = vunpack.c.l.b16 %v100
  %v425 = vunpack.c.h.b16 %v100
  %v426 = vunpack.c.l.b16 %v101
  %v427 = vunpack.c.h.b16 %v101
  %v428 = vunpack.c.l.b16 %v102
  %v429 = vunpack.c.h.b16 %v102
  %v430 = vunpack.c.l.b16 %v103
  %v431 = vunpack.c.h.b16 %v103
  %v432 = vunpack.c.l.b16 %v104
  %v433 = vunpack.c.h.b16 %v104
  %v434 = vunpack.c.l.b16 %v105
  %v435 = vunpack.c.h.b16 %v105
  %v436 = vunpack.c.l.b16 %v106
  %v437 = vunpack.c.h.b16 %v106
  %v438 = vunpack.c.l.b16 %v107
  %v439 = vunpack.c.h.b16 %v107
  %v440 = vunpack.c.l.b16 %v108
  %v441 = vunpack.c.h.b16 %v108
  %v442 = vunpack.c.l.b16 %v109
  %v443 = vunpack.c.h.b16 %v109
  %v444 = vunpack.c.l.b16 %v110
  %v445 = vunpack.c.h.b16 %v110
  %v446 = vunpack.c.l.b16 %v111
  %v447 = vunpack.c.h.b16 %v111
  %v448 = vunpack.c.l.b16 %v112
  %v449 = vunpack.c.h.b16 %v112
  %v450 = vunpack.c.l.b16 %v113
  %v451 = vunpack.c.h.b16 %v113
  %v452 = vunpack.c.l.b16 %v114
  %v453 = vunpack.c.h.b16 %v114
  %v454 = vpack.c.b16 %v256, %v254
  %v455 = vpack.c.b16 %v257, %v255
  %v456 = vpack.c.b16 %v260, %v258
  %v457 = vpack.c.b16 %v261, %v259
  %v458 = vpack.c.b16 %v264, %v262
  %v459 = vpack.c.b16 %v265, %v263
  %v460 = vpack.c.b16 %v268, %v266
  %v461 = vpack.c.b16 %v269, %v267
  %v462 = vpack.c.b16 %v272, %v270
  %v463 = vpack.c.b16 %v273, %v271
  %v464 = vpack.c.b16 %v276, %v274
  %v465 = vpack.c.b16 %v277, %v275
  %v466 = vpack.c.b16 %v280, %v278
  %v467 = vpack.c.b16 %v281, %v279
  %v468 = vpack.c.b16 %v284, %v282
  %v469 = vpack.c.b16 %v285, %v283
  %v470 = vpack.c.b16 %v288, %v286
  %v471 = vpack.c.b16 %v289, %v287
  %v472 = vpack.c.b16 %v292, %v290
  %v473 = vpack.c.b16 %v293, %v291
  %v474 = vpack.c.b16 %v296, %v294
  %v475 = vpack.c.b16 %v297, %v295
  %v476 = vpack.c.b16 %v300, %v298
  %v477 = vpack.c.b16 %v301, %v299
  %v478 = vpack.c.b16 %v304, %v302
  %v479 = vpack.c.b16 %v305, %v303
  %v480 = vpack.c.b16 %v308, %v306
  %v481 = vpack.c.b16 %v309, %v307
  %v482 = vpack.c.b16 %v312, %v310
  %v483 = vpack.c.b16 %v313, %v311
  %v484 = vpack.c.b16 %v316, %v314
  %v485 = vpack.c.b16 %v317, %v315
  %v486 = vpack.c.b16 %v320, %v318
  %v487 = vpack.c.b16 %v321, %v319
  %v488 = vpack.c.b16 %v324, %v322
  %v489 = vpack.c.b16 %v325, %v323
  %v490 = vpack.c.b16 %v328, %v326
  %v491 = vpack.c.b16 %v329, %v327
  %v492 = vpack.c.b16 %v332, %v330
  %v493 = vpack.c.b16 %v333, %v331
  %v494 = vpack.c.b16 %v336, %v334
  %v495 = vpack.c.b16 %v337, %v335
  %v496 = vpack.c.b16 %v340, %v338
  %v497 = vpack.c.b16 %v341, %v339
  %v498 = vpack.c.b16 %v344, %v342
  %v499 = vpack.c.b16 %v345, %v343
  %v500 = vpack.c.b16 %v348, %v346
  %v501 = vpack.c.b16 %v349, %v347
  %v502 = vpack.c.b16 %v352, %v350
  %v503 = vpack.c.b16 %v353, %v351
  %v504 = vpack.c.b16 %v356, %v354
  %v505 = vpack.c.b16 %v357, %v355
  %v506 = vpack.c.b16 %v360, %v358
  %v507 = vpack.c.b16 %v361, %v359
  %v508 = vpack.c.b16 %v364, %v362
  %v509 = vpack.c.b16 %v365, %v363
  %v510 = vpack.c.b16 %v368, %v366
  %v511 = vpack.c.b16 %v369, %v367
  %v512 = vpack.c.b16 %v372, %v370
  %v513 = vpack.c.b16 %v373, %v371
  %v514 = vpack.c.b16 %v376, %v374
  %v515 = vpack.c.b16 %v377, %v375
  %v516 = vpack.c.b16 %v380, %v378
  %v517 = vpack.c.b16 %v381, %v379
  %v518 = vpack.c.b16 %v384, %v382
  %v519 = vpack.c.b16 %v385, %v383
  %v520 = vpack.c.b16 %v388, %v386
  %v521 = vpack.c.b16 %v389, %v387
  %v522 = vpack.c.b16 %v392, %v390
  %v523 = vpack.c.b16 %v393, %v391
  %v524 = vpack.c.b16 %v396, %v394
  %v525 = vpack.c.b16 %v397, %v395
  %v526 = vpack.c.b16 %v400, %v398
  %v527 = vpack.c.b16 %v401, %v399
  %v528 = vpack.c.b16 %v404, %v402
  %v529 = vpack.c.b16 %v405, %v403
  %v530 = vpack.c.b16 %v408, %v406
  %v531 = vpack.c.b16 %v409, %v407
  %v532 = vpack.c.b16 %v412, %v410
  %v533 = vpack.c.b16 %v413, %v411
  %v534 = vpack.c.b16 %v416, %v414
  %v535 = vpack.c.b16 %v417, %v415
  %v536 = vpack.c.b16 %v420, %v418
  %v537 = vpack.c.b16 %v421, %v419
  %v538 = vpack.c.b16 %v424, %v422
  %v539 = vpack.c.b16 %v425, %v423
  %v540 = vpack.c.b16 %v428, %v426
  %v541 = vpack.c.b16 %v429, %v427
  %v542 = vpack.c.b16 %v432, %v430
  %v543 = vpack.c.b16 %v433, %v431
  %v544 = vpack.c.b16 %v436, %v434
  %v545 = vpack.c.b16 %v437, %v435
  %v546 = vpack.c.b16 %v440, %v438
  %v547 = vpack.c.b16 %v441, %v439
  %v548 = vpack.c.b16 %v444, %v442
  %v549 = vpack.c.b16 %v445, %v443
  %v550 = vpack.c.b16 %v448, %v446
  %v551 = vpack.c.b16 %v449, %v447
  %v552 = vpack.c.b16 %v452, %v450
  %v553 = vpack.c.b16 %v453, %v451
  %v686 = vunpack.c.l.b16 %v115
  %v687 = vunpack.c.l.b16 %v116
  %v688 = vunpack.c.l.b16 %v117
  %v689 = vunpack.c.l.b16 %v118
  %v690 = vunpack.c.l.b16 %v119
  %v691 = vunpack.c.l.b16 %v120
  %v692 = vunpack.c.l.b16 %v121
  %v693 = vunpack.c.l.b16 %v122
  %v694 = vunpack.c.l.b16 %v123
  %v695 = vunpack.c.l.b16 %v124
  %v696 = vunpack.c.l.b16 %v125
  %v697 = vunpack.c.l.b16 %v126
  %v698 = vunpack.c.l.b16 %v127
  %v699 = vunpack.c.l.b16 %v128
  %v700 = vunpack.c.l.b16 %v129
  %v701 = vunpack.c.l.b16 %v130
  %v702 = vunpack.c.l.b16 %v131
  %v703 = vunpack.c.l.b16 %v132
  %v704 = vunpack.c.l.b16 %v133
  %v705 = vunpack.c.l.b16 %v134
  %v706 = vunpack.c.l.b16 %v135
  %v707 = vunpack.c.l.b16 %v136
  %v708 = vunpack.c.l.b16 %v137
  %v709 = vunpack.c.l.b16 %v138
  %v710 = vunpack.c.l.b16 %v139
  %v711 = vunpack.c.l.b16 %v140
  %v712 = vunpack.c.l.b16 %v141
  %v713 = vunpack.c.l.b16 %v142
  %v714 = vunpack.c.l.b16 %v143
  %v715 = vunpack.c.l.b16 %v144
  %v716 = vunpack.c.l.b16 %v145
  %v717 = vunpack.c.l.b16 %v146
  %v718 = vpack.c.b16 %v687, %v686
  %v719 = vpack.c.b16 %v689, %v688
  %v720 = vpack.c.b16 %v691, %v690
  %v721 = vpack.c.b16 %v693, %v692
  %v722 = vpack.c.b16 %v695, %v694
  %v723 = vpack.c.b16 %v697, %v696
  %v724 = vpack.c.b16 %v699, %v698
  %v725 = vpack.c.b16 %v701, %v700
  %v726 = vpack.c.b16 %v703, %v702
  %v727 = vpack.c.b16 %v705, %v704
  %v728 = vpack.c.b16 %v707, %v706
  %v729 = vpack.c.b16 %v709, %v708
  %v730 = vpack.c.b16 %v711, %v710
  %v731 = vpack.c.b16 %v713, %v712
  %v732 = vpack.c.b16 %v715, %v714
  %v733 = vpack.c.b16 %v717, %v716
  %750 = vmatprep.subr.bf16.mxu0 0
  %751 = vmatpush1.bf16.msra.mxu0 %v718
  %752 = vmatprep.subr.bf16.mxu0 0
  %753 = vmatpush1.bf16.msra.mxu0 %v719
  %754 = vmatprep.subr.bf16.mxu0 0
  %755 = vmatpush1.bf16.msra.mxu0 %v720
  %756 = vmatprep.subr.bf16.mxu0 0
  %757 = vmatpush1.bf16.msra.mxu0 %v721
  %758 = vmatprep.subr.bf16.mxu0 0
  %759 = vmatpush1.bf16.msra.mxu0 %v722
  %760 = vmatprep.subr.bf16.mxu0 0
  %761 = vmatpush1.bf16.msra.mxu0 %v723
  %762 = vmatprep.subr.bf16.mxu0 0
  %763 = vmatpush1.bf16.msra.mxu0 %v724
  %764 = vmatprep.subr.bf16.mxu0 0
  %765 = vmatpush1.bf16.msra.mxu0 %v725
  %766 = vmatprep.subr.bf16.mxu0 0
  %767 = vmatpush1.bf16.msra.mxu0 %v726
  %768 = vmatprep.subr.bf16.mxu0 0
  %769 = vmatpush1.bf16.msra.mxu0 %v727
  %770 = vmatprep.subr.bf16.mxu0 0
  %771 = vmatpush1.bf16.msra.mxu0 %v728
  %772 = vmatprep.subr.bf16.mxu0 0
  %773 = vmatpush1.bf16.msra.mxu0 %v729
  %774 = vmatprep.subr.bf16.mxu0 0
  %775 = vmatpush1.bf16.msra.mxu0 %v730
  %776 = vmatprep.subr.bf16.mxu0 0
  %777 = vmatpush1.bf16.msra.mxu0 %v731
  %778 = vmatprep.subr.bf16.mxu0 0
  %779 = vmatpush1.bf16.msra.mxu0 %v732
  %780 = vmatprep.subr.bf16.mxu0 0
  %781 = vmatpush1.bf16.msra.mxu0 %v733
  %782 = vmatprep.mubr.bf16.mxu0 %v455
  %783 = vmatmul.mubr.bf16.gmra.mrb[0].mxu0 %v454
  %v784 = vpop.f32.mrb[0].mxu0
  %v785 = vadd.f32 %v152, %v784
  %v786 = vpop.f32.mrb[0].mxu0
  %v787 = vpop.f32.mrb[0].mxu0
  %v788 = vadd.f32 %v152, %v787
  %v789 = vpop.f32.mrb[0].mxu0
  %790 = vmatprep.mubr.bf16.mxu0 %v457
  %791 = vmatmul.mubr.bf16.gmra.mrb[0].mxu0 %v456
  %v792 = vpop.f32.mrb[0].mxu0
  %v793 = vadd.f32 %v152, %v792
  %v794 = vpop.f32.mrb[0].mxu0
  %v795 = vpop.f32.mrb[0].mxu0
  %v796 = vadd.f32 %v152, %v795
  %v797 = vpop.f32.mrb[0].mxu0
  %798 = vmatprep.mubr.bf16.mxu0 %v459
  %799 = vmatmul.mubr.bf16.gmra.mrb[0].mxu0 %v458
  %v800 = vpop.f32.mrb[0].mxu0
  %v801 = vadd.f32 %v152, %v800
  %v802 = vpop.f32.mrb[0].mxu0
  %v803 = vpop.f32.mrb[0].mxu0
  %v804 = vadd.f32 %v152, %v803
  %v805 = vpop.f32.mrb[0].mxu0
  %806 = vmatprep.mubr.bf16.mxu0 %v461
  %807 = vmatmul.mubr.bf16.gmra.mrb[0].mxu0 %v460
  %v808 = vpop.f32.mrb[0].mxu0
  %v809 = vadd.f32 %v152, %v808
  %v810 = vpop.f32.mrb[0].mxu0
  %v811 = vpop.f32.mrb[0].mxu0
  %v812 = vadd.f32 %v152, %v811
  %v813 = vpop.f32.mrb[0].mxu0
  %814 = vmatprep.mubr.bf16.mxu0 %v463
  %815 = vmatmul.mubr.bf16.gmra.mrb[0].mxu0 %v462
  %v816 = vpop.f32.mrb[0].mxu0
  %v817 = vadd.f32 %v152, %v816
  %v818 = vpop.f32.mrb[0].mxu0
  %v819 = vpop.f32.mrb[0].mxu0
  %v820 = vadd.f32 %v152, %v819
  %v821 = vpop.f32.mrb[0].mxu0
  %822 = vmatprep.mubr.bf16.mxu0 %v465
  %823 = vmatmul.mubr.bf16.gmra.mrb[0].mxu0 %v464
  %v824 = vpop.f32.mrb[0].mxu0
  %v825 = vadd.f32 %v152, %v824
  %v826 = vpop.f32.mrb[0].mxu0
  %v827 = vpop.f32.mrb[0].mxu0
  %v828 = vadd.f32 %v152, %v827
  %v829 = vpop.f32.mrb[0].mxu0
  %830 = vmatprep.mubr.bf16.mxu0 %v467
  %831 = vmatmul.mubr.bf16.gmra.mrb[0].mxu0 %v466
  %v832 = vpop.f32.mrb[0].mxu0
  %v833 = vadd.f32 %v152, %v832
  %v834 = vpop.f32.mrb[0].mxu0
  %v835 = vpop.f32.mrb[0].mxu0
  %v836 = vadd.f32 %v152, %v835
  %v837 = vpop.f32.mrb[0].mxu0
  %838 = vmatprep.mubr.bf16.mxu0 %v469
  %839 = vmatmul.mubr.bf16.gmra.mrb[0].mxu0 %v468
  %v840 = vpop.f32.mrb[0].mxu0
  %v841 = vadd.f32 %v152, %v840
  %v842 = vpop.f32.mrb[0].mxu0
  %v843 = vpop.f32.mrb[0].mxu0
  %v844 = vadd.f32 %v152, %v843
  %v845 = vpop.f32.mrb[0].mxu0
  %846 = vmatprep.mubr.bf16.mxu0 %v471
  %847 = vmatmul.mubr.bf16.gmra.mrb[0].mxu0 %v470
  %v848 = vpop.f32.mrb[0].mxu0
  %v849 = vadd.f32 %v152, %v848
  %v850 = vpop.f32.mrb[0].mxu0
  %v851 = vpop.f32.mrb[0].mxu0
  %v852 = vadd.f32 %v152, %v851
  %v853 = vpop.f32.mrb[0].mxu0
  %854 = vmatprep.mubr.bf16.mxu0 %v473
  %855 = vmatmul.mubr.bf16.gmra.mrb[0].mxu0 %v472
  %v856 = vpop.f32.mrb[0].mxu0
  %v857 = vadd.f32 %v152, %v856
  %v858 = vpop.f32.mrb[0].mxu0
  %v859 = vpop.f32.mrb[0].mxu0
  %v860 = vadd.f32 %v152, %v859
  %v861 = vpop.f32.mrb[0].mxu0
  %862 = vmatprep.mubr.bf16.mxu0 %v475
  %863 = vmatmul.mubr.bf16.gmra.mrb[0].mxu0 %v474
  %v864 = vpop.f32.mrb[0].mxu0
  %v865 = vadd.f32 %v152, %v864
  %v866 = vpop.f32.mrb[0].mxu0
  %v867 = vpop.f32.mrb[0].mxu0
  %v868 = vadd.f32 %v152, %v867
  %v869 = vpop.f32.mrb[0].mxu0
  %870 = vmatprep.mubr.bf16.mxu0 %v477
  %871 = vmatmul.mubr.bf16.gmra.mrb[0].mxu0 %v476
  %v872 = vpop.f32.mrb[0].mxu0
  %v873 = vadd.f32 %v152, %v872
  %v874 = vpop.f32.mrb[0].mxu0
  %v875 = vpop.f32.mrb[0].mxu0
  %v876 = vadd.f32 %v152, %v875
  %v877 = vpop.f32.mrb[0].mxu0
  %878 = vmatprep.mubr.bf16.mxu0 %v479
  %879 = vmatmul.mubr.bf16.gmra.mrb[0].mxu0 %v478
  %v880 = vpop.f32.mrb[0].mxu0
  %v881 = vadd.f32 %v152, %v880
  %v882 = vpop.f32.mrb[0].mxu0
  %v883 = vpop.f32.mrb[0].mxu0
  %v884 = vadd.f32 %v152, %v883
  %v885 = vpop.f32.mrb[0].mxu0
  %886 = vmatprep.mubr.bf16.mxu0 %v481
  %887 = vmatmul.mubr.bf16.gmra.mrb[0].mxu0 %v480
  %v888 = vpop.f32.mrb[0].mxu0
  %v889 = vadd.f32 %v152, %v888
  %v890 = vpop.f32.mrb[0].mxu0
  %v891 = vpop.f32.mrb[0].mxu0
  %v892 = vadd.f32 %v152, %v891
  %v893 = vpop.f32.mrb[0].mxu0
  %894 = vmatprep.mubr.bf16.mxu0 %v483
  %895 = vmatmul.mubr.bf16.gmra.mrb[0].mxu0 %v482
  %v896 = vpop.f32.mrb[0].mxu0
  %v897 = vadd.f32 %v152, %v896
  %v898 = vpop.f32.mrb[0].mxu0
  %v899 = vpop.f32.mrb[0].mxu0
  %v900 = vadd.f32 %v152, %v899
  %v901 = vpop.f32.mrb[0].mxu0
  %902 = vmatprep.mubr.bf16.mxu0 %v485
  %903 = vmatmul.mubr.bf16.gmra.mrb[0].mxu0 %v484
  %v904 = vpop.f32.mrb[0].mxu0
  %v905 = vadd.f32 %v152, %v904
  %v906 = vpop.f32.mrb[0].mxu0
  %v907 = vpop.f32.mrb[0].mxu0
  %v908 = vadd.f32 %v152, %v907
  %v909 = vpop.f32.mrb[0].mxu0
  %910 = vmatprep.mubr.bf16.mxu0 %v487
  %911 = vmatmul.mubr.bf16.gmra.mrb[0].mxu0 %v486
  %v912 = vpop.f32.mrb[0].mxu0
  %v913 = vadd.f32 %v152, %v912
  %v914 = vpop.f32.mrb[0].mxu0
  %v915 = vpop.f32.mrb[0].mxu0
  %v916 = vadd.f32 %v152, %v915
  %v917 = vpop.f32.mrb[0].mxu0
  %918 = vmatprep.mubr.bf16.mxu0 %v489
  %919 = vmatmul.mubr.bf16.gmra.mrb[0].mxu0 %v488
  %v920 = vpop.f32.mrb[0].mxu0
  %v921 = vadd.f32 %v152, %v920
  %v922 = vpop.f32.mrb[0].mxu0
  %v923 = vpop.f32.mrb[0].mxu0
  %v924 = vadd.f32 %v152, %v923
  %v925 = vpop.f32.mrb[0].mxu0
  %926 = vmatprep.mubr.bf16.mxu0 %v491
  %927 = vmatmul.mubr.bf16.gmra.mrb[0].mxu0 %v490
  %v928 = vpop.f32.mrb[0].mxu0
  %v929 = vadd.f32 %v152, %v928
  %v930 = vpop.f32.mrb[0].mxu0
  %v931 = vpop.f32.mrb[0].mxu0
  %v932 = vadd.f32 %v152, %v931
  %v933 = vpop.f32.mrb[0].mxu0
  %934 = vmatprep.mubr.bf16.mxu0 %v493
  %935 = vmatmul.mubr.bf16.gmra.mrb[0].mxu0 %v492
  %v936 = vpop.f32.mrb[0].mxu0
  %v937 = vadd.f32 %v152, %v936
  %v938 = vpop.f32.mrb[0].mxu0
  %v939 = vpop.f32.mrb[0].mxu0
  %v940 = vadd.f32 %v152, %v939
  %v941 = vpop.f32.mrb[0].mxu0
  %942 = vmatprep.mubr.bf16.mxu0 %v495
  %943 = vmatmul.mubr.bf16.gmra.mrb[0].mxu0 %v494
  %v944 = vpop.f32.mrb[0].mxu0
  %v945 = vadd.f32 %v152, %v944
  %v946 = vpop.f32.mrb[0].mxu0
  %v947 = vpop.f32.mrb[0].mxu0
  %v948 = vadd.f32 %v152, %v947
  %v949 = vpop.f32.mrb[0].mxu0
  %950 = vmatprep.mubr.bf16.mxu0 %v497
  %951 = vmatmul.mubr.bf16.gmra.mrb[0].mxu0 %v496
  %v952 = vpop.f32.mrb[0].mxu0
  %v953 = vadd.f32 %v152, %v952
  %v954 = vpop.f32.mrb[0].mxu0
  %v955 = vpop.f32.mrb[0].mxu0
  %v956 = vadd.f32 %v152, %v955
  %v957 = vpop.f32.mrb[0].mxu0
  %958 = vmatprep.mubr.bf16.mxu0 %v499
  %959 = vmatmul.mubr.bf16.gmra.mrb[0].mxu0 %v498
  %v960 = vpop.f32.mrb[0].mxu0
  %v961 = vadd.f32 %v152, %v960
  %v962 = vpop.f32.mrb[0].mxu0
  %v963 = vpop.f32.mrb[0].mxu0
  %v964 = vadd.f32 %v152, %v963
  %v965 = vpop.f32.mrb[0].mxu0
  %966 = vmatprep.mubr.bf16.mxu0 %v501
  %967 = vmatmul.mubr.bf16.gmra.mrb[0].mxu0 %v500
  %v968 = vpop.f32.mrb[0].mxu0
  %v969 = vadd.f32 %v152, %v968
  %v970 = vpop.f32.mrb[0].mxu0
  %v971 = vpop.f32.mrb[0].mxu0
  %v972 = vadd.f32 %v152, %v971
  %v973 = vpop.f32.mrb[0].mxu0
  %974 = vmatprep.mubr.bf16.mxu0 %v503
  %975 = vmatmul.mubr.bf16.gmra.mrb[0].mxu0 %v502
  %v976 = vpop.f32.mrb[0].mxu0
  %v977 = vadd.f32 %v152, %v976
  %v978 = vpop.f32.mrb[0].mxu0
  %v979 = vpop.f32.mrb[0].mxu0
  %v980 = vadd.f32 %v152, %v979
  %v981 = vpop.f32.mrb[0].mxu0
  %982 = vmatprep.mubr.bf16.mxu0 %v505
  %983 = vmatmul.mubr.bf16.gmra.mrb[0].mxu0 %v504
  %v984 = vpop.f32.mrb[0].mxu0
  %v985 = vadd.f32 %v152, %v984
  %v986 = vpop.f32.mrb[0].mxu0
  %v987 = vpop.f32.mrb[0].mxu0
  %v988 = vadd.f32 %v152, %v987
  %v989 = vpop.f32.mrb[0].mxu0
  %990 = vmatprep.mubr.bf16.mxu0 %v507
  %991 = vmatmul.mubr.bf16.gmra.mrb[0].mxu0 %v506
  %v992 = vpop.f32.mrb[0].mxu0
  %v993 = vadd.f32 %v152, %v992
  %v994 = vpop.f32.mrb[0].mxu0
  %v995 = vpop.f32.mrb[0].mxu0
  %v996 = vadd.f32 %v152, %v995
  %v997 = vpop.f32.mrb[0].mxu0
  %998 = vmatprep.mubr.bf16.mxu0 %v509
  %999 = vmatmul.mubr.bf16.gmra.mrb[0].mxu0 %v508
  %v1000 = vpop.f32.mrb[0].mxu0
  %v1001 = vadd.f32 %v152, %v1000
  %v1002 = vpop.f32.mrb[0].mxu0
  %v1003 = vpop.f32.mrb[0].mxu0
  %v1004 = vadd.f32 %v152, %v1003
  %v1005 = vpop.f32.mrb[0].mxu0
  %1006 = vmatprep.mubr.bf16.mxu0 %v511
  %1007 = vmatmul.mubr.bf16.gmra.mrb[0].mxu0 %v510
  %v1008 = vpop.f32.mrb[0].mxu0
  %v1009 = vadd.f32 %v152, %v1008
  %v1010 = vpop.f32.mrb[0].mxu0
  %v1011 = vpop.f32.mrb[0].mxu0
  %v1012 = vadd.f32 %v152, %v1011
  %v1013 = vpop.f32.mrb[0].mxu0
  %1014 = vmatprep.mubr.bf16.mxu0 %v513
  %1015 = vmatmul.mubr.bf16.gmra.mrb[0].mxu0 %v512
  %v1016 = vpop.f32.mrb[0].mxu0
  %v1017 = vadd.f32 %v152, %v1016
  %v1018 = vpop.f32.mrb[0].mxu0
  %v1019 = vpop.f32.mrb[0].mxu0
  %v1020 = vadd.f32 %v152, %v1019
  %v1021 = vpop.f32.mrb[0].mxu0
  %1022 = vmatprep.mubr.bf16.mxu0 %v515
  %1023 = vmatmul.mubr.bf16.gmra.mrb[0].mxu0 %v514
  %v1024 = vpop.f32.mrb[0].mxu0
  %v1025 = vadd.f32 %v152, %v1024
  %v1026 = vpop.f32.mrb[0].mxu0
  %v1027 = vpop.f32.mrb[0].mxu0
  %v1028 = vadd.f32 %v152, %v1027
  %v1029 = vpop.f32.mrb[0].mxu0
  %1030 = vmatprep.mubr.bf16.mxu0 %v517
  %1031 = vmatmul.mubr.bf16.gmra.mrb[0].mxu0 %v516
  %v1032 = vpop.f32.mrb[0].mxu0
  %v1033 = vadd.f32 %v152, %v1032
  %v1034 = vpop.f32.mrb[0].mxu0
  %v1035 = vpop.f32.mrb[0].mxu0
  %v1036 = vadd.f32 %v152, %v1035
  %v1037 = vpop.f32.mrb[0].mxu0
  %1038 = vmatprep.mubr.bf16.mxu0 %v519
  %1039 = vmatmul.mubr.bf16.gmra.mrb[0].mxu0 %v518
  %v1040 = vpop.f32.mrb[0].mxu0
  %v1041 = vadd.f32 %v152, %v1040
  %v1042 = vpop.f32.mrb[0].mxu0
  %v1043 = vpop.f32.mrb[0].mxu0
  %v1044 = vadd.f32 %v152, %v1043
  %v1045 = vpop.f32.mrb[0].mxu0
  %1046 = vmatprep.mubr.bf16.mxu0 %v521
  %1047 = vmatmul.mubr.bf16.gmra.mrb[0].mxu0 %v520
  %v1048 = vpop.f32.mrb[0].mxu0
  %v1049 = vadd.f32 %v152, %v1048
  %v1050 = vpop.f32.mrb[0].mxu0
  %v1051 = vpop.f32.mrb[0].mxu0
  %v1052 = vadd.f32 %v152, %v1051
  %v1053 = vpop.f32.mrb[0].mxu0
  %1054 = vmatprep.mubr.bf16.mxu0 %v523
  %1055 = vmatmul.mubr.bf16.gmra.mrb[0].mxu0 %v522
  %v1056 = vpop.f32.mrb[0].mxu0
  %v1057 = vadd.f32 %v152, %v1056
  %v1058 = vpop.f32.mrb[0].mxu0
  %v1059 = vpop.f32.mrb[0].mxu0
  %v1060 = vadd.f32 %v152, %v1059
  %v1061 = vpop.f32.mrb[0].mxu0
  %1062 = vmatprep.mubr.bf16.mxu0 %v525
  %1063 = vmatmul.mubr.bf16.gmra.mrb[0].mxu0 %v524
  %v1064 = vpop.f32.mrb[0].mxu0
  %v1065 = vadd.f32 %v152, %v1064
  %v1066 = vpop.f32.mrb[0].mxu0
  %v1067 = vpop.f32.mrb[0].mxu0
  %v1068 = vadd.f32 %v152, %v1067
  %v1069 = vpop.f32.mrb[0].mxu0
  %1070 = vmatprep.mubr.bf16.mxu0 %v527
  %1071 = vmatmul.mubr.bf16.gmra.mrb[0].mxu0 %v526
  %v1072 = vpop.f32.mrb[0].mxu0
  %v1073 = vadd.f32 %v152, %v1072
  %v1074 = vpop.f32.mrb[0].mxu0
  %v1075 = vpop.f32.mrb[0].mxu0
  %v1076 = vadd.f32 %v152, %v1075
  %v1077 = vpop.f32.mrb[0].mxu0
  %1078 = vmatprep.mubr.bf16.mxu0 %v529
  %1079 = vmatmul.mubr.bf16.gmra.mrb[0].mxu0 %v528
  %v1080 = vpop.f32.mrb[0].mxu0
  %v1081 = vadd.f32 %v152, %v1080
  %v1082 = vpop.f32.mrb[0].mxu0
  %v1083 = vpop.f32.mrb[0].mxu0
  %v1084 = vadd.f32 %v152, %v1083
  %v1085 = vpop.f32.mrb[0].mxu0
  %1086 = vmatprep.mubr.bf16.mxu0 %v531
  %1087 = vmatmul.mubr.bf16.gmra.mrb[0].mxu0 %v530
  %v1088 = vpop.f32.mrb[0].mxu0
  %v1089 = vadd.f32 %v152, %v1088
  %v1090 = vpop.f32.mrb[0].mxu0
  %v1091 = vpop.f32.mrb[0].mxu0
  %v1092 = vadd.f32 %v152, %v1091
  %v1093 = vpop.f32.mrb[0].mxu0
  %1094 = vmatprep.mubr.bf16.mxu0 %v533
  %1095 = vmatmul.mubr.bf16.gmra.mrb[0].mxu0 %v532
  %v1096 = vpop.f32.mrb[0].mxu0
  %v1097 = vadd.f32 %v152, %v1096
  %v1098 = vpop.f32.mrb[0].mxu0
  %v1099 = vpop.f32.mrb[0].mxu0
  %v1100 = vadd.f32 %v152, %v1099
  %v1101 = vpop.f32.mrb[0].mxu0
  %1102 = vmatprep.mubr.bf16.mxu0 %v535
  %1103 = vmatmul.mubr.bf16.gmra.mrb[0].mxu0 %v534
  %v1104 = vpop.f32.mrb[0].mxu0
  %v1105 = vadd.f32 %v152, %v1104
  %v1106 = vpop.f32.mrb[0].mxu0
  %v1107 = vpop.f32.mrb[0].mxu0
  %v1108 = vadd.f32 %v152, %v1107
  %v1109 = vpop.f32.mrb[0].mxu0
  %1110 = vmatprep.mubr.bf16.mxu0 %v537
  %1111 = vmatmul.mubr.bf16.gmra.mrb[0].mxu0 %v536
  %v1112 = vpop.f32.mrb[0].mxu0
  %v1113 = vadd.f32 %v152, %v1112
  %v1114 = vpop.f32.mrb[0].mxu0
  %v1115 = vpop.f32.mrb[0].mxu0
  %v1116 = vadd.f32 %v152, %v1115
  %v1117 = vpop.f32.mrb[0].mxu0
  %1118 = vmatprep.mubr.bf16.mxu0 %v539
  %1119 = vmatmul.mubr.bf16.gmra.mrb[0].mxu0 %v538
  %v1120 = vpop.f32.mrb[0].mxu0
  %v1121 = vadd.f32 %v152, %v1120
  %v1122 = vpop.f32.mrb[0].mxu0
  %v1123 = vpop.f32.mrb[0].mxu0
  %v1124 = vadd.f32 %v152, %v1123
  %v1125 = vpop.f32.mrb[0].mxu0
  %1126 = vmatprep.mubr.bf16.mxu0 %v541
  %1127 = vmatmul.mubr.bf16.gmra.mrb[0].mxu0 %v540
  %v1128 = vpop.f32.mrb[0].mxu0
  %v1129 = vadd.f32 %v152, %v1128
  %v1130 = vpop.f32.mrb[0].mxu0
  %v1131 = vpop.f32.mrb[0].mxu0
  %v1132 = vadd.f32 %v152, %v1131
  %v1133 = vpop.f32.mrb[0].mxu0
  %1134 = vmatprep.mubr.bf16.mxu0 %v543
  %1135 = vmatmul.mubr.bf16.gmra.mrb[0].mxu0 %v542
  %v1136 = vpop.f32.mrb[0].mxu0
  %v1137 = vadd.f32 %v152, %v1136
  %v1138 = vpop.f32.mrb[0].mxu0
  %v1139 = vpop.f32.mrb[0].mxu0
  %v1140 = vadd.f32 %v152, %v1139
  %v1141 = vpop.f32.mrb[0].mxu0
  %1142 = vmatprep.mubr.bf16.mxu0 %v545
  %1143 = vmatmul.mubr.bf16.gmra.mrb[0].mxu0 %v544
  %v1144 = vpop.f32.mrb[0].mxu0
  %v1145 = vadd.f32 %v152, %v1144
  %v1146 = vpop.f32.mrb[0].mxu0
  %v1147 = vpop.f32.mrb[0].mxu0
  %v1148 = vadd.f32 %v152, %v1147
  %v1149 = vpop.f32.mrb[0].mxu0
  %1150 = vmatprep.mubr.bf16.mxu0 %v547
  %1151 = vmatmul.mubr.bf16.gmra.mrb[0].mxu0 %v546
  %v1152 = vpop.f32.mrb[0].mxu0
  %v1153 = vadd.f32 %v152, %v1152
  %v1154 = vpop.f32.mrb[0].mxu0
  %v1155 = vpop.f32.mrb[0].mxu0
  %v1156 = vadd.f32 %v152, %v1155
  %v1157 = vpop.f32.mrb[0].mxu0
  %1158 = vmatprep.mubr.bf16.mxu0 %v549
  %1159 = vmatmul.mubr.bf16.gmra.mrb[0].mxu0 %v548
  %v1160 = vpop.f32.mrb[0].mxu0
  %v1161 = vadd.f32 %v152, %v1160
  %v1162 = vpop.f32.mrb[0].mxu0
  %v1163 = vpop.f32.mrb[0].mxu0
  %v1164 = vadd.f32 %v152, %v1163
  %v1165 = vpop.f32.mrb[0].mxu0
  %1166 = vmatprep.mubr.bf16.mxu0 %v551
  %1167 = vmatmul.mubr.bf16.gmra.mrb[0].mxu0 %v550
  %v1168 = vpop.f32.mrb[0].mxu0
  %v1169 = vadd.f32 %v152, %v1168
  %v1170 = vpop.f32.mrb[0].mxu0
  %v1171 = vpop.f32.mrb[0].mxu0
  %v1172 = vadd.f32 %v152, %v1171
  %v1173 = vpop.f32.mrb[0].mxu0
  %1174 = vmatprep.mubr.bf16.mxu0 %v553
  %1175 = vmatmul.mubr.bf16.gmra.mrb[0].mxu0 %v552
  %v1176 = vpop.f32.mrb[0].mxu0
  %v1177 = vadd.f32 %v152, %v1176
  %v1178 = vpop.f32.mrb[0].mxu0
  %v1179 = vpop.f32.mrb[0].mxu0
  %v1180 = vadd.f32 %v152, %v1179
  %v1181 = vpop.f32.mrb[0].mxu0
  %1182 = vdwg.mxu0
  %v1183 = vmax.f32 %v785, 0.0
  %v1184 = vmax.f32 %v788, 0.0
  %v1185 = vmax.f32 %v793, 0.0
  %v1186 = vmax.f32 %v796, 0.0
  %v1187 = vmax.f32 %v801, 0.0
  %v1188 = vmax.f32 %v804, 0.0
  %v1189 = vmax.f32 %v809, 0.0
  %v1190 = vmax.f32 %v812, 0.0
  %v1191 = vmax.f32 %v817, 0.0
  %v1192 = vmax.f32 %v820, 0.0
  %v1193 = vmax.f32 %v825, 0.0
  %v1194 = vmax.f32 %v828, 0.0
  %v1195 = vmax.f32 %v833, 0.0
  %v1196 = vmax.f32 %v836, 0.0
  %v1197 = vmax.f32 %v841, 0.0
  %v1198 = vmax.f32 %v844, 0.0
  %v1199 = vmax.f32 %v849, 0.0
  %v1200 = vmax.f32 %v852, 0.0
  %v1201 = vmax.f32 %v857, 0.0
  %v1202 = vmax.f32 %v860, 0.0
  %v1203 = vmax.f32 %v865, 0.0
  %v1204 = vmax.f32 %v868, 0.0
  %v1205 = vmax.f32 %v873, 0.0
  %v1206 = vmax.f32 %v876, 0.0
  %v1207 = vmax.f32 %v881, 0.0
  %v1208 = vmax.f32 %v884, 0.0
  %v1209 = vmax.f32 %v889, 0.0
  %v1210 = vmax.f32 %v892, 0.0
  %v1211 = vmax.f32 %v897, 0.0
  %v1212 = vmax.f32 %v900, 0.0
  %v1213 = vmax.f32 %v905, 0.0
  %v1214 = vmax.f32 %v908, 0.0
  %v1215 = vmax.f32 %v913, 0.0
  %v1216 = vmax.f32 %v916, 0.0
  %v1217 = vmax.f32 %v921, 0.0
  %v1218 = vmax.f32 %v924, 0.0
  %v1219 = vmax.f32 %v929, 0.0
  %v1220 = vmax.f32 %v932, 0.0
  %v1221 = vmax.f32 %v937, 0.0
  %v1222 = vmax.f32 %v940, 0.0
  %v1223 = vmax.f32 %v945, 0.0
  %v1224 = vmax.f32 %v948, 0.0
  %v1225 = vmax.f32 %v953, 0.0
  %v1226 = vmax.f32 %v956, 0.0
  %v1227 = vmax.f32 %v961, 0.0
  %v1228 = vmax.f32 %v964, 0.0
  %v1229 = vmax.f32 %v969, 0.0
  %v1230 = vmax.f32 %v972, 0.0
  %v1231 = vmax.f32 %v977, 0.0
  %v1232 = vmax.f32 %v980, 0.0
  %v1233 = vmax.f32 %v985, 0.0
  %v1234 = vmax.f32 %v988, 0.0
  %v1235 = vmax.f32 %v993, 0.0
  %v1236 = vmax.f32 %v996, 0.0
  %v1237 = vmax.f32 %v1001, 0.0
  %v1238 = vmax.f32 %v1004, 0.0
  %v1239 = vmax.f32 %v1009, 0.0
  %v1240 = vmax.f32 %v1012, 0.0
  %v1241 = vmax.f32 %v1017, 0.0
  %v1242 = vmax.f32 %v1020, 0.0
  %v1243 = vmax.f32 %v1025, 0.0
  %v1244 = vmax.f32 %v1028, 0.0
  %v1245 = vmax.f32 %v1033, 0.0
  %v1246 = vmax.f32 %v1036, 0.0
  %v1247 = vmax.f32 %v1041, 0.0
  %v1248 = vmax.f32 %v1044, 0.0
  %v1249 = vmax.f32 %v1049, 0.0
  %v1250 = vmax.f32 %v1052, 0.0
  %v1251 = vmax.f32 %v1057, 0.0
  %v1252 = vmax.f32 %v1060, 0.0
  %v1253 = vmax.f32 %v1065, 0.0
  %v1254 = vmax.f32 %v1068, 0.0
  %v1255 = vmax.f32 %v1073, 0.0
  %v1256 = vmax.f32 %v1076, 0.0
  %v1257 = vmax.f32 %v1081, 0.0
  %v1258 = vmax.f32 %v1084, 0.0
  %v1259 = vmax.f32 %v1089, 0.0
  %v1260 = vmax.f32 %v1092, 0.0
  %v1261 = vmax.f32 %v1097, 0.0
  %v1262 = vmax.f32 %v1100, 0.0
  %v1263 = vmax.f32 %v1105, 0.0
  %v1264 = vmax.f32 %v1108, 0.0
  %v1265 = vmax.f32 %v1113, 0.0
  %v1266 = vmax.f32 %v1116, 0.0
  %v1267 = vmax.f32 %v1121, 0.0
  %v1268 = vmax.f32 %v1124, 0.0
  %v1269 = vmax.f32 %v1129, 0.0
  %v1270 = vmax.f32 %v1132, 0.0
  %v1271 = vmax.f32 %v1137, 0.0
  %v1272 = vmax.f32 %v1140, 0.0
  %v1273 = vmax.f32 %v1145, 0.0
  %v1274 = vmax.f32 %v1148, 0.0
  %v1275 = vmax.f32 %v1153, 0.0
  %v1276 = vmax.f32 %v1156, 0.0
  %v1277 = vmax.f32 %v1161, 0.0
  %v1278 = vmax.f32 %v1164, 0.0
  %v1279 = vmax.f32 %v1169, 0.0
  %v1280 = vmax.f32 %v1172, 0.0
  %v1281 = vmax.f32 %v1177, 0.0
  %v1282 = vmax.f32 %v1180, 0.0
  %v1283 = vpack.c.bf16 %v1184, %v1183
  %v1284 = vpack.c.bf16 %v1186, %v1185
  %v1285 = vpack.c.bf16 %v1188, %v1187
  %v1286 = vpack.c.bf16 %v1190, %v1189
  %v1287 = vpack.c.bf16 %v1192, %v1191
  %v1288 = vpack.c.bf16 %v1194, %v1193
  %v1289 = vpack.c.bf16 %v1196, %v1195
  %v1290 = vpack.c.bf16 %v1198, %v1197
  %v1291 = vpack.c.bf16 %v1200, %v1199
  %v1292 = vpack.c.bf16 %v1202, %v1201
  %v1293 = vpack.c.bf16 %v1204, %v1203
  %v1294 = vpack.c.bf16 %v1206, %v1205
  %v1295 = vpack.c.bf16 %v1208, %v1207
  %v1296 = vpack.c.bf16 %v1210, %v1209
  %v1297 = vpack.c.bf16 %v1212, %v1211
  %v1298 = vpack.c.bf16 %v1214, %v1213
  %v1299 = vpack.c.bf16 %v1216, %v1215
  %v1300 = vpack.c.bf16 %v1218, %v1217
  %v1301 = vpack.c.bf16 %v1220, %v1219
  %v1302 = vpack.c.bf16 %v1222, %v1221
  %v1303 = vpack.c.bf16 %v1224, %v1223
  %v1304 = vpack.c.bf16 %v1226, %v1225
  %v1305 = vpack.c.bf16 %v1228, %v1227
  %v1306 = vpack.c.bf16 %v1230, %v1229
  %v1307 = vpack.c.bf16 %v1232, %v1231
  %v1308 = vpack.c.bf16 %v1234, %v1233
  %v1309 = vpack.c.bf16 %v1236, %v1235
  %v1310 = vpack.c.bf16 %v1238, %v1237
  %v1311 = vpack.c.bf16 %v1240, %v1239
  %v1312 = vpack.c.bf16 %v1242, %v1241
  %v1313 = vpack.c.bf16 %v1244, %v1243
  %v1314 = vpack.c.bf16 %v1246, %v1245
  %v1315 = vpack.c.bf16 %v1248, %v1247
  %v1316 = vpack.c.bf16 %v1250, %v1249
  %v1317 = vpack.c.bf16 %v1252, %v1251
  %v1318 = vpack.c.bf16 %v1254, %v1253
  %v1319 = vpack.c.bf16 %v1256, %v1255
  %v1320 = vpack.c.bf16 %v1258, %v1257
  %v1321 = vpack.c.bf16 %v1260, %v1259
  %v1322 = vpack.c.bf16 %v1262, %v1261
  %v1323 = vpack.c.bf16 %v1264, %v1263
  %v1324 = vpack.c.bf16 %v1266, %v1265
  %v1325 = vpack.c.bf16 %v1268, %v1267
  %v1326 = vpack.c.bf16 %v1270, %v1269
  %v1327 = vpack.c.bf16 %v1272, %v1271
  %v1328 = vpack.c.bf16 %v1274, %v1273
  %v1329 = vpack.c.bf16 %v1276, %v1275
  %v1330 = vpack.c.bf16 %v1278, %v1277
  %v1331 = vpack.c.bf16 %v1280, %v1279
  %v1332 = vpack.c.bf16 %v1282, %v1281
  %v1383 = vunpack.c.l.b16 %v1283
  %v1384 = vunpack.c.h.b16 %v1283
  %v1385 = vunpack.c.l.b16 %v1284
  %v1386 = vunpack.c.h.b16 %v1284
  %v1387 = vunpack.c.l.b16 %v1285
  %v1388 = vunpack.c.h.b16 %v1285
  %v1389 = vunpack.c.l.b16 %v1286
  %v1390 = vunpack.c.h.b16 %v1286
  %v1391 = vunpack.c.l.b16 %v1287
  %v1392 = vunpack.c.h.b16 %v1287
  %v1393 = vunpack.c.l.b16 %v1288
  %v1394 = vunpack.c.h.b16 %v1288
  %v1395 = vunpack.c.l.b16 %v1289
  %v1396 = vunpack.c.h.b16 %v1289
  %v1397 = vunpack.c.l.b16 %v1290
  %v1398 = vunpack.c.h.b16 %v1290
  %v1399 = vunpack.c.l.b16 %v1291
  %v1400 = vunpack.c.h.b16 %v1291
  %v1401 = vunpack.c.l.b16 %v1292
  %v1402 = vunpack.c.h.b16 %v1292
  %v1403 = vunpack.c.l.b16 %v1293
  %v1404 = vunpack.c.h.b16 %v1293
  %v1405 = vunpack.c.l.b16 %v1294
  %v1406 = vunpack.c.h.b16 %v1294
  %v1407 = vunpack.c.l.b16 %v1295
  %v1408 = vunpack.c.h.b16 %v1295
  %v1409 = vunpack.c.l.b16 %v1296
  %v1410 = vunpack.c.h.b16 %v1296
  %v1411 = vunpack.c.l.b16 %v1297
  %v1412 = vunpack.c.h.b16 %v1297
  %v1413 = vunpack.c.l.b16 %v1298
  %v1414 = vunpack.c.h.b16 %v1298
  %v1415 = vunpack.c.l.b16 %v1299
  %v1416 = vunpack.c.h.b16 %v1299
  %v1417 = vunpack.c.l.b16 %v1300
  %v1418 = vunpack.c.h.b16 %v1300
  %v1419 = vunpack.c.l.b16 %v1301
  %v1420 = vunpack.c.h.b16 %v1301
  %v1421 = vunpack.c.l.b16 %v1302
  %v1422 = vunpack.c.h.b16 %v1302
  %v1423 = vunpack.c.l.b16 %v1303
  %v1424 = vunpack.c.h.b16 %v1303
  %v1425 = vunpack.c.l.b16 %v1304
  %v1426 = vunpack.c.h.b16 %v1304
  %v1427 = vunpack.c.l.b16 %v1305
  %v1428 = vunpack.c.h.b16 %v1305
  %v1429 = vunpack.c.l.b16 %v1306
  %v1430 = vunpack.c.h.b16 %v1306
  %v1431 = vunpack.c.l.b16 %v1307
  %v1432 = vunpack.c.h.b16 %v1307
  %v1433 = vunpack.c.l.b16 %v1308
  %v1434 = vunpack.c.h.b16 %v1308
  %v1435 = vunpack.c.l.b16 %v1309
  %v1436 = vunpack.c.h.b16 %v1309
  %v1437 = vunpack.c.l.b16 %v1310
  %v1438 = vunpack.c.h.b16 %v1310
  %v1439 = vunpack.c.l.b16 %v1311
  %v1440 = vunpack.c.h.b16 %v1311
  %v1441 = vunpack.c.l.b16 %v1312
  %v1442 = vunpack.c.h.b16 %v1312
  %v1443 = vunpack.c.l.b16 %v1313
  %v1444 = vunpack.c.h.b16 %v1313
  %v1445 = vunpack.c.l.b16 %v1314
  %v1446 = vunpack.c.h.b16 %v1314
  %v1447 = vunpack.c.l.b16 %v1315
  %v1448 = vunpack.c.h.b16 %v1315
  %v1449 = vunpack.c.l.b16 %v1316
  %v1450 = vunpack.c.h.b16 %v1316
  %v1451 = vunpack.c.l.b16 %v1317
  %v1452 = vunpack.c.h.b16 %v1317
  %v1453 = vunpack.c.l.b16 %v1318
  %v1454 = vunpack.c.h.b16 %v1318
  %v1455 = vunpack.c.l.b16 %v1319
  %v1456 = vunpack.c.h.b16 %v1319
  %v1457 = vunpack.c.l.b16 %v1320
  %v1458 = vunpack.c.h.b16 %v1320
  %v1459 = vunpack.c.l.b16 %v1321
  %v1460 = vunpack.c.h.b16 %v1321
  %v1461 = vunpack.c.l.b16 %v1322
  %v1462 = vunpack.c.h.b16 %v1322
  %v1463 = vunpack.c.l.b16 %v1323
  %v1464 = vunpack.c.h.b16 %v1323
  %v1465 = vunpack.c.l.b16 %v1324
  %v1466 = vunpack.c.h.b16 %v1324
  %v1467 = vunpack.c.l.b16 %v1325
  %v1468 = vunpack.c.h.b16 %v1325
  %v1469 = vunpack.c.l.b16 %v1326
  %v1470 = vunpack.c.h.b16 %v1326
  %v1471 = vunpack.c.l.b16 %v1327
  %v1472 = vunpack.c.h.b16 %v1327
  %v1473 = vunpack.c.l.b16 %v1328
  %v1474 = vunpack.c.h.b16 %v1328
  %v1475 = vunpack.c.l.b16 %v1329
  %v1476 = vunpack.c.h.b16 %v1329
  %v1477 = vunpack.c.l.b16 %v1330
  %v1478 = vunpack.c.h.b16 %v1330
  %v1479 = vunpack.c.l.b16 %v1331
  %v1480 = vunpack.c.h.b16 %v1331
  %v1481 = vunpack.c.l.b16 %v1332
  %v1482 = vunpack.c.h.b16 %v1332
  %v1483 = vpack.c.b16 %v1383, %v1383
  %v1484 = vpack.c.b16 %v1384, %v1384
  %v1485 = vpack.c.b16 %v1385, %v1385
  %v1486 = vpack.c.b16 %v1386, %v1386
  %v1487 = vpack.c.b16 %v1387, %v1387
  %v1488 = vpack.c.b16 %v1388, %v1388
  %v1489 = vpack.c.b16 %v1389, %v1389
  %v1490 = vpack.c.b16 %v1390, %v1390
  %v1491 = vpack.c.b16 %v1391, %v1391
  %v1492 = vpack.c.b16 %v1392, %v1392
  %v1493 = vpack.c.b16 %v1393, %v1393
  %v1494 = vpack.c.b16 %v1394, %v1394
  %v1495 = vpack.c.b16 %v1395, %v1395
  %v1496 = vpack.c.b16 %v1396, %v1396
  %v1497 = vpack.c.b16 %v1397, %v1397
  %v1498 = vpack.c.b16 %v1398, %v1398
  %v1499 = vpack.c.b16 %v1399, %v1399
  %v1500 = vpack.c.b16 %v1400, %v1400
  %v1501 = vpack.c.b16 %v1401, %v1401
  %v1502 = vpack.c.b16 %v1402, %v1402
  %v1503 = vpack.c.b16 %v1403, %v1403
  %v1504 = vpack.c.b16 %v1404, %v1404
  %v1505 = vpack.c.b16 %v1405, %v1405
  %v1506 = vpack.c.b16 %v1406, %v1406
  %v1507 = vpack.c.b16 %v1407, %v1407
  %v1508 = vpack.c.b16 %v1408, %v1408
  %v1509 = vpack.c.b16 %v1409, %v1409
  %v1510 = vpack.c.b16 %v1410, %v1410
  %v1511 = vpack.c.b16 %v1411, %v1411
  %v1512 = vpack.c.b16 %v1412, %v1412
  %v1513 = vpack.c.b16 %v1413, %v1413
  %v1514 = vpack.c.b16 %v1414, %v1414
  %v1515 = vpack.c.b16 %v1415, %v1415
  %v1516 = vpack.c.b16 %v1416, %v1416
  %v1517 = vpack.c.b16 %v1417, %v1417
  %v1518 = vpack.c.b16 %v1418, %v1418
  %v1519 = vpack.c.b16 %v1419, %v1419
  %v1520 = vpack.c.b16 %v1420, %v1420
  %v1521 = vpack.c.b16 %v1421, %v1421
  %v1522 = vpack.c.b16 %v1422, %v1422
  %v1523 = vpack.c.b16 %v1423, %v1423
  %v1524 = vpack.c.b16 %v1424, %v1424
  %v1525 = vpack.c.b16 %v1425, %v1425
  %v1526 = vpack.c.b16 %v1426, %v1426
  %v1527 = vpack.c.b16 %v1427, %v1427
  %v1528 = vpack.c.b16 %v1428, %v1428
  %v1529 = vpack.c.b16 %v1429, %v1429
  %v1530 = vpack.c.b16 %v1430, %v1430
  %v1531 = vpack.c.b16 %v1431, %v1431
  %v1532 = vpack.c.b16 %v1432, %v1432
  %v1533 = vpack.c.b16 %v1433, %v1433
  %v1534 = vpack.c.b16 %v1434, %v1434
  %v1535 = vpack.c.b16 %v1435, %v1435
  %v1536 = vpack.c.b16 %v1436, %v1436
  %v1537 = vpack.c.b16 %v1437, %v1437
  %v1538 = vpack.c.b16 %v1438, %v1438
  %v1539 = vpack.c.b16 %v1439, %v1439
  %v1540 = vpack.c.b16 %v1440, %v1440
  %v1541 = vpack.c.b16 %v1441, %v1441
  %v1542 = vpack.c.b16 %v1442, %v1442
  %v1543 = vpack.c.b16 %v1443, %v1443
  %v1544 = vpack.c.b16 %v1444, %v1444
  %v1545 = vpack.c.b16 %v1445, %v1445
  %v1546 = vpack.c.b16 %v1446, %v1446
  %v1547 = vpack.c.b16 %v1447, %v1447
  %v1548 = vpack.c.b16 %v1448, %v1448
  %v1549 = vpack.c.b16 %v1449, %v1449
  %v1550 = vpack.c.b16 %v1450, %v1450
  %v1551 = vpack.c.b16 %v1451, %v1451
  %v1552 = vpack.c.b16 %v1452, %v1452
  %v1553 = vpack.c.b16 %v1453, %v1453
  %v1554 = vpack.c.b16 %v1454, %v1454
  %v1555 = vpack.c.b16 %v1455, %v1455
  %v1556 = vpack.c.b16 %v1456, %v1456
  %v1557 = vpack.c.b16 %v1457, %v1457
  %v1558 = vpack.c.b16 %v1458, %v1458
  %v1559 = vpack.c.b16 %v1459, %v1459
  %v1560 = vpack.c.b16 %v1460, %v1460
  %v1561 = vpack.c.b16 %v1461, %v1461
  %v1562 = vpack.c.b16 %v1462, %v1462
  %v1563 = vpack.c.b16 %v1463, %v1463
  %v1564 = vpack.c.b16 %v1464, %v1464
  %v1565 = vpack.c.b16 %v1465, %v1465
  %v1566 = vpack.c.b16 %v1466, %v1466
  %v1567 = vpack.c.b16 %v1467, %v1467
  %v1568 = vpack.c.b16 %v1468, %v1468
  %v1569 = vpack.c.b16 %v1469, %v1469
  %v1570 = vpack.c.b16 %v1470, %v1470
  %v1571 = vpack.c.b16 %v1471, %v1471
  %v1572 = vpack.c.b16 %v1472, %v1472
  %v1573 = vpack.c.b16 %v1473, %v1473
  %v1574 = vpack.c.b16 %v1474, %v1474
  %v1575 = vpack.c.b16 %v1475, %v1475
  %v1576 = vpack.c.b16 %v1476, %v1476
  %v1577 = vpack.c.b16 %v1477, %v1477
  %v1578 = vpack.c.b16 %v1478, %v1478
  %v1579 = vpack.c.b16 %v1479, %v1479
  %v1580 = vpack.c.b16 %v1480, %v1480
  %v1581 = vpack.c.b16 %v1481, %v1481
  %v1582 = vpack.c.b16 %v1482, %v1482
  %1683 = vst [vmem:[%s3] sm:$0xf] %v1483
  %1684 = vst [vmem:[%s3 + $0x4] sm:$0xf] %v1484
  %1685 = vst [vmem:[%s3 + $0x8] sm:$0xf] %v1485
  %1686 = vst [vmem:[%s3 + $0xc] sm:$0xf] %v1486
  %1687 = vst [vmem:[%s3 + $0x10] sm:$0xf] %v1487
  %1688 = vst [vmem:[%s3 + $0x14] sm:$0xf] %v1488
  %1689 = vst [vmem:[%s3 + $0x18] sm:$0xf] %v1489
  %1690 = vst [vmem:[%s3 + $0x1c] sm:$0xf] %v1490
  %1691 = vst [vmem:[%s3 + $0x20] sm:$0xf] %v1491
  %1692 = vst [vmem:[%s3 + $0x24] sm:$0xf] %v1492
  %1693 = vst [vmem:[%s3 + $0x28] sm:$0xf] %v1493
  %1694 = vst [vmem:[%s3 + $0x2c] sm:$0xf] %v1494
  %1695 = vst [vmem:[%s3 + $0x30] sm:$0xf] %v1495
  %1696 = vst [vmem:[%s3 + $0x34] sm:$0xf] %v1496
  %1697 = vst [vmem:[%s3 + $0x38] sm:$0xf] %v1497
  %1698 = vst [vmem:[%s3 + $0x3c] sm:$0xf] %v1498
  %1699 = vst [vmem:[%s3 + $0x40] sm:$0xf] %v1499
  %1700 = vst [vmem:[%s3 + $0x44] sm:$0xf] %v1500
  %1701 = vst [vmem:[%s3 + $0x48] sm:$0xf] %v1501
  %1702 = vst [vmem:[%s3 + $0x4c] sm:$0xf] %v1502
  %1703 = vst [vmem:[%s3 + $0x50] sm:$0xf] %v1503
  %1704 = vst [vmem:[%s3 + $0x54] sm:$0xf] %v1504
  %1705 = vst [vmem:[%s3 + $0x58] sm:$0xf] %v1505
  %1706 = vst [vmem:[%s3 + $0x5c] sm:$0xf] %v1506
  %1707 = vst [vmem:[%s3 + $0x60] sm:$0xf] %v1507
  %1708 = vst [vmem:[%s3 + $0x64] sm:$0xf] %v1508
  %1709 = vst [vmem:[%s3 + $0x68] sm:$0xf] %v1509
  %1710 = vst [vmem:[%s3 + $0x6c] sm:$0xf] %v1510
  %1711 = vst [vmem:[%s3 + $0x70] sm:$0xf] %v1511
  %1712 = vst [vmem:[%s3 + $0x74] sm:$0xf] %v1512
  %1713 = vst [vmem:[%s3 + $0x78] sm:$0xf] %v1513
  %1714 = vst [vmem:[%s3 + $0x7c] sm:$0xf] %v1514
  %1715 = vst [vmem:[%s3 + $0x80] sm:$0xf] %v1515
  %1716 = vst [vmem:[%s3 + $0x84] sm:$0xf] %v1516
  %1717 = vst [vmem:[%s3 + $0x88] sm:$0xf] %v1517
  %1718 = vst [vmem:[%s3 + $0x8c] sm:$0xf] %v1518
  %1719 = vst [vmem:[%s3 + $0x90] sm:$0xf] %v1519
  %1720 = vst [vmem:[%s3 + $0x94] sm:$0xf] %v1520
  %1721 = vst [vmem:[%s3 + $0x98] sm:$0xf] %v1521
  %1722 = vst [vmem:[%s3 + $0x9c] sm:$0xf] %v1522
  %1723 = vst [vmem:[%s3 + $0xa0] sm:$0xf] %v1523
  %1724 = vst [vmem:[%s3 + $0xa4] sm:$0xf] %v1524
  %1725 = vst [vmem:[%s3 + $0xa8] sm:$0xf] %v1525
  %1726 = vst [vmem:[%s3 + $0xac] sm:$0xf] %v1526
  %1727 = vst [vmem:[%s3 + $0xb0] sm:$0xf] %v1527
  %1728 = vst [vmem:[%s3 + $0xb4] sm:$0xf] %v1528
  %1729 = vst [vmem:[%s3 + $0xb8] sm:$0xf] %v1529
  %1730 = vst [vmem:[%s3 + $0xbc] sm:$0xf] %v1530
  %1731 = vst [vmem:[%s3 + $0xc0] sm:$0xf] %v1531
  %1732 = vst [vmem:[%s3 + $0xc4] sm:$0xf] %v1532
  %1733 = vst [vmem:[%s3 + $0xc8] sm:$0xf] %v1533
  %1734 = vst [vmem:[%s3 + $0xcc] sm:$0xf] %v1534
  %1735 = vst [vmem:[%s3 + $0xd0] sm:$0xf] %v1535
  %1736 = vst [vmem:[%s3 + $0xd4] sm:$0xf] %v1536
  %1737 = vst [vmem:[%s3 + $0xd8] sm:$0xf] %v1537
  %1738 = vst [vmem:[%s3 + $0xdc] sm:$0xf] %v1538
  %1739 = vst [vmem:[%s3 + $0xe0] sm:$0xf] %v1539
  %1740 = vst [vmem:[%s3 + $0xe4] sm:$0xf] %v1540
  %1741 = vst [vmem:[%s3 + $0xe8] sm:$0xf] %v1541
  %1742 = vst [vmem:[%s3 + $0xec] sm:$0xf] %v1542
  %1743 = vst [vmem:[%s3 + $0xf0] sm:$0xf] %v1543
  %1744 = vst [vmem:[%s3 + $0xf4] sm:$0xf] %v1544
  %1745 = vst [vmem:[%s3 + $0xf8] sm:$0xf] %v1545
  %1746 = vst [vmem:[%s3 + $0xfc] sm:$0xf] %v1546
  %1747 = vst [vmem:[%s3 + $0x100] sm:$0xf] %v1547
  %1748 = vst [vmem:[%s3 + $0x104] sm:$0xf] %v1548
  %1749 = vst [vmem:[%s3 + $0x108] sm:$0xf] %v1549
  %1750 = vst [vmem:[%s3 + $0x10c] sm:$0xf] %v1550
  %1751 = vst [vmem:[%s3 + $0x110] sm:$0xf] %v1551
  %1752 = vst [vmem:[%s3 + $0x114] sm:$0xf] %v1552
  %1753 = vst [vmem:[%s3 + $0x118] sm:$0xf] %v1553
  %1754 = vst [vmem:[%s3 + $0x11c] sm:$0xf] %v1554
  %1755 = vst [vmem:[%s3 + $0x120] sm:$0xf] %v1555
  %1756 = vst [vmem:[%s3 + $0x124] sm:$0xf] %v1556
  %1757 = vst [vmem:[%s3 + $0x128] sm:$0xf] %v1557
  %1758 = vst [vmem:[%s3 + $0x12c] sm:$0xf] %v1558
  %1759 = vst [vmem:[%s3 + $0x130] sm:$0xf] %v1559
  %1760 = vst [vmem:[%s3 + $0x134] sm:$0xf] %v1560
  %1761 = vst [vmem:[%s3 + $0x138] sm:$0xf] %v1561
  %1762 = vst [vmem:[%s3 + $0x13c] sm:$0xf] %v1562
  %1763 = vst [vmem:[%s3 + $0x140] sm:$0xf] %v1563
  %1764 = vst [vmem:[%s3 + $0x144] sm:$0xf] %v1564
  %1765 = vst [vmem:[%s3 + $0x148] sm:$0xf] %v1565
  %1766 = vst [vmem:[%s3 + $0x14c] sm:$0xf] %v1566
  %1767 = vst [vmem:[%s3 + $0x150] sm:$0xf] %v1567
  %1768 = vst [vmem:[%s3 + $0x154] sm:$0xf] %v1568
  %1769 = vst [vmem:[%s3 + $0x158] sm:$0xf] %v1569
  %1770 = vst [vmem:[%s3 + $0x15c] sm:$0xf] %v1570
  %1771 = vst [vmem:[%s3 + $0x160] sm:$0xf] %v1571
  %1772 = vst [vmem:[%s3 + $0x164] sm:$0xf] %v1572
  %1773 = vst [vmem:[%s3 + $0x168] sm:$0xf] %v1573
  %1774 = vst [vmem:[%s3 + $0x16c] sm:$0xf] %v1574
  %1775 = vst [vmem:[%s3 + $0x170] sm:$0xf] %v1575
  %1776 = vst [vmem:[%s3 + $0x174] sm:$0xf] %v1576
  %1777 = vst [vmem:[%s3 + $0x178] sm:$0xf] %v1577
  %1778 = vst [vmem:[%s3 + $0x17c] sm:$0xf] %v1578
  %1779 = vst [vmem:[%s3 + $0x180] sm:$0xf] %v1579
  %1780 = vst [vmem:[%s3 + $0x184] sm:$0xf] %v1580
  %1781 = vst [vmem:[%s3 + $0x188] sm:$0xf] %v1581
  %1782 = vst [vmem:[%s3 + $0x18c] sm:$0xf] %v1582
  // Predicated region
  $region14: #{dqn_forward.3} parent=0 // pred_check
    _
  $region15: #{dqn_forward.3} parent=0 // pred_check_branch
    %1784 = sbr.rel (0) target = $region17
  $region16: #{dqn_forward.3} parent=0 // pred_region
    _
  $region17: #{dqn_forward.3} parent=0 // pred_fallthru
    _
  // Predicated region
  $region18: #{dqn_forward.3} parent=0 // pred_check
    _
  $region19: #{dqn_forward.3} parent=0 // pred_check_branch
    %1786 = sbr.rel (0) target = $region21
  $region20: #{dqn_forward.3} parent=0 // pred_region
    _
  $region21: #{dqn_forward.3} parent=0 // pred_fallthru
    _

// kernel: dqn_forward.4
$region0: #{dqn_forward.4}
  #allocation0 [shape = 'u32[]', space=smem, size = 0x4, offset = 0x4, fixed_abs, tag = 'smem constant byte address 0x4 - core index']
  #allocation1 [shape = 'u32[144,128]{1,0:T(1,128)}', space=vmem, size = 0x12000, scoped, tag = 'internal scratch']
  %s0 = inlined_call_operand.vmem [shape: bf16[162,2048], index: 0, kind: input, shape index: {}]
  %s1 = inlined_call_operand.vmem [shape: bf16[2048,128], index: 1, kind: input, shape index: {}]
  %s2 = inlined_call_operand.vmem [shape: f32[1,128], index: 2, kind: input, shape index: {}]
  %s3 = inlined_call_operand.vmem [shape: bf16[162,128], index: 3, kind: output, shape index: {}]
  %s4 = sld [smem:[#allocation0]]
  $region22: #{dqn_forward.4} parent=0
    _
  %s6 = ssub.s32 1, %s4
  %s7 = scalar_select 0, %s6, %s4
  // Predicated region
  $region2: #{dqn_forward.4} parent=0 // pred_check
    _
  $region3: #{dqn_forward.4} parent=0 // pred_check_branch
    %9 = sbr.rel (0) target = $region5
  $region4: #{dqn_forward.4} parent=0 // pred_region
    _
  $region5: #{dqn_forward.4} parent=0 // pred_fallthru
    _
  // Predicated region
  $region6: #{dqn_forward.4} parent=0 // pred_check
    _
  $region7: #{dqn_forward.4} parent=0 // pred_check_branch
    %11 = sbr.rel (0) target = $region9
  $region8: #{dqn_forward.4} parent=0 // pred_region
    _
  $region9: #{dqn_forward.4} parent=0 // pred_fallthru
    _
  // Predicated region
  $region10: #{dqn_forward.4} parent=0 // pred_check
    _
  $region11: #{dqn_forward.4} parent=0 // pred_check_branch
    %13 = sbr.rel (0) target = $region13
  $region12: #{dqn_forward.4} parent=0 // pred_region
    _
  $region13: #{dqn_forward.4} parent=0 // pred_fallthru
    _
  %v15 = vld [vmem:[%s0] sm:$0xff]
  %v16 = vld [vmem:[%s0 + $0x8] sm:$0xff]
  %v17 = vld [vmem:[%s0 + $0x10] sm:$0xff]
  %v18 = vld [vmem:[%s0 + $0x18] sm:$0xff]
  %v19 = vld [vmem:[%s0 + $0x20] sm:$0xff]
  %v20 = vld [vmem:[%s0 + $0x28] sm:$0xff]
  %v21 = vld [vmem:[%s0 + $0x30] sm:$0xff]
  %v22 = vld [vmem:[%s0 + $0x38] sm:$0xff]
  %v23 = vld [vmem:[%s0 + $0x40] sm:$0xff]
  %v24 = vld [vmem:[%s0 + $0x48] sm:$0xff]
  %v25 = vld [vmem:[%s0 + $0x50] sm:$0xff]
  %v26 = vld [vmem:[%s0 + $0x58] sm:$0xff]
  %v27 = vld [vmem:[%s0 + $0x60] sm:$0xff]
  %v28 = vld [vmem:[%s0 + $0x68] sm:$0xff]
  %v29 = vld [vmem:[%s0 + $0x70] sm:$0xff]
  %v30 = vld [vmem:[%s0 + $0x78] sm:$0xff]
  %v31 = vld [vmem:[%s0 + $0x80] sm:$0xff]
  %v32 = vld [vmem:[%s0 + $0x88] sm:$0xff]
  %v33 = vld [vmem:[%s0 + $0x90] sm:$0xff]
  %v34 = vld [vmem:[%s0 + $0x98] sm:$0xff]
  %v35 = vld [vmem:[%s0 + $0xa0] sm:$0xff]
  %v36 = vld [vmem:[%s0 + $0xa8] sm:$0xff]
  %v37 = vld [vmem:[%s0 + $0xb0] sm:$0xff]
  %v38 = vld [vmem:[%s0 + $0xb8] sm:$0xff]
  %v39 = vld [vmem:[%s0 + $0xc0] sm:$0xff]
  %v40 = vld [vmem:[%s0 + $0xc8] sm:$0xff]
  %v41 = vld [vmem:[%s0 + $0xd0] sm:$0xff]
  %v42 = vld [vmem:[%s0 + $0xd8] sm:$0xff]
  %v43 = vld [vmem:[%s0 + $0xe0] sm:$0xff]
  %v44 = vld [vmem:[%s0 + $0xe8] sm:$0xff]
  %v45 = vld [vmem:[%s0 + $0xf0] sm:$0xff]
  %v46 = vld [vmem:[%s0 + $0xf8] sm:$0xff]
  %v47 = vld [vmem:[%s0 + $0x100] sm:$0xff]
  %v48 = vld [vmem:[%s0 + $0x108] sm:$0xff]
  %v49 = vld [vmem:[%s0 + $0x110] sm:$0xff]
  %v50 = vld [vmem:[%s0 + $0x118] sm:$0xff]
  %v51 = vld [vmem:[%s0 + $0x120] sm:$0xff]
  %v52 = vld [vmem:[%s0 + $0x128] sm:$0xff]
  %v53 = vld [vmem:[%s0 + $0x130] sm:$0xff]
  %v54 = vld [vmem:[%s0 + $0x138] sm:$0xff]
  %v55 = vld [vmem:[%s0 + $0x140] sm:$0xff]
  %v56 = vld [vmem:[%s0 + $0x148] sm:$0xff]
  %v57 = vld [vmem:[%s0 + $0x150] sm:$0xff]
  %v58 = vld [vmem:[%s0 + $0x158] sm:$0xff]
  %v59 = vld [vmem:[%s0 + $0x160] sm:$0xff]
  %v60 = vld [vmem:[%s0 + $0x168] sm:$0xff]
  %v61 = vld [vmem:[%s0 + $0x170] sm:$0xff]
  %v62 = vld [vmem:[%s0 + $0x178] sm:$0xff]
  %v63 = vld [vmem:[%s0 + $0x180] sm:$0xff]
  %v64 = vld [vmem:[%s0 + $0x188] sm:$0xff]
  %v65 = vld [vmem:[%s0 + $0x190] sm:$0xff]
  %v66 = vld [vmem:[%s0 + $0x198] sm:$0xff]
  %v67 = vld [vmem:[%s0 + $0x1a0] sm:$0xff]
  %v68 = vld [vmem:[%s0 + $0x1a8] sm:$0xff]
  %v69 = vld [vmem:[%s0 + $0x1b0] sm:$0xff]
  %v70 = vld [vmem:[%s0 + $0x1b8] sm:$0xff]
  %v71 = vld [vmem:[%s0 + $0x1c0] sm:$0xff]
  %v72 = vld [vmem:[%s0 + $0x1c8] sm:$0xff]
  %v73 = vld [vmem:[%s0 + $0x1d0] sm:$0xff]
  %v74 = vld [vmem:[%s0 + $0x1d8] sm:$0xff]
  %v75 = vld [vmem:[%s0 + $0x1e0] sm:$0xff]
  %v76 = vld [vmem:[%s0 + $0x1e8] sm:$0xff]
  %v77 = vld [vmem:[%s0 + $0x1f0] sm:$0xff]
  %v78 = vld [vmem:[%s0 + $0x1f8] sm:$0xff]
  %v79 = vld [vmem:[%s0 + $0x200] sm:$0xff]
  %v80 = vld [vmem:[%s0 + $0x208] sm:$0xff]
  %v81 = vld [vmem:[%s0 + $0x210] sm:$0xff]
  %v82 = vld [vmem:[%s0 + $0x218] sm:$0xff]
  %v83 = vld [vmem:[%s0 + $0x220] sm:$0xff]
  %v84 = vld [vmem:[%s0 + $0x228] sm:$0xff]
  %v85 = vld [vmem:[%s0 + $0x230] sm:$0xff]
  %v86 = vld [vmem:[%s0 + $0x238] sm:$0xff]
  %v87 = vld [vmem:[%s0 + $0x240] sm:$0xff]
  %v88 = vld [vmem:[%s0 + $0x248] sm:$0xff]
  %v89 = vld [vmem:[%s0 + $0x250] sm:$0xff]
  %v90 = vld [vmem:[%s0 + $0x258] sm:$0xff]
  %v91 = vld [vmem:[%s0 + $0x260] sm:$0xff]
  %v92 = vld [vmem:[%s0 + $0x268] sm:$0xff]
  %v93 = vld [vmem:[%s0 + $0x270] sm:$0xff]
  %v94 = vld [vmem:[%s0 + $0x278] sm:$0xff]
  %v95 = vld [vmem:[%s0 + $0x280] sm:$0xff]
  %v96 = vld [vmem:[%s0 + $0x288] sm:$0xff]
  %v97 = vld [vmem:[%s0 + $0x290] sm:$0xff]
  %v98 = vld [vmem:[%s0 + $0x298] sm:$0xff]
  %v99 = vld [vmem:[%s0 + $0x2a0] sm:$0xff]
  %v100 = vld [vmem:[%s0 + $0x2a8] sm:$0xff]
  %v101 = vld [vmem:[%s0 + $0x2b0] sm:$0xff]
  %v102 = vld [vmem:[%s0 + $0x2b8] sm:$0xff]
  %v103 = vld [vmem:[%s0 + $0x2c0] sm:$0xff]
  %v104 = vld [vmem:[%s0 + $0x2c8] sm:$0xff]
  %v105 = vld [vmem:[%s0 + $0x2d0] sm:$0xff]
  %v106 = vld [vmem:[%s0 + $0x2d8] sm:$0xff]
  %v107 = vld [vmem:[%s0 + $0x2e0] sm:$0xff]
  %v108 = vld [vmem:[%s0 + $0x2e8] sm:$0xff]
  %v109 = vld [vmem:[%s0 + $0x2f0] sm:$0xff]
  %v110 = vld [vmem:[%s0 + $0x2f8] sm:$0xff]
  %v111 = vld [vmem:[%s0 + $0x300] sm:$0xff]
  %v112 = vld [vmem:[%s0 + $0x308] sm:$0xff]
  %v113 = vld [vmem:[%s0 + $0x310] sm:$0xff]
  %v114 = vld [vmem:[%s0 + $0x318] sm:$0xff]
  %v115 = vld [vmem:[%s0 + $0x320] sm:$0xff]
  %v116 = vld [vmem:[%s0 + $0x328] sm:$0xff]
  %v117 = vld [vmem:[%s0 + $0x330] sm:$0xff]
  %v118 = vld [vmem:[%s0 + $0x338] sm:$0xff]
  %v119 = vld [vmem:[%s0 + $0x340] sm:$0xff]
  %v120 = vld [vmem:[%s0 + $0x348] sm:$0xff]
  %v121 = vld [vmem:[%s0 + $0x350] sm:$0xff]
  %v122 = vld [vmem:[%s0 + $0x358] sm:$0xff]
  %v123 = vld [vmem:[%s0 + $0x360] sm:$0xff]
  %v124 = vld [vmem:[%s0 + $0x368] sm:$0xff]
  %v125 = vld [vmem:[%s0 + $0x370] sm:$0xff]
  %v126 = vld [vmem:[%s0 + $0x378] sm:$0xff]
  %v127 = vld [vmem:[%s0 + $0x380] sm:$0xff]
  %v128 = vld [vmem:[%s0 + $0x388] sm:$0xff]
  %v129 = vld [vmem:[%s0 + $0x390] sm:$0xff]
  %v130 = vld [vmem:[%s0 + $0x398] sm:$0xff]
  %v131 = vld [vmem:[%s0 + $0x3a0] sm:$0xff]
  %v132 = vld [vmem:[%s0 + $0x3a8] sm:$0xff]
  %v133 = vld [vmem:[%s0 + $0x3b0] sm:$0xff]
  %v134 = vld [vmem:[%s0 + $0x3b8] sm:$0xff]
  %v135 = vld [vmem:[%s0 + $0x3c0] sm:$0xff]
  %v136 = vld [vmem:[%s0 + $0x3c8] sm:$0xff]
  %v137 = vld [vmem:[%s0 + $0x3d0] sm:$0xff]
  %v138 = vld [vmem:[%s0 + $0x3d8] sm:$0xff]
  %v139 = vld [vmem:[%s0 + $0x3e0] sm:$0xff]
  %v140 = vld [vmem:[%s0 + $0x3e8] sm:$0xff]
  %v141 = vld [vmem:[%s0 + $0x3f0] sm:$0xff]
  %v142 = vld [vmem:[%s0 + $0x3f8] sm:$0xff]
  %v143 = vld [vmem:[%s0 + $0x400] sm:$0xff]
  %v144 = vld [vmem:[%s0 + $0x408] sm:$0xff]
  %v145 = vld [vmem:[%s0 + $0x410] sm:$0xff]
  %v146 = vld [vmem:[%s0 + $0x418] sm:$0xff]
  %v147 = vld [vmem:[%s0 + $0x420] sm:$0xff]
  %v148 = vld [vmem:[%s0 + $0x428] sm:$0xff]
  %v149 = vld [vmem:[%s0 + $0x430] sm:$0xff]
  %v150 = vld [vmem:[%s0 + $0x438] sm:$0xff]
  %v151 = vld [vmem:[%s0 + $0x440] sm:$0xff]
  %v152 = vld [vmem:[%s0 + $0x448] sm:$0xff]
  %v153 = vld [vmem:[%s0 + $0x450] sm:$0xff]
  %v154 = vld [vmem:[%s0 + $0x458] sm:$0xff]
  %v155 = vld [vmem:[%s0 + $0x460] sm:$0xff]
  %v156 = vld [vmem:[%s0 + $0x468] sm:$0xff]
  %v157 = vld [vmem:[%s0 + $0x470] sm:$0xff]
  %v158 = vld [vmem:[%s0 + $0x478] sm:$0xff]
  %v159 = vld [vmem:[%s0 + $0x480] sm:$0xff]
  %v160 = vld [vmem:[%s0 + $0x488] sm:$0xff]
  %v161 = vld [vmem:[%s0 + $0x490] sm:$0xff]
  %v162 = vld [vmem:[%s0 + $0x498] sm:$0xff]
  %v163 = vld [vmem:[%s0 + $0x4a0] sm:$0xff]
  %v164 = vld [vmem:[%s0 + $0x4a8] sm:$0xff]
  %v165 = vld [vmem:[%s0 + $0x4b0] sm:$0xff]
  %v166 = vld [vmem:[%s0 + $0x4b8] sm:$0xff]
  %v167 = vld [vmem:[%s0 + $0x4c0] sm:$0xff]
  %v168 = vld [vmem:[%s0 + $0x4c8] sm:$0xff]
  %v169 = vld [vmem:[%s0 + $0x4d0] sm:$0xff]
  %v170 = vld [vmem:[%s0 + $0x4d8] sm:$0xff]
  %v171 = vld [vmem:[%s0 + $0x4e0] sm:$0xff]
  %v172 = vld [vmem:[%s0 + $0x4e8] sm:$0xff]
  %v173 = vld [vmem:[%s0 + $0x4f0] sm:$0xff]
  %v174 = vld [vmem:[%s0 + $0x4f8] sm:$0xff]
  %v175 = vld [vmem:[%s0 + $0x500] sm:$0x11]
  %v176 = vld [vmem:[%s0 + $0x508] sm:$0x11]
  %v177 = vld [vmem:[%s0 + $0x510] sm:$0x11]
  %v178 = vld [vmem:[%s0 + $0x518] sm:$0x11]
  %v179 = vld [vmem:[%s0 + $0x520] sm:$0x11]
  %v180 = vld [vmem:[%s0 + $0x528] sm:$0x11]
  %v181 = vld [vmem:[%s0 + $0x530] sm:$0x11]
  %v182 = vld [vmem:[%s0 + $0x538] sm:$0x11]
  %v183 = vld [vmem:[%s1] sm:$0xf]
  %v184 = vld [vmem:[%s1 + $0x4] sm:$0xf]
  %v185 = vld [vmem:[%s1 + $0x8] sm:$0xf]
  %v186 = vld [vmem:[%s1 + $0xc] sm:$0xf]
  %v187 = vld [vmem:[%s1 + $0x10] sm:$0xf]
  %v188 = vld [vmem:[%s1 + $0x14] sm:$0xf]
  %v189 = vld [vmem:[%s1 + $0x18] sm:$0xf]
  %v190 = vld [vmem:[%s1 + $0x1c] sm:$0xf]
  %v191 = vld [vmem:[%s1 + $0x20] sm:$0xf]
  %v192 = vld [vmem:[%s1 + $0x24] sm:$0xf]
  %v193 = vld [vmem:[%s1 + $0x28] sm:$0xf]
  %v194 = vld [vmem:[%s1 + $0x2c] sm:$0xf]
  %v195 = vld [vmem:[%s1 + $0x30] sm:$0xf]
  %v196 = vld [vmem:[%s1 + $0x34] sm:$0xf]
  %v197 = vld [vmem:[%s1 + $0x38] sm:$0xf]
  %v198 = vld [vmem:[%s1 + $0x3c] sm:$0xf]
  %v199 = vld [vmem:[%s1 + $0x40] sm:$0xf]
  %v200 = vld [vmem:[%s1 + $0x44] sm:$0xf]
  %v201 = vld [vmem:[%s1 + $0x48] sm:$0xf]
  %v202 = vld [vmem:[%s1 + $0x4c] sm:$0xf]
  %v203 = vld [vmem:[%s1 + $0x50] sm:$0xf]
  %v204 = vld [vmem:[%s1 + $0x54] sm:$0xf]
  %v205 = vld [vmem:[%s1 + $0x58] sm:$0xf]
  %v206 = vld [vmem:[%s1 + $0x5c] sm:$0xf]
  %v207 = vld [vmem:[%s1 + $0x60] sm:$0xf]
  %v208 = vld [vmem:[%s1 + $0x64] sm:$0xf]
  %v209 = vld [vmem:[%s1 + $0x68] sm:$0xf]
  %v210 = vld [vmem:[%s1 + $0x6c] sm:$0xf]
  %v211 = vld [vmem:[%s1 + $0x70] sm:$0xf]
  %v212 = vld [vmem:[%s1 + $0x74] sm:$0xf]
  %v213 = vld [vmem:[%s1 + $0x78] sm:$0xf]
  %v214 = vld [vmem:[%s1 + $0x7c] sm:$0xf]
  %v215 = vld [vmem:[%s1 + $0x80] sm:$0xf]
  %v216 = vld [vmem:[%s1 + $0x84] sm:$0xf]
  %v217 = vld [vmem:[%s1 + $0x88] sm:$0xf]
  %v218 = vld [vmem:[%s1 + $0x8c] sm:$0xf]
  %v219 = vld [vmem:[%s1 + $0x90] sm:$0xf]
  %v220 = vld [vmem:[%s1 + $0x94] sm:$0xf]
  %v221 = vld [vmem:[%s1 + $0x98] sm:$0xf]
  %v222 = vld [vmem:[%s1 + $0x9c] sm:$0xf]
  %v223 = vld [vmem:[%s1 + $0xa0] sm:$0xf]
  %v224 = vld [vmem:[%s1 + $0xa4] sm:$0xf]
  %v225 = vld [vmem:[%s1 + $0xa8] sm:$0xf]
  %v226 = vld [vmem:[%s1 + $0xac] sm:$0xf]
  %v227 = vld [vmem:[%s1 + $0xb0] sm:$0xf]
  %v228 = vld [vmem:[%s1 + $0xb4] sm:$0xf]
  %v229 = vld [vmem:[%s1 + $0xb8] sm:$0xf]
  %v230 = vld [vmem:[%s1 + $0xbc] sm:$0xf]
  %v231 = vld [vmem:[%s1 + $0xc0] sm:$0xf]
  %v232 = vld [vmem:[%s1 + $0xc4] sm:$0xf]
  %v233 = vld [vmem:[%s1 + $0xc8] sm:$0xf]
  %v234 = vld [vmem:[%s1 + $0xcc] sm:$0xf]
  %v235 = vld [vmem:[%s1 + $0xd0] sm:$0xf]
  %v236 = vld [vmem:[%s1 + $0xd4] sm:$0xf]
  %v237 = vld [vmem:[%s1 + $0xd8] sm:$0xf]
  %v238 = vld [vmem:[%s1 + $0xdc] sm:$0xf]
  %v239 = vld [vmem:[%s1 + $0xe0] sm:$0xf]
  %v240 = vld [vmem:[%s1 + $0xe4] sm:$0xf]
  %v241 = vld [vmem:[%s1 + $0xe8] sm:$0xf]
  %v242 = vld [vmem:[%s1 + $0xec] sm:$0xf]
  %v243 = vld [vmem:[%s1 + $0xf0] sm:$0xf]
  %v244 = vld [vmem:[%s1 + $0xf4] sm:$0xf]
  %v245 = vld [vmem:[%s1 + $0xf8] sm:$0xf]
  %v246 = vld [vmem:[%s1 + $0xfc] sm:$0xf]
  %v247 = vld [vmem:[%s1 + $0x100] sm:$0xf]
  %v248 = vld [vmem:[%s1 + $0x104] sm:$0xf]
  %v249 = vld [vmem:[%s1 + $0x108] sm:$0xf]
  %v250 = vld [vmem:[%s1 + $0x10c] sm:$0xf]
  %v251 = vld [vmem:[%s1 + $0x110] sm:$0xf]
  %v252 = vld [vmem:[%s1 + $0x114] sm:$0xf]
  %v253 = vld [vmem:[%s1 + $0x118] sm:$0xf]
  %v254 = vld [vmem:[%s1 + $0x11c] sm:$0xf]
  %v255 = vld [vmem:[%s1 + $0x120] sm:$0xf]
  %v256 = vld [vmem:[%s1 + $0x124] sm:$0xf]
  %v257 = vld [vmem:[%s1 + $0x128] sm:$0xf]
  %v258 = vld [vmem:[%s1 + $0x12c] sm:$0xf]
  %v259 = vld [vmem:[%s1 + $0x130] sm:$0xf]
  %v260 = vld [vmem:[%s1 + $0x134] sm:$0xf]
  %v261 = vld [vmem:[%s1 + $0x138] sm:$0xf]
  %v262 = vld [vmem:[%s1 + $0x13c] sm:$0xf]
  %v263 = vld [vmem:[%s1 + $0x140] sm:$0xf]
  %v264 = vld [vmem:[%s1 + $0x144] sm:$0xf]
  %v265 = vld [vmem:[%s1 + $0x148] sm:$0xf]
  %v266 = vld [vmem:[%s1 + $0x14c] sm:$0xf]
  %v267 = vld [vmem:[%s1 + $0x150] sm:$0xf]
  %v268 = vld [vmem:[%s1 + $0x154] sm:$0xf]
  %v269 = vld [vmem:[%s1 + $0x158] sm:$0xf]
  %v270 = vld [vmem:[%s1 + $0x15c] sm:$0xf]
  %v271 = vld [vmem:[%s1 + $0x160] sm:$0xf]
  %v272 = vld [vmem:[%s1 + $0x164] sm:$0xf]
  %v273 = vld [vmem:[%s1 + $0x168] sm:$0xf]
  %v274 = vld [vmem:[%s1 + $0x16c] sm:$0xf]
  %v275 = vld [vmem:[%s1 + $0x170] sm:$0xf]
  %v276 = vld [vmem:[%s1 + $0x174] sm:$0xf]
  %v277 = vld [vmem:[%s1 + $0x178] sm:$0xf]
  %v278 = vld [vmem:[%s1 + $0x17c] sm:$0xf]
  %v279 = vld [vmem:[%s1 + $0x180] sm:$0xf]
  %v280 = vld [vmem:[%s1 + $0x184] sm:$0xf]
  %v281 = vld [vmem:[%s1 + $0x188] sm:$0xf]
  %v282 = vld [vmem:[%s1 + $0x18c] sm:$0xf]
  %v283 = vld [vmem:[%s1 + $0x190] sm:$0xf]
  %v284 = vld [vmem:[%s1 + $0x194] sm:$0xf]
  %v285 = vld [vmem:[%s1 + $0x198] sm:$0xf]
  %v286 = vld [vmem:[%s1 + $0x19c] sm:$0xf]
  %v287 = vld [vmem:[%s1 + $0x1a0] sm:$0xf]
  %v288 = vld [vmem:[%s1 + $0x1a4] sm:$0xf]
  %v289 = vld [vmem:[%s1 + $0x1a8] sm:$0xf]
  %v290 = vld [vmem:[%s1 + $0x1ac] sm:$0xf]
  %v291 = vld [vmem:[%s1 + $0x1b0] sm:$0xf]
  %v292 = vld [vmem:[%s1 + $0x1b4] sm:$0xf]
  %v293 = vld [vmem:[%s1 + $0x1b8] sm:$0xf]
  %v294 = vld [vmem:[%s1 + $0x1bc] sm:$0xf]
  %v295 = vld [vmem:[%s1 + $0x1c0] sm:$0xf]
  %v296 = vld [vmem:[%s1 + $0x1c4] sm:$0xf]
  %v297 = vld [vmem:[%s1 + $0x1c8] sm:$0xf]
  %v298 = vld [vmem:[%s1 + $0x1cc] sm:$0xf]
  %v299 = vld [vmem:[%s1 + $0x1d0] sm:$0xf]
  %v300 = vld [vmem:[%s1 + $0x1d4] sm:$0xf]
  %v301 = vld [vmem:[%s1 + $0x1d8] sm:$0xf]
  %v302 = vld [vmem:[%s1 + $0x1dc] sm:$0xf]
  %v303 = vld [vmem:[%s1 + $0x1e0] sm:$0xf]
  %v304 = vld [vmem:[%s1 + $0x1e4] sm:$0xf]
  %v305 = vld [vmem:[%s1 + $0x1e8] sm:$0xf]
  %v306 = vld [vmem:[%s1 + $0x1ec] sm:$0xf]
  %v307 = vld [vmem:[%s1 + $0x1f0] sm:$0xf]
  %v308 = vld [vmem:[%s1 + $0x1f4] sm:$0xf]
  %v309 = vld [vmem:[%s1 + $0x1f8] sm:$0xf]
  %v310 = vld [vmem:[%s1 + $0x1fc] sm:$0xf]
  %v311 = vld [vmem:[%s1 + $0x200] sm:$0xf]
  %v312 = vld [vmem:[%s1 + $0x204] sm:$0xf]
  %v313 = vld [vmem:[%s1 + $0x208] sm:$0xf]
  %v314 = vld [vmem:[%s1 + $0x20c] sm:$0xf]
  %v315 = vld [vmem:[%s1 + $0x210] sm:$0xf]
  %v316 = vld [vmem:[%s1 + $0x214] sm:$0xf]
  %v317 = vld [vmem:[%s1 + $0x218] sm:$0xf]
  %v318 = vld [vmem:[%s1 + $0x21c] sm:$0xf]
  %v319 = vld [vmem:[%s1 + $0x220] sm:$0xf]
  %v320 = vld [vmem:[%s1 + $0x224] sm:$0xf]
  %v321 = vld [vmem:[%s1 + $0x228] sm:$0xf]
  %v322 = vld [vmem:[%s1 + $0x22c] sm:$0xf]
  %v323 = vld [vmem:[%s1 + $0x230] sm:$0xf]
  %v324 = vld [vmem:[%s1 + $0x234] sm:$0xf]
  %v325 = vld [vmem:[%s1 + $0x238] sm:$0xf]
  %v326 = vld [vmem:[%s1 + $0x23c] sm:$0xf]
  %v327 = vld [vmem:[%s1 + $0x240] sm:$0xf]
  %v328 = vld [vmem:[%s1 + $0x244] sm:$0xf]
  %v329 = vld [vmem:[%s1 + $0x248] sm:$0xf]
  %v330 = vld [vmem:[%s1 + $0x24c] sm:$0xf]
  %v331 = vld [vmem:[%s1 + $0x250] sm:$0xf]
  %v332 = vld [vmem:[%s1 + $0x254] sm:$0xf]
  %v333 = vld [vmem:[%s1 + $0x258] sm:$0xf]
  %v334 = vld [vmem:[%s1 + $0x25c] sm:$0xf]
  %v335 = vld [vmem:[%s1 + $0x260] sm:$0xf]
  %v336 = vld [vmem:[%s1 + $0x264] sm:$0xf]
  %v337 = vld [vmem:[%s1 + $0x268] sm:$0xf]
  %v338 = vld [vmem:[%s1 + $0x26c] sm:$0xf]
  %v339 = vld [vmem:[%s1 + $0x270] sm:$0xf]
  %v340 = vld [vmem:[%s1 + $0x274] sm:$0xf]
  %v341 = vld [vmem:[%s1 + $0x278] sm:$0xf]
  %v342 = vld [vmem:[%s1 + $0x27c] sm:$0xf]
  %v343 = vld [vmem:[%s1 + $0x280] sm:$0xf]
  %v344 = vld [vmem:[%s1 + $0x284] sm:$0xf]
  %v345 = vld [vmem:[%s1 + $0x288] sm:$0xf]
  %v346 = vld [vmem:[%s1 + $0x28c] sm:$0xf]
  %v347 = vld [vmem:[%s1 + $0x290] sm:$0xf]
  %v348 = vld [vmem:[%s1 + $0x294] sm:$0xf]
  %v349 = vld [vmem:[%s1 + $0x298] sm:$0xf]
  %v350 = vld [vmem:[%s1 + $0x29c] sm:$0xf]
  %v351 = vld [vmem:[%s1 + $0x2a0] sm:$0xf]
  %v352 = vld [vmem:[%s1 + $0x2a4] sm:$0xf]
  %v353 = vld [vmem:[%s1 + $0x2a8] sm:$0xf]
  %v354 = vld [vmem:[%s1 + $0x2ac] sm:$0xf]
  %v355 = vld [vmem:[%s1 + $0x2b0] sm:$0xf]
  %v356 = vld [vmem:[%s1 + $0x2b4] sm:$0xf]
  %v357 = vld [vmem:[%s1 + $0x2b8] sm:$0xf]
  %v358 = vld [vmem:[%s1 + $0x2bc] sm:$0xf]
  %v359 = vld [vmem:[%s1 + $0x2c0] sm:$0xf]
  %v360 = vld [vmem:[%s1 + $0x2c4] sm:$0xf]
  %v361 = vld [vmem:[%s1 + $0x2c8] sm:$0xf]
  %v362 = vld [vmem:[%s1 + $0x2cc] sm:$0xf]
  %v363 = vld [vmem:[%s1 + $0x2d0] sm:$0xf]
  %v364 = vld [vmem:[%s1 + $0x2d4] sm:$0xf]
  %v365 = vld [vmem:[%s1 + $0x2d8] sm:$0xf]
  %v366 = vld [vmem:[%s1 + $0x2dc] sm:$0xf]
  %v367 = vld [vmem:[%s1 + $0x2e0] sm:$0xf]
  %v368 = vld [vmem:[%s1 + $0x2e4] sm:$0xf]
  %v369 = vld [vmem:[%s1 + $0x2e8] sm:$0xf]
  %v370 = vld [vmem:[%s1 + $0x2ec] sm:$0xf]
  %v371 = vld [vmem:[%s1 + $0x2f0] sm:$0xf]
  %v372 = vld [vmem:[%s1 + $0x2f4] sm:$0xf]
  %v373 = vld [vmem:[%s1 + $0x2f8] sm:$0xf]
  %v374 = vld [vmem:[%s1 + $0x2fc] sm:$0xf]
  %v375 = vld [vmem:[%s1 + $0x300] sm:$0xf]
  %v376 = vld [vmem:[%s1 + $0x304] sm:$0xf]
  %v377 = vld [vmem:[%s1 + $0x308] sm:$0xf]
  %v378 = vld [vmem:[%s1 + $0x30c] sm:$0xf]
  %v379 = vld [vmem:[%s1 + $0x310] sm:$0xf]
  %v380 = vld [vmem:[%s1 + $0x314] sm:$0xf]
  %v381 = vld [vmem:[%s1 + $0x318] sm:$0xf]
  %v382 = vld [vmem:[%s1 + $0x31c] sm:$0xf]
  %v383 = vld [vmem:[%s1 + $0x320] sm:$0xf]
  %v384 = vld [vmem:[%s1 + $0x324] sm:$0xf]
  %v385 = vld [vmem:[%s1 + $0x328] sm:$0xf]
  %v386 = vld [vmem:[%s1 + $0x32c] sm:$0xf]
  %v387 = vld [vmem:[%s1 + $0x330] sm:$0xf]
  %v388 = vld [vmem:[%s1 + $0x334] sm:$0xf]
  %v389 = vld [vmem:[%s1 + $0x338] sm:$0xf]
  %v390 = vld [vmem:[%s1 + $0x33c] sm:$0xf]
  %v391 = vld [vmem:[%s1 + $0x340] sm:$0xf]
  %v392 = vld [vmem:[%s1 + $0x344] sm:$0xf]
  %v393 = vld [vmem:[%s1 + $0x348] sm:$0xf]
  %v394 = vld [vmem:[%s1 + $0x34c] sm:$0xf]
  %v395 = vld [vmem:[%s1 + $0x350] sm:$0xf]
  %v396 = vld [vmem:[%s1 + $0x354] sm:$0xf]
  %v397 = vld [vmem:[%s1 + $0x358] sm:$0xf]
  %v398 = vld [vmem:[%s1 + $0x35c] sm:$0xf]
  %v399 = vld [vmem:[%s1 + $0x360] sm:$0xf]
  %v400 = vld [vmem:[%s1 + $0x364] sm:$0xf]
  %v401 = vld [vmem:[%s1 + $0x368] sm:$0xf]
  %v402 = vld [vmem:[%s1 + $0x36c] sm:$0xf]
  %v403 = vld [vmem:[%s1 + $0x370] sm:$0xf]
  %v404 = vld [vmem:[%s1 + $0x374] sm:$0xf]
  %v405 = vld [vmem:[%s1 + $0x378] sm:$0xf]
  %v406 = vld [vmem:[%s1 + $0x37c] sm:$0xf]
  %v407 = vld [vmem:[%s1 + $0x380] sm:$0xf]
  %v408 = vld [vmem:[%s1 + $0x384] sm:$0xf]
  %v409 = vld [vmem:[%s1 + $0x388] sm:$0xf]
  %v410 = vld [vmem:[%s1 + $0x38c] sm:$0xf]
  %v411 = vld [vmem:[%s1 + $0x390] sm:$0xf]
  %v412 = vld [vmem:[%s1 + $0x394] sm:$0xf]
  %v413 = vld [vmem:[%s1 + $0x398] sm:$0xf]
  %v414 = vld [vmem:[%s1 + $0x39c] sm:$0xf]
  %v415 = vld [vmem:[%s1 + $0x3a0] sm:$0xf]
  %v416 = vld [vmem:[%s1 + $0x3a4] sm:$0xf]
  %v417 = vld [vmem:[%s1 + $0x3a8] sm:$0xf]
  %v418 = vld [vmem:[%s1 + $0x3ac] sm:$0xf]
  %v419 = vld [vmem:[%s1 + $0x3b0] sm:$0xf]
  %v420 = vld [vmem:[%s1 + $0x3b4] sm:$0xf]
  %v421 = vld [vmem:[%s1 + $0x3b8] sm:$0xf]
  %v422 = vld [vmem:[%s1 + $0x3bc] sm:$0xf]
  %v423 = vld [vmem:[%s1 + $0x3c0] sm:$0xf]
  %v424 = vld [vmem:[%s1 + $0x3c4] sm:$0xf]
  %v425 = vld [vmem:[%s1 + $0x3c8] sm:$0xf]
  %v426 = vld [vmem:[%s1 + $0x3cc] sm:$0xf]
  %v427 = vld [vmem:[%s1 + $0x3d0] sm:$0xf]
  %v428 = vld [vmem:[%s1 + $0x3d4] sm:$0xf]
  %v429 = vld [vmem:[%s1 + $0x3d8] sm:$0xf]
  %v430 = vld [vmem:[%s1 + $0x3dc] sm:$0xf]
  %v431 = vld [vmem:[%s1 + $0x3e0] sm:$0xf]
  %v432 = vld [vmem:[%s1 + $0x3e4] sm:$0xf]
  %v433 = vld [vmem:[%s1 + $0x3e8] sm:$0xf]
  %v434 = vld [vmem:[%s1 + $0x3ec] sm:$0xf]
  %v435 = vld [vmem:[%s1 + $0x3f0] sm:$0xf]
  %v436 = vld [vmem:[%s1 + $0x3f4] sm:$0xf]
  %v437 = vld [vmem:[%s1 + $0x3f8] sm:$0xf]
  %v438 = vld [vmem:[%s1 + $0x3fc] sm:$0xf]
  %v439 = vld [vmem:[%s2] sm:$0x1]
  %v441 = vlaneseq
  %v442 = vshrl.u32 %v441, 7
  %v443 = vsub.s32 0, %v442
  %v444 = vrot.slane %v439, %v443
  %v614 = vunpack.c.l.b16 %v15
  %v615 = vunpack.c.h.b16 %v15
  %v616 = vunpack.c.l.b16 %v16
  %v617 = vunpack.c.h.b16 %v16
  %v618 = vunpack.c.l.b16 %v17
  %v619 = vunpack.c.h.b16 %v17
  %v620 = vunpack.c.l.b16 %v18
  %v621 = vunpack.c.h.b16 %v18
  %v622 = vunpack.c.l.b16 %v19
  %v623 = vunpack.c.h.b16 %v19
  %v624 = vunpack.c.l.b16 %v20
  %v625 = vunpack.c.h.b16 %v20
  %v626 = vunpack.c.l.b16 %v21
  %v627 = vunpack.c.h.b16 %v21
  %v628 = vunpack.c.l.b16 %v22
  %v629 = vunpack.c.h.b16 %v22
  %v630 = vunpack.c.l.b16 %v23
  %v631 = vunpack.c.h.b16 %v23
  %v632 = vunpack.c.l.b16 %v24
  %v633 = vunpack.c.h.b16 %v24
  %v634 = vunpack.c.l.b16 %v25
  %v635 = vunpack.c.h.b16 %v25
  %v636 = vunpack.c.l.b16 %v26
  %v637 = vunpack.c.h.b16 %v26
  %v638 = vunpack.c.l.b16 %v27
  %v639 = vunpack.c.h.b16 %v27
  %v640 = vunpack.c.l.b16 %v28
  %v641 = vunpack.c.h.b16 %v28
  %v642 = vunpack.c.l.b16 %v29
  %v643 = vunpack.c.h.b16 %v29
  %v644 = vunpack.c.l.b16 %v30
  %v645 = vunpack.c.h.b16 %v30
  %v646 = vunpack.c.l.b16 %v31
  %v647 = vunpack.c.h.b16 %v31
  %v648 = vunpack.c.l.b16 %v32
  %v649 = vunpack.c.h.b16 %v32
  %v650 = vunpack.c.l.b16 %v33
  %v651 = vunpack.c.h.b16 %v33
  %v652 = vunpack.c.l.b16 %v34
  %v653 = vunpack.c.h.b16 %v34
  %v654 = vunpack.c.l.b16 %v35
  %v655 = vunpack.c.h.b16 %v35
  %v656 = vunpack.c.l.b16 %v36
  %v657 = vunpack.c.h.b16 %v36
  %v658 = vunpack.c.l.b16 %v37
  %v659 = vunpack.c.h.b16 %v37
  %v660 = vunpack.c.l.b16 %v38
  %v661 = vunpack.c.h.b16 %v38
  %v662 = vunpack.c.l.b16 %v39
  %v663 = vunpack.c.h.b16 %v39
  %v664 = vunpack.c.l.b16 %v40
  %v665 = vunpack.c.h.b16 %v40
  %v666 = vunpack.c.l.b16 %v41
  %v667 = vunpack.c.h.b16 %v41
  %v668 = vunpack.c.l.b16 %v42
  %v669 = vunpack.c.h.b16 %v42
  %v670 = vunpack.c.l.b16 %v43
  %v671 = vunpack.c.h.b16 %v43
  %v672 = vunpack.c.l.b16 %v44
  %v673 = vunpack.c.h.b16 %v44
  %v674 = vunpack.c.l.b16 %v45
  %v675 = vunpack.c.h.b16 %v45
  %v676 = vunpack.c.l.b16 %v46
  %v677 = vunpack.c.h.b16 %v46
  %v678 = vunpack.c.l.b16 %v47
  %v679 = vunpack.c.h.b16 %v47
  %v680 = vunpack.c.l.b16 %v48
  %v681 = vunpack.c.h.b16 %v48
  %v682 = vunpack.c.l.b16 %v49
  %v683 = vunpack.c.h.b16 %v49
  %v684 = vunpack.c.l.b16 %v50
  %v685 = vunpack.c.h.b16 %v50
  %v686 = vunpack.c.l.b16 %v51
  %v687 = vunpack.c.h.b16 %v51
  %v688 = vunpack.c.l.b16 %v52
  %v689 = vunpack.c.h.b16 %v52
  %v690 = vunpack.c.l.b16 %v53
  %v691 = vunpack.c.h.b16 %v53
  %v692 = vunpack.c.l.b16 %v54
  %v693 = vunpack.c.h.b16 %v54
  %v694 = vunpack.c.l.b16 %v55
  %v695 = vunpack.c.h.b16 %v55
  %v696 = vunpack.c.l.b16 %v56
  %v697 = vunpack.c.h.b16 %v56
  %v698 = vunpack.c.l.b16 %v57
  %v699 = vunpack.c.h.b16 %v57
  %v700 = vunpack.c.l.b16 %v58
  %v701 = vunpack.c.h.b16 %v58
  %v702 = vunpack.c.l.b16 %v59
  %v703 = vunpack.c.h.b16 %v59
  %v704 = vunpack.c.l.b16 %v60
  %v705 = vunpack.c.h.b16 %v60
  %v706 = vunpack.c.l.b16 %v61
  %v707 = vunpack.c.h.b16 %v61
  %v708 = vunpack.c.l.b16 %v62
  %v709 = vunpack.c.h.b16 %v62
  %v710 = vunpack.c.l.b16 %v63
  %v711 = vunpack.c.h.b16 %v63
  %v712 = vunpack.c.l.b16 %v64
  %v713 = vunpack.c.h.b16 %v64
  %v714 = vunpack.c.l.b16 %v65
  %v715 = vunpack.c.h.b16 %v65
  %v716 = vunpack.c.l.b16 %v66
  %v717 = vunpack.c.h.b16 %v66
  %v718 = vunpack.c.l.b16 %v67
  %v719 = vunpack.c.h.b16 %v67
  %v720 = vunpack.c.l.b16 %v68
  %v721 = vunpack.c.h.b16 %v68
  %v722 = vunpack.c.l.b16 %v69
  %v723 = vunpack.c.h.b16 %v69
  %v724 = vunpack.c.l.b16 %v70
  %v725 = vunpack.c.h.b16 %v70
  %v726 = vunpack.c.l.b16 %v71
  %v727 = vunpack.c.h.b16 %v71
  %v728 = vunpack.c.l.b16 %v72
  %v729 = vunpack.c.h.b16 %v72
  %v730 = vunpack.c.l.b16 %v73
  %v731 = vunpack.c.h.b16 %v73
  %v732 = vunpack.c.l.b16 %v74
  %v733 = vunpack.c.h.b16 %v74
  %v734 = vunpack.c.l.b16 %v75
  %v735 = vunpack.c.h.b16 %v75
  %v736 = vunpack.c.l.b16 %v76
  %v737 = vunpack.c.h.b16 %v76
  %v738 = vunpack.c.l.b16 %v77
  %v739 = vunpack.c.h.b16 %v77
  %v740 = vunpack.c.l.b16 %v78
  %v741 = vunpack.c.h.b16 %v78
  %v742 = vunpack.c.l.b16 %v79
  %v743 = vunpack.c.h.b16 %v79
  %v744 = vunpack.c.l.b16 %v80
  %v745 = vunpack.c.h.b16 %v80
  %v746 = vunpack.c.l.b16 %v81
  %v747 = vunpack.c.h.b16 %v81
  %v748 = vunpack.c.l.b16 %v82
  %v749 = vunpack.c.h.b16 %v82
  %v750 = vunpack.c.l.b16 %v83
  %v751 = vunpack.c.h.b16 %v83
  %v752 = vunpack.c.l.b16 %v84
  %v753 = vunpack.c.h.b16 %v84
  %v754 = vunpack.c.l.b16 %v85
  %v755 = vunpack.c.h.b16 %v85
  %v756 = vunpack.c.l.b16 %v86
  %v757 = vunpack.c.h.b16 %v86
  %v758 = vunpack.c.l.b16 %v87
  %v759 = vunpack.c.h.b16 %v87
  %v760 = vunpack.c.l.b16 %v88
  %v761 = vunpack.c.h.b16 %v88
  %v762 = vunpack.c.l.b16 %v89
  %v763 = vunpack.c.h.b16 %v89
  %v764 = vunpack.c.l.b16 %v90
  %v765 = vunpack.c.h.b16 %v90
  %v766 = vunpack.c.l.b16 %v91
  %v767 = vunpack.c.h.b16 %v91
  %v768 = vunpack.c.l.b16 %v92
  %v769 = vunpack.c.h.b16 %v92
  %v770 = vunpack.c.l.b16 %v93
  %v771 = vunpack.c.h.b16 %v93
  %v772 = vunpack.c.l.b16 %v94
  %v773 = vunpack.c.h.b16 %v94
  %v774 = vunpack.c.l.b16 %v95
  %v775 = vunpack.c.h.b16 %v95
  %v776 = vunpack.c.l.b16 %v96
  %v777 = vunpack.c.h.b16 %v96
  %v778 = vunpack.c.l.b16 %v97
  %v779 = vunpack.c.h.b16 %v97
  %v780 = vunpack.c.l.b16 %v98
  %v781 = vunpack.c.h.b16 %v98
  %v782 = vunpack.c.l.b16 %v99
  %v783 = vunpack.c.h.b16 %v99
  %v784 = vunpack.c.l.b16 %v100
  %v785 = vunpack.c.h.b16 %v100
  %v786 = vunpack.c.l.b16 %v101
  %v787 = vunpack.c.h.b16 %v101
  %v788 = vunpack.c.l.b16 %v102
  %v789 = vunpack.c.h.b16 %v102
  %v790 = vunpack.c.l.b16 %v103
  %v791 = vunpack.c.h.b16 %v103
  %v792 = vunpack.c.l.b16 %v104
  %v793 = vunpack.c.h.b16 %v104
  %v794 = vunpack.c.l.b16 %v105
  %v795 = vunpack.c.h.b16 %v105
  %v796 = vunpack.c.l.b16 %v106
  %v797 = vunpack.c.h.b16 %v106
  %v798 = vunpack.c.l.b16 %v107
  %v799 = vunpack.c.h.b16 %v107
  %v800 = vunpack.c.l.b16 %v108
  %v801 = vunpack.c.h.b16 %v108
  %v802 = vunpack.c.l.b16 %v109
  %v803 = vunpack.c.h.b16 %v109
  %v804 = vunpack.c.l.b16 %v110
  %v805 = vunpack.c.h.b16 %v110
  %v806 = vunpack.c.l.b16 %v111
  %v807 = vunpack.c.h.b16 %v111
  %v808 = vunpack.c.l.b16 %v112
  %v809 = vunpack.c.h.b16 %v112
  %v810 = vunpack.c.l.b16 %v113
  %v811 = vunpack.c.h.b16 %v113
  %v812 = vunpack.c.l.b16 %v114
  %v813 = vunpack.c.h.b16 %v114
  %v814 = vunpack.c.l.b16 %v115
  %v815 = vunpack.c.h.b16 %v115
  %v816 = vunpack.c.l.b16 %v116
  %v817 = vunpack.c.h.b16 %v116
  %v818 = vunpack.c.l.b16 %v117
  %v819 = vunpack.c.h.b16 %v117
  %v820 = vunpack.c.l.b16 %v118
  %v821 = vunpack.c.h.b16 %v118
  %v822 = vunpack.c.l.b16 %v119
  %v823 = vunpack.c.h.b16 %v119
  %v824 = vunpack.c.l.b16 %v120
  %v825 = vunpack.c.h.b16 %v120
  %v826 = vunpack.c.l.b16 %v121
  %v827 = vunpack.c.h.b16 %v121
  %v828 = vunpack.c.l.b16 %v122
  %v829 = vunpack.c.h.b16 %v122
  %v830 = vunpack.c.l.b16 %v123
  %v831 = vunpack.c.h.b16 %v123
  %v832 = vunpack.c.l.b16 %v124
  %v833 = vunpack.c.h.b16 %v124
  %v834 = vunpack.c.l.b16 %v125
  %v835 = vunpack.c.h.b16 %v125
  %v836 = vunpack.c.l.b16 %v126
  %v837 = vunpack.c.h.b16 %v126
  %v838 = vunpack.c.l.b16 %v127
  %v839 = vunpack.c.h.b16 %v127
  %v840 = vunpack.c.l.b16 %v128
  %v841 = vunpack.c.h.b16 %v128
  %v842 = vunpack.c.l.b16 %v129
  %v843 = vunpack.c.h.b16 %v129
  %v844 = vunpack.c.l.b16 %v130
  %v845 = vunpack.c.h.b16 %v130
  %v846 = vunpack.c.l.b16 %v131
  %v847 = vunpack.c.h.b16 %v131
  %v848 = vunpack.c.l.b16 %v132
  %v849 = vunpack.c.h.b16 %v132
  %v850 = vunpack.c.l.b16 %v133
  %v851 = vunpack.c.h.b16 %v133
  %v852 = vunpack.c.l.b16 %v134
  %v853 = vunpack.c.h.b16 %v134
  %v854 = vunpack.c.l.b16 %v135
  %v855 = vunpack.c.h.b16 %v135
  %v856 = vunpack.c.l.b16 %v136
  %v857 = vunpack.c.h.b16 %v136
  %v858 = vunpack.c.l.b16 %v137
  %v859 = vunpack.c.h.b16 %v137
  %v860 = vunpack.c.l.b16 %v138
  %v861 = vunpack.c.h.b16 %v138
  %v862 = vunpack.c.l.b16 %v139
  %v863 = vunpack.c.h.b16 %v139
  %v864 = vunpack.c.l.b16 %v140
  %v865 = vunpack.c.h.b16 %v140
  %v866 = vunpack.c.l.b16 %v141
  %v867 = vunpack.c.h.b16 %v141
  %v868 = vunpack.c.l.b16 %v142
  %v869 = vunpack.c.h.b16 %v142
  %v870 = vunpack.c.l.b16 %v143
  %v871 = vunpack.c.h.b16 %v143
  %v872 = vunpack.c.l.b16 %v144
  %v873 = vunpack.c.h.b16 %v144
  %v874 = vunpack.c.l.b16 %v145
  %v875 = vunpack.c.h.b16 %v145
  %v876 = vunpack.c.l.b16 %v146
  %v877 = vunpack.c.h.b16 %v146
  %v878 = vunpack.c.l.b16 %v147
  %v879 = vunpack.c.h.b16 %v147
  %v880 = vunpack.c.l.b16 %v148
  %v881 = vunpack.c.h.b16 %v148
  %v882 = vunpack.c.l.b16 %v149
  %v883 = vunpack.c.h.b16 %v149
  %v884 = vunpack.c.l.b16 %v150
  %v885 = vunpack.c.h.b16 %v150
  %v886 = vunpack.c.l.b16 %v151
  %v887 = vunpack.c.h.b16 %v151
  %v888 = vunpack.c.l.b16 %v152
  %v889 = vunpack.c.h.b16 %v152
  %v890 = vunpack.c.l.b16 %v153
  %v891 = vunpack.c.h.b16 %v153
  %v892 = vunpack.c.l.b16 %v154
  %v893 = vunpack.c.h.b16 %v154
  %v894 = vunpack.c.l.b16 %v155
  %v895 = vunpack.c.h.b16 %v155
  %v896 = vunpack.c.l.b16 %v156
  %v897 = vunpack.c.h.b16 %v156
  %v898 = vunpack.c.l.b16 %v157
  %v899 = vunpack.c.h.b16 %v157
  %v900 = vunpack.c.l.b16 %v158
  %v901 = vunpack.c.h.b16 %v158
  %v902 = vunpack.c.l.b16 %v159
  %v903 = vunpack.c.h.b16 %v159
  %v904 = vunpack.c.l.b16 %v160
  %v905 = vunpack.c.h.b16 %v160
  %v906 = vunpack.c.l.b16 %v161
  %v907 = vunpack.c.h.b16 %v161
  %v908 = vunpack.c.l.b16 %v162
  %v909 = vunpack.c.h.b16 %v162
  %v910 = vunpack.c.l.b16 %v163
  %v911 = vunpack.c.h.b16 %v163
  %v912 = vunpack.c.l.b16 %v164
  %v913 = vunpack.c.h.b16 %v164
  %v914 = vunpack.c.l.b16 %v165
  %v915 = vunpack.c.h.b16 %v165
  %v916 = vunpack.c.l.b16 %v166
  %v917 = vunpack.c.h.b16 %v166
  %v918 = vunpack.c.l.b16 %v167
  %v919 = vunpack.c.h.b16 %v167
  %v920 = vunpack.c.l.b16 %v168
  %v921 = vunpack.c.h.b16 %v168
  %v922 = vunpack.c.l.b16 %v169
  %v923 = vunpack.c.h.b16 %v169
  %v924 = vunpack.c.l.b16 %v170
  %v925 = vunpack.c.h.b16 %v170
  %v926 = vunpack.c.l.b16 %v171
  %v927 = vunpack.c.h.b16 %v171
  %v928 = vunpack.c.l.b16 %v172
  %v929 = vunpack.c.h.b16 %v172
  %v930 = vunpack.c.l.b16 %v173
  %v931 = vunpack.c.h.b16 %v173
  %v932 = vunpack.c.l.b16 %v174
  %v933 = vunpack.c.h.b16 %v174
  %v934 = vunpack.c.l.b16 %v175
  %v935 = vunpack.c.h.b16 %v175
  %v936 = vunpack.c.l.b16 %v176
  %v937 = vunpack.c.h.b16 %v176
  %v938 = vunpack.c.l.b16 %v177
  %v939 = vunpack.c.h.b16 %v177
  %v940 = vunpack.c.l.b16 %v178
  %v941 = vunpack.c.h.b16 %v178
  %v942 = vunpack.c.l.b16 %v179
  %v943 = vunpack.c.h.b16 %v179
  %v944 = vunpack.c.l.b16 %v180
  %v945 = vunpack.c.h.b16 %v180
  %v946 = vunpack.c.l.b16 %v181
  %v947 = vunpack.c.h.b16 %v181
  %v948 = vunpack.c.l.b16 %v182
  %v949 = vunpack.c.h.b16 %v182
  %v950 = vpack.c.b16 %v630, %v614
  %v951 = vpack.c.b16 %v631, %v615
  %v952 = vpack.c.b16 %v632, %v616
  %v953 = vpack.c.b16 %v633, %v617
  %v954 = vpack.c.b16 %v634, %v618
  %v955 = vpack.c.b16 %v635, %v619
  %v956 = vpack.c.b16 %v636, %v620
  %v957 = vpack.c.b16 %v637, %v621
  %v958 = vpack.c.b16 %v638, %v622
  %v959 = vpack.c.b16 %v639, %v623
  %v960 = vpack.c.b16 %v640, %v624
  %v961 = vpack.c.b16 %v641, %v625
  %v962 = vpack.c.b16 %v642, %v626
  %v963 = vpack.c.b16 %v643, %v627
  %v964 = vpack.c.b16 %v644, %v628
  %v965 = vpack.c.b16 %v645, %v629
  %v966 = vpack.c.b16 %v662, %v646
  %v967 = vpack.c.b16 %v663, %v647
  %v968 = vpack.c.b16 %v664, %v648
  %v969 = vpack.c.b16 %v665, %v649
  %v970 = vpack.c.b16 %v666, %v650
  %v971 = vpack.c.b16 %v667, %v651
  %v972 = vpack.c.b16 %v668, %v652
  %v973 = vpack.c.b16 %v669, %v653
  %v974 = vpack.c.b16 %v670, %v654
  %v975 = vpack.c.b16 %v671, %v655
  %v976 = vpack.c.b16 %v672, %v656
  %v977 = vpack.c.b16 %v673, %v657
  %v978 = vpack.c.b16 %v674, %v658
  %v979 = vpack.c.b16 %v675, %v659
  %v980 = vpack.c.b16 %v676, %v660
  %v981 = vpack.c.b16 %v677, %v661
  %v982 = vpack.c.b16 %v694, %v678
  %v983 = vpack.c.b16 %v695, %v679
  %v984 = vpack.c.b16 %v696, %v680
  %v985 = vpack.c.b16 %v697, %v681
  %v986 = vpack.c.b16 %v698, %v682
  %v987 = vpack.c.b16 %v699, %v683
  %v988 = vpack.c.b16 %v700, %v684
  %v989 = vpack.c.b16 %v701, %v685
  %v990 = vpack.c.b16 %v702, %v686
  %v991 = vpack.c.b16 %v703, %v687
  %v992 = vpack.c.b16 %v704, %v688
  %v993 = vpack.c.b16 %v705, %v689
  %v994 = vpack.c.b16 %v706, %v690
  %v995 = vpack.c.b16 %v707, %v691
  %v996 = vpack.c.b16 %v708, %v692
  %v997 = vpack.c.b16 %v709, %v693
  %v998 = vpack.c.b16 %v726, %v710
  %v999 = vpack.c.b16 %v727, %v711
  %v1000 = vpack.c.b16 %v728, %v712
  %v1001 = vpack.c.b16 %v729, %v713
  %v1002 = vpack.c.b16 %v730, %v714
  %v1003 = vpack.c.b16 %v731, %v715
  %v1004 = vpack.c.b16 %v732, %v716
  %v1005 = vpack.c.b16 %v733, %v717
  %v1006 = vpack.c.b16 %v734, %v718
  %v1007 = vpack.c.b16 %v735, %v719
  %v1008 = vpack.c.b16 %v736, %v720
  %v1009 = vpack.c.b16 %v737, %v721
  %v1010 = vpack.c.b16 %v738, %v722
  %v1011 = vpack.c.b16 %v739, %v723
  %v1012 = vpack.c.b16 %v740, %v724
  %v1013 = vpack.c.b16 %v741, %v725
  %v1014 = vpack.c.b16 %v758, %v742
  %v1015 = vpack.c.b16 %v759, %v743
  %v1016 = vpack.c.b16 %v760, %v744
  %v1017 = vpack.c.b16 %v761, %v745
  %v1018 = vpack.c.b16 %v762, %v746
  %v1019 = vpack.c.b16 %v763, %v747
  %v1020 = vpack.c.b16 %v764, %v748
  %v1021 = vpack.c.b16 %v765, %v749
  %v1022 = vpack.c.b16 %v766, %v750
  %v1023 = vpack.c.b16 %v767, %v751
  %v1024 = vpack.c.b16 %v768, %v752
  %v1025 = vpack.c.b16 %v769, %v753
  %v1026 = vpack.c.b16 %v770, %v754
  %v1027 = vpack.c.b16 %v771, %v755
  %v1028 = vpack.c.b16 %v772, %v756
  %v1029 = vpack.c.b16 %v773, %v757
  %v1030 = vpack.c.b16 %v790, %v774
  %v1031 = vpack.c.b16 %v791, %v775
  %v1032 = vpack.c.b16 %v792, %v776
  %v1033 = vpack.c.b16 %v793, %v777
  %v1034 = vpack.c.b16 %v794, %v778
  %v1035 = vpack.c.b16 %v795, %v779
  %v1036 = vpack.c.b16 %v796, %v780
  %v1037 = vpack.c.b16 %v797, %v781
  %v1038 = vpack.c.b16 %v798, %v782
  %v1039 = vpack.c.b16 %v799, %v783
  %v1040 = vpack.c.b16 %v800, %v784
  %v1041 = vpack.c.b16 %v801, %v785
  %v1042 = vpack.c.b16 %v802, %v786
  %v1043 = vpack.c.b16 %v803, %v787
  %v1044 = vpack.c.b16 %v804, %v788
  %v1045 = vpack.c.b16 %v805, %v789
  %v1046 = vpack.c.b16 %v822, %v806
  %v1047 = vpack.c.b16 %v823, %v807
  %v1048 = vpack.c.b16 %v824, %v808
  %v1049 = vpack.c.b16 %v825, %v809
  %v1050 = vpack.c.b16 %v826, %v810
  %v1051 = vpack.c.b16 %v827, %v811
  %v1052 = vpack.c.b16 %v828, %v812
  %v1053 = vpack.c.b16 %v829, %v813
  %v1054 = vpack.c.b16 %v830, %v814
  %v1055 = vpack.c.b16 %v831, %v815
  %v1056 = vpack.c.b16 %v832, %v816
  %v1057 = vpack.c.b16 %v833, %v817
  %v1058 = vpack.c.b16 %v834, %v818
  %v1059 = vpack.c.b16 %v835, %v819
  %v1060 = vpack.c.b16 %v836, %v820
  %v1061 = vpack.c.b16 %v837, %v821
  %v1062 = vpack.c.b16 %v854, %v838
  %v1063 = vpack.c.b16 %v855, %v839
  %v1064 = vpack.c.b16 %v856, %v840
  %v1065 = vpack.c.b16 %v857, %v841
  %v1066 = vpack.c.b16 %v858, %v842
  %v1067 = vpack.c.b16 %v859, %v843
  %v1068 = vpack.c.b16 %v860, %v844
  %v1069 = vpack.c.b16 %v861, %v845
  %v1070 = vpack.c.b16 %v862, %v846
  %v1071 = vpack.c.b16 %v863, %v847
  %v1072 = vpack.c.b16 %v864, %v848
  %v1073 = vpack.c.b16 %v865, %v849
  %v1074 = vpack.c.b16 %v866, %v850
  %v1075 = vpack.c.b16 %v867, %v851
  %v1076 = vpack.c.b16 %v868, %v852
  %v1077 = vpack.c.b16 %v869, %v853
  %v1078 = vpack.c.b16 %v886, %v870
  %v1079 = vpack.c.b16 %v887, %v871
  %v1080 = vpack.c.b16 %v888, %v872
  %v1081 = vpack.c.b16 %v889, %v873
  %v1082 = vpack.c.b16 %v890, %v874
  %v1083 = vpack.c.b16 %v891, %v875
  %v1084 = vpack.c.b16 %v892, %v876
  %v1085 = vpack.c.b16 %v893, %v877
  %v1086 = vpack.c.b16 %v894, %v878
  %v1087 = vpack.c.b16 %v895, %v879
  %v1088 = vpack.c.b16 %v896, %v880
  %v1089 = vpack.c.b16 %v897, %v881
  %v1090 = vpack.c.b16 %v898, %v882
  %v1091 = vpack.c.b16 %v899, %v883
  %v1092 = vpack.c.b16 %v900, %v884
  %v1093 = vpack.c.b16 %v901, %v885
  %v1094 = vpack.c.b16 %v918, %v902
  %v1095 = vpack.c.b16 %v919, %v903
  %v1096 = vpack.c.b16 %v920, %v904
  %v1097 = vpack.c.b16 %v921, %v905
  %v1098 = vpack.c.b16 %v922, %v906
  %v1099 = vpack.c.b16 %v923, %v907
  %v1100 = vpack.c.b16 %v924, %v908
  %v1101 = vpack.c.b16 %v925, %v909
  %v1102 = vpack.c.b16 %v926, %v910
  %v1103 = vpack.c.b16 %v927, %v911
  %v1104 = vpack.c.b16 %v928, %v912
  %v1105 = vpack.c.b16 %v929, %v913
  %v1106 = vpack.c.b16 %v930, %v914
  %v1107 = vpack.c.b16 %v931, %v915
  %v1108 = vpack.c.b16 %v932, %v916
  %v1109 = vpack.c.b16 %v933, %v917
  %v1110 = vpack.c.b16 %v934, %v934
  %v1111 = vpack.c.b16 %v935, %v935
  %v1112 = vpack.c.b16 %v936, %v936
  %v1113 = vpack.c.b16 %v937, %v937
  %v1114 = vpack.c.b16 %v938, %v938
  %v1115 = vpack.c.b16 %v939, %v939
  %v1116 = vpack.c.b16 %v940, %v940
  %v1117 = vpack.c.b16 %v941, %v941
  %v1118 = vpack.c.b16 %v942, %v942
  %v1119 = vpack.c.b16 %v943, %v943
  %v1120 = vpack.c.b16 %v944, %v944
  %v1121 = vpack.c.b16 %v945, %v945
  %v1122 = vpack.c.b16 %v946, %v946
  %v1123 = vpack.c.b16 %v947, %v947
  %v1124 = vpack.c.b16 %v948, %v948
  %v1125 = vpack.c.b16 %v949, %v949
  %v1558 = vunpack.c.l.b16 %v183
  %v1559 = vunpack.c.l.b16 %v184
  %v1560 = vunpack.c.l.b16 %v185
  %v1561 = vunpack.c.l.b16 %v186
  %v1562 = vunpack.c.l.b16 %v187
  %v1563 = vunpack.c.l.b16 %v188
  %v1564 = vunpack.c.l.b16 %v189
  %v1565 = vunpack.c.l.b16 %v190
  %v1566 = vunpack.c.l.b16 %v191
  %v1567 = vunpack.c.l.b16 %v192
  %v1568 = vunpack.c.l.b16 %v193
  %v1569 = vunpack.c.l.b16 %v194
  %v1570 = vunpack.c.l.b16 %v195
  %v1571 = vunpack.c.l.b16 %v196
  %v1572 = vunpack.c.l.b16 %v197
  %v1573 = vunpack.c.l.b16 %v198
  %v1574 = vunpack.c.l.b16 %v199
  %v1575 = vunpack.c.l.b16 %v200
  %v1576 = vunpack.c.l.b16 %v201
  %v1577 = vunpack.c.l.b16 %v202
  %v1578 = vunpack.c.l.b16 %v203
  %v1579 = vunpack.c.l.b16 %v204
  %v1580 = vunpack.c.l.b16 %v205
  %v1581 = vunpack.c.l.b16 %v206
  %v1582 = vunpack.c.l.b16 %v207
  %v1583 = vunpack.c.l.b16 %v208
  %v1584 = vunpack.c.l.b16 %v209
  %v1585 = vunpack.c.l.b16 %v210
  %v1586 = vunpack.c.l.b16 %v211
  %v1587 = vunpack.c.l.b16 %v212
  %v1588 = vunpack.c.l.b16 %v213
  %v1589 = vunpack.c.l.b16 %v214
  %v1590 = vunpack.c.l.b16 %v215
  %v1591 = vunpack.c.l.b16 %v216
  %v1592 = vunpack.c.l.b16 %v217
  %v1593 = vunpack.c.l.b16 %v218
  %v1594 = vunpack.c.l.b16 %v219
  %v1595 = vunpack.c.l.b16 %v220
  %v1596 = vunpack.c.l.b16 %v221
  %v1597 = vunpack.c.l.b16 %v222
  %v1598 = vunpack.c.l.b16 %v223
  %v1599 = vunpack.c.l.b16 %v224
  %v1600 = vunpack.c.l.b16 %v225
  %v1601 = vunpack.c.l.b16 %v226
  %v1602 = vunpack.c.l.b16 %v227
  %v1603 = vunpack.c.l.b16 %v228
  %v1604 = vunpack.c.l.b16 %v229
  %v1605 = vunpack.c.l.b16 %v230
  %v1606 = vunpack.c.l.b16 %v231
  %v1607 = vunpack.c.l.b16 %v232
  %v1608 = vunpack.c.l.b16 %v233
  %v1609 = vunpack.c.l.b16 %v234
  %v1610 = vunpack.c.l.b16 %v235
  %v1611 = vunpack.c.l.b16 %v236
  %v1612 = vunpack.c.l.b16 %v237
  %v1613 = vunpack.c.l.b16 %v238
  %v1614 = vunpack.c.l.b16 %v239
  %v1615 = vunpack.c.l.b16 %v240
  %v1616 = vunpack.c.l.b16 %v241
  %v1617 = vunpack.c.l.b16 %v242
  %v1618 = vunpack.c.l.b16 %v243
  %v1619 = vunpack.c.l.b16 %v244
  %v1620 = vunpack.c.l.b16 %v245
  %v1621 = vunpack.c.l.b16 %v246
  %v1622 = vunpack.c.l.b16 %v247
  %v1623 = vunpack.c.l.b16 %v248
  %v1624 = vunpack.c.l.b16 %v249
  %v1625 = vunpack.c.l.b16 %v250
  %v1626 = vunpack.c.l.b16 %v251
  %v1627 = vunpack.c.l.b16 %v252
  %v1628 = vunpack.c.l.b16 %v253
  %v1629 = vunpack.c.l.b16 %v254
  %v1630 = vunpack.c.l.b16 %v255
  %v1631 = vunpack.c.l.b16 %v256
  %v1632 = vunpack.c.l.b16 %v257
  %v1633 = vunpack.c.l.b16 %v258
  %v1634 = vunpack.c.l.b16 %v259
  %v1635 = vunpack.c.l.b16 %v260
  %v1636 = vunpack.c.l.b16 %v261
  %v1637 = vunpack.c.l.b16 %v262
  %v1638 = vunpack.c.l.b16 %v263
  %v1639 = vunpack.c.l.b16 %v264
  %v1640 = vunpack.c.l.b16 %v265
  %v1641 = vunpack.c.l.b16 %v266
  %v1642 = vunpack.c.l.b16 %v267
  %v1643 = vunpack.c.l.b16 %v268
  %v1644 = vunpack.c.l.b16 %v269
  %v1645 = vunpack.c.l.b16 %v270
  %v1646 = vunpack.c.l.b16 %v271
  %v1647 = vunpack.c.l.b16 %v272
  %v1648 = vunpack.c.l.b16 %v273
  %v1649 = vunpack.c.l.b16 %v274
  %v1650 = vunpack.c.l.b16 %v275
  %v1651 = vunpack.c.l.b16 %v276
  %v1652 = vunpack.c.l.b16 %v277
  %v1653 = vunpack.c.l.b16 %v278
  %v1654 = vunpack.c.l.b16 %v279
  %v1655 = vunpack.c.l.b16 %v280
  %v1656 = vunpack.c.l.b16 %v281
  %v1657 = vunpack.c.l.b16 %v282
  %v1658 = vunpack.c.l.b16 %v283
  %v1659 = vunpack.c.l.b16 %v284
  %v1660 = vunpack.c.l.b16 %v285
  %v1661 = vunpack.c.l.b16 %v286
  %v1662 = vunpack.c.l.b16 %v287
  %v1663 = vunpack.c.l.b16 %v288
  %v1664 = vunpack.c.l.b16 %v289
  %v1665 = vunpack.c.l.b16 %v290
  %v1666 = vunpack.c.l.b16 %v291
  %v1667 = vunpack.c.l.b16 %v292
  %v1668 = vunpack.c.l.b16 %v293
  %v1669 = vunpack.c.l.b16 %v294
  %v1670 = vunpack.c.l.b16 %v295
  %v1671 = vunpack.c.l.b16 %v296
  %v1672 = vunpack.c.l.b16 %v297
  %v1673 = vunpack.c.l.b16 %v298
  %v1674 = vunpack.c.l.b16 %v299
  %v1675 = vunpack.c.l.b16 %v300
  %v1676 = vunpack.c.l.b16 %v301
  %v1677 = vunpack.c.l.b16 %v302
  %v1678 = vunpack.c.l.b16 %v303
  %v1679 = vunpack.c.l.b16 %v304
  %v1680 = vunpack.c.l.b16 %v305
  %v1681 = vunpack.c.l.b16 %v306
  %v1682 = vunpack.c.l.b16 %v307
  %v1683 = vunpack.c.l.b16 %v308
  %v1684 = vunpack.c.l.b16 %v309
  %v1685 = vunpack.c.l.b16 %v310
  %v1686 = vunpack.c.l.b16 %v311
  %v1687 = vunpack.c.l.b16 %v312
  %v1688 = vunpack.c.l.b16 %v313
  %v1689 = vunpack.c.l.b16 %v314
  %v1690 = vunpack.c.l.b16 %v315
  %v1691 = vunpack.c.l.b16 %v316
  %v1692 = vunpack.c.l.b16 %v317
  %v1693 = vunpack.c.l.b16 %v318
  %v1694 = vunpack.c.l.b16 %v319
  %v1695 = vunpack.c.l.b16 %v320
  %v1696 = vunpack.c.l.b16 %v321
  %v1697 = vunpack.c.l.b16 %v322
  %v1698 = vunpack.c.l.b16 %v323
  %v1699 = vunpack.c.l.b16 %v324
  %v1700 = vunpack.c.l.b16 %v325
  %v1701 = vunpack.c.l.b16 %v326
  %v1702 = vunpack.c.l.b16 %v327
  %v1703 = vunpack.c.l.b16 %v328
  %v1704 = vunpack.c.l.b16 %v329
  %v1705 = vunpack.c.l.b16 %v330
  %v1706 = vunpack.c.l.b16 %v331
  %v1707 = vunpack.c.l.b16 %v332
  %v1708 = vunpack.c.l.b16 %v333
  %v1709 = vunpack.c.l.b16 %v334
  %v1710 = vunpack.c.l.b16 %v335
  %v1711 = vunpack.c.l.b16 %v336
  %v1712 = vunpack.c.l.b16 %v337
  %v1713 = vunpack.c.l.b16 %v338
  %v1714 = vunpack.c.l.b16 %v339
  %v1715 = vunpack.c.l.b16 %v340
  %v1716 = vunpack.c.l.b16 %v341
  %v1717 = vunpack.c.l.b16 %v342
  %v1718 = vunpack.c.l.b16 %v343
  %v1719 = vunpack.c.l.b16 %v344
  %v1720 = vunpack.c.l.b16 %v345
  %v1721 = vunpack.c.l.b16 %v346
  %v1722 = vunpack.c.l.b16 %v347
  %v1723 = vunpack.c.l.b16 %v348
  %v1724 = vunpack.c.l.b16 %v349
  %v1725 = vunpack.c.l.b16 %v350
  %v1726 = vunpack.c.l.b16 %v351
  %v1727 = vunpack.c.l.b16 %v352
  %v1728 = vunpack.c.l.b16 %v353
  %v1729 = vunpack.c.l.b16 %v354
  %v1730 = vunpack.c.l.b16 %v355
  %v1731 = vunpack.c.l.b16 %v356
  %v1732 = vunpack.c.l.b16 %v357
  %v1733 = vunpack.c.l.b16 %v358
  %v1734 = vunpack.c.l.b16 %v359
  %v1735 = vunpack.c.l.b16 %v360
  %v1736 = vunpack.c.l.b16 %v361
  %v1737 = vunpack.c.l.b16 %v362
  %v1738 = vunpack.c.l.b16 %v363
  %v1739 = vunpack.c.l.b16 %v364
  %v1740 = vunpack.c.l.b16 %v365
  %v1741 = vunpack.c.l.b16 %v366
  %v1742 = vunpack.c.l.b16 %v367
  %v1743 = vunpack.c.l.b16 %v368
  %v1744 = vunpack.c.l.b16 %v369
  %v1745 = vunpack.c.l.b16 %v370
  %v1746 = vunpack.c.l.b16 %v371
  %v1747 = vunpack.c.l.b16 %v372
  %v1748 = vunpack.c.l.b16 %v373
  %v1749 = vunpack.c.l.b16 %v374
  %v1750 = vunpack.c.l.b16 %v375
  %v1751 = vunpack.c.l.b16 %v376
  %v1752 = vunpack.c.l.b16 %v377
  %v1753 = vunpack.c.l.b16 %v378
  %v1754 = vunpack.c.l.b16 %v379
  %v1755 = vunpack.c.l.b16 %v380
  %v1756 = vunpack.c.l.b16 %v381
  %v1757 = vunpack.c.l.b16 %v382
  %v1758 = vunpack.c.l.b16 %v383
  %v1759 = vunpack.c.l.b16 %v384
  %v1760 = vunpack.c.l.b16 %v385
  %v1761 = vunpack.c.l.b16 %v386
  %v1762 = vunpack.c.l.b16 %v387
  %v1763 = vunpack.c.l.b16 %v388
  %v1764 = vunpack.c.l.b16 %v389
  %v1765 = vunpack.c.l.b16 %v390
  %v1766 = vunpack.c.l.b16 %v391
  %v1767 = vunpack.c.l.b16 %v392
  %v1768 = vunpack.c.l.b16 %v393
  %v1769 = vunpack.c.l.b16 %v394
  %v1770 = vunpack.c.l.b16 %v395
  %v1771 = vunpack.c.l.b16 %v396
  %v1772 = vunpack.c.l.b16 %v397
  %v1773 = vunpack.c.l.b16 %v398
  %v1774 = vunpack.c.l.b16 %v399
  %v1775 = vunpack.c.l.b16 %v400
  %v1776 = vunpack.c.l.b16 %v401
  %v1777 = vunpack.c.l.b16 %v402
  %v1778 = vunpack.c.l.b16 %v403
  %v1779 = vunpack.c.l.b16 %v404
  %v1780 = vunpack.c.l.b16 %v405
  %v1781 = vunpack.c.l.b16 %v406
  %v1782 = vunpack.c.l.b16 %v407
  %v1783 = vunpack.c.l.b16 %v408
  %v1784 = vunpack.c.l.b16 %v409
  %v1785 = vunpack.c.l.b16 %v410
  %v1786 = vunpack.c.l.b16 %v411
  %v1787 = vunpack.c.l.b16 %v412
  %v1788 = vunpack.c.l.b16 %v413
  %v1789 = vunpack.c.l.b16 %v414
  %v1790 = vunpack.c.l.b16 %v415
  %v1791 = vunpack.c.l.b16 %v416
  %v1792 = vunpack.c.l.b16 %v417
  %v1793 = vunpack.c.l.b16 %v418
  %v1794 = vunpack.c.l.b16 %v419
  %v1795 = vunpack.c.l.b16 %v420
  %v1796 = vunpack.c.l.b16 %v421
  %v1797 = vunpack.c.l.b16 %v422
  %v1798 = vunpack.c.l.b16 %v423
  %v1799 = vunpack.c.l.b16 %v424
  %v1800 = vunpack.c.l.b16 %v425
  %v1801 = vunpack.c.l.b16 %v426
  %v1802 = vunpack.c.l.b16 %v427
  %v1803 = vunpack.c.l.b16 %v428
  %v1804 = vunpack.c.l.b16 %v429
  %v1805 = vunpack.c.l.b16 %v430
  %v1806 = vunpack.c.l.b16 %v431
  %v1807 = vunpack.c.l.b16 %v432
  %v1808 = vunpack.c.l.b16 %v433
  %v1809 = vunpack.c.l.b16 %v434
  %v1810 = vunpack.c.l.b16 %v435
  %v1811 = vunpack.c.l.b16 %v436
  %v1812 = vunpack.c.l.b16 %v437
  %v1813 = vunpack.c.l.b16 %v438
  %v1814 = vpack.c.b16 %v1559, %v1558
  %v1815 = vpack.c.b16 %v1561, %v1560
  %v1816 = vpack.c.b16 %v1563, %v1562
  %v1817 = vpack.c.b16 %v1565, %v1564
  %v1818 = vpack.c.b16 %v1567, %v1566
  %v1819 = vpack.c.b16 %v1569, %v1568
  %v1820 = vpack.c.b16 %v1571, %v1570
  %v1821 = vpack.c.b16 %v1573, %v1572
  %v1822 = vpack.c.b16 %v1575, %v1574
  %v1823 = vpack.c.b16 %v1577, %v1576
  %v1824 = vpack.c.b16 %v1579, %v1578
  %v1825 = vpack.c.b16 %v1581, %v1580
  %v1826 = vpack.c.b16 %v1583, %v1582
  %v1827 = vpack.c.b16 %v1585, %v1584
  %v1828 = vpack.c.b16 %v1587, %v1586
  %v1829 = vpack.c.b16 %v1589, %v1588
  %v1830 = vpack.c.b16 %v1591, %v1590
  %v1831 = vpack.c.b16 %v1593, %v1592
  %v1832 = vpack.c.b16 %v1595, %v1594
  %v1833 = vpack.c.b16 %v1597, %v1596
  %v1834 = vpack.c.b16 %v1599, %v1598
  %v1835 = vpack.c.b16 %v1601, %v1600
  %v1836 = vpack.c.b16 %v1603, %v1602
  %v1837 = vpack.c.b16 %v1605, %v1604
  %v1838 = vpack.c.b16 %v1607, %v1606
  %v1839 = vpack.c.b16 %v1609, %v1608
  %v1840 = vpack.c.b16 %v1611, %v1610
  %v1841 = vpack.c.b16 %v1613, %v1612
  %v1842 = vpack.c.b16 %v1615, %v1614
  %v1843 = vpack.c.b16 %v1617, %v1616
  %v1844 = vpack.c.b16 %v1619, %v1618
  %v1845 = vpack.c.b16 %v1621, %v1620
  %v1846 = vpack.c.b16 %v1623, %v1622
  %v1847 = vpack.c.b16 %v1625, %v1624
  %v1848 = vpack.c.b16 %v1627, %v1626
  %v1849 = vpack.c.b16 %v1629, %v1628
  %v1850 = vpack.c.b16 %v1631, %v1630
  %v1851 = vpack.c.b16 %v1633, %v1632
  %v1852 = vpack.c.b16 %v1635, %v1634
  %v1853 = vpack.c.b16 %v1637, %v1636
  %v1854 = vpack.c.b16 %v1639, %v1638
  %v1855 = vpack.c.b16 %v1641, %v1640
  %v1856 = vpack.c.b16 %v1643, %v1642
  %v1857 = vpack.c.b16 %v1645, %v1644
  %v1858 = vpack.c.b16 %v1647, %v1646
  %v1859 = vpack.c.b16 %v1649, %v1648
  %v1860 = vpack.c.b16 %v1651, %v1650
  %v1861 = vpack.c.b16 %v1653, %v1652
  %v1862 = vpack.c.b16 %v1655, %v1654
  %v1863 = vpack.c.b16 %v1657, %v1656
  %v1864 = vpack.c.b16 %v1659, %v1658
  %v1865 = vpack.c.b16 %v1661, %v1660
  %v1866 = vpack.c.b16 %v1663, %v1662
  %v1867 = vpack.c.b16 %v1665, %v1664
  %v1868 = vpack.c.b16 %v1667, %v1666
  %v1869 = vpack.c.b16 %v1669, %v1668
  %v1870 = vpack.c.b16 %v1671, %v1670
  %v1871 = vpack.c.b16 %v1673, %v1672
  %v1872 = vpack.c.b16 %v1675, %v1674
  %v1873 = vpack.c.b16 %v1677, %v1676
  %v1874 = vpack.c.b16 %v1679, %v1678
  %v1875 = vpack.c.b16 %v1681, %v1680
  %v1876 = vpack.c.b16 %v1683, %v1682
  %v1877 = vpack.c.b16 %v1685, %v1684
  %v1878 = vpack.c.b16 %v1687, %v1686
  %v1879 = vpack.c.b16 %v1689, %v1688
  %v1880 = vpack.c.b16 %v1691, %v1690
  %v1881 = vpack.c.b16 %v1693, %v1692
  %v1882 = vpack.c.b16 %v1695, %v1694
  %v1883 = vpack.c.b16 %v1697, %v1696
  %v1884 = vpack.c.b16 %v1699, %v1698
  %v1885 = vpack.c.b16 %v1701, %v1700
  %v1886 = vpack.c.b16 %v1703, %v1702
  %v1887 = vpack.c.b16 %v1705, %v1704
  %v1888 = vpack.c.b16 %v1707, %v1706
  %v1889 = vpack.c.b16 %v1709, %v1708
  %v1890 = vpack.c.b16 %v1711, %v1710
  %v1891 = vpack.c.b16 %v1713, %v1712
  %v1892 = vpack.c.b16 %v1715, %v1714
  %v1893 = vpack.c.b16 %v1717, %v1716
  %v1894 = vpack.c.b16 %v1719, %v1718
  %v1895 = vpack.c.b16 %v1721, %v1720
  %v1896 = vpack.c.b16 %v1723, %v1722
  %v1897 = vpack.c.b16 %v1725, %v1724
  %v1898 = vpack.c.b16 %v1727, %v1726
  %v1899 = vpack.c.b16 %v1729, %v1728
  %v1900 = vpack.c.b16 %v1731, %v1730
  %v1901 = vpack.c.b16 %v1733, %v1732
  %v1902 = vpack.c.b16 %v1735, %v1734
  %v1903 = vpack.c.b16 %v1737, %v1736
  %v1904 = vpack.c.b16 %v1739, %v1738
  %v1905 = vpack.c.b16 %v1741, %v1740
  %v1906 = vpack.c.b16 %v1743, %v1742
  %v1907 = vpack.c.b16 %v1745, %v1744
  %v1908 = vpack.c.b16 %v1747, %v1746
  %v1909 = vpack.c.b16 %v1749, %v1748
  %v1910 = vpack.c.b16 %v1751, %v1750
  %v1911 = vpack.c.b16 %v1753, %v1752
  %v1912 = vpack.c.b16 %v1755, %v1754
  %v1913 = vpack.c.b16 %v1757, %v1756
  %v1914 = vpack.c.b16 %v1759, %v1758
  %v1915 = vpack.c.b16 %v1761, %v1760
  %v1916 = vpack.c.b16 %v1763, %v1762
  %v1917 = vpack.c.b16 %v1765, %v1764
  %v1918 = vpack.c.b16 %v1767, %v1766
  %v1919 = vpack.c.b16 %v1769, %v1768
  %v1920 = vpack.c.b16 %v1771, %v1770
  %v1921 = vpack.c.b16 %v1773, %v1772
  %v1922 = vpack.c.b16 %v1775, %v1774
  %v1923 = vpack.c.b16 %v1777, %v1776
  %v1924 = vpack.c.b16 %v1779, %v1778
  %v1925 = vpack.c.b16 %v1781, %v1780
  %v1926 = vpack.c.b16 %v1783, %v1782
  %v1927 = vpack.c.b16 %v1785, %v1784
  %v1928 = vpack.c.b16 %v1787, %v1786
  %v1929 = vpack.c.b16 %v1789, %v1788
  %v1930 = vpack.c.b16 %v1791, %v1790
  %v1931 = vpack.c.b16 %v1793, %v1792
  %v1932 = vpack.c.b16 %v1795, %v1794
  %v1933 = vpack.c.b16 %v1797, %v1796
  %v1934 = vpack.c.b16 %v1799, %v1798
  %v1935 = vpack.c.b16 %v1801, %v1800
  %v1936 = vpack.c.b16 %v1803, %v1802
  %v1937 = vpack.c.b16 %v1805, %v1804
  %v1938 = vpack.c.b16 %v1807, %v1806
  %v1939 = vpack.c.b16 %v1809, %v1808
  %v1940 = vpack.c.b16 %v1811, %v1810
  %v1941 = vpack.c.b16 %v1813, %v1812
  %2070 = vmatprep.subr.bf16.mxu0 0
  %2071 = vmatpush1.bf16.msra.mxu0 %v1814
  %2072 = vmatprep.subr.bf16.mxu0 0
  %2073 = vmatpush1.bf16.msra.mxu0 %v1815
  %2074 = vmatprep.subr.bf16.mxu0 0
  %2075 = vmatpush1.bf16.msra.mxu0 %v1816
  %2076 = vmatprep.subr.bf16.mxu0 0
  %2077 = vmatpush1.bf16.msra.mxu0 %v1817
  %2078 = vmatprep.subr.bf16.mxu0 0
  %2079 = vmatpush1.bf16.msra.mxu0 %v1818
  %2080 = vmatprep.subr.bf16.mxu0 0
  %2081 = vmatpush1.bf16.msra.mxu0 %v1819
  %2082 = vmatprep.subr.bf16.mxu0 0
  %2083 = vmatpush1.bf16.msra.mxu0 %v1820
  %2084 = vmatprep.subr.bf16.mxu0 0
  %2085 = vmatpush1.bf16.msra.mxu0 %v1821
  %2086 = vmatprep.subr.bf16.mxu0 0
  %2087 = vmatpush1.bf16.msra.mxu0 %v1822
  %2088 = vmatprep.subr.bf16.mxu0 0
  %2089 = vmatpush1.bf16.msra.mxu0 %v1823
  %2090 = vmatprep.subr.bf16.mxu0 0
  %2091 = vmatpush1.bf16.msra.mxu0 %v1824
  %2092 = vmatprep.subr.bf16.mxu0 0
  %2093 = vmatpush1.bf16.msra.mxu0 %v1825
  %2094 = vmatprep.subr.bf16.mxu0 0
  %2095 = vmatpush1.bf16.msra.mxu0 %v1826
  %2096 = vmatprep.subr.bf16.mxu0 0
  %2097 = vmatpush1.bf16.msra.mxu0 %v1827
  %2098 = vmatprep.subr.bf16.mxu0 0
  %2099 = vmatpush1.bf16.msra.mxu0 %v1828
  %2100 = vmatprep.subr.bf16.mxu0 0
  %2101 = vmatpush1.bf16.msra.mxu0 %v1829
  %2102 = vmatprep.mubr.bf16.mxu0 %v951
  %2103 = vmatmul.mubr.bf16.gmra.mrb[0].mxu0 %v950
  %v2104 = vpop.f32.mrb[0].mxu0
  %v2105 = vadd.f32 %v444, %v2104
  %v2106 = vpop.f32.mrb[0].mxu0
  %v2107 = vpop.f32.mrb[0].mxu0
  %v2108 = vadd.f32 %v444, %v2107
  %v2109 = vpop.f32.mrb[0].mxu0
  %2110 = vmatprep.mubr.bf16.mxu0 %v967
  %2111 = vmatmul.mubr.bf16.gmra.mrb[0].mxu0 %v966
  %v2112 = vpop.f32.mrb[0].mxu0
  %v2113 = vadd.f32 %v444, %v2112
  %v2114 = vpop.f32.mrb[0].mxu0
  %v2115 = vpop.f32.mrb[0].mxu0
  %v2116 = vadd.f32 %v444, %v2115
  %v2117 = vpop.f32.mrb[0].mxu0
  %2118 = vmatprep.mubr.bf16.mxu0 %v983
  %2119 = vmatmul.mubr.bf16.gmra.mrb[0].mxu0 %v982
  %v2120 = vpop.f32.mrb[0].mxu0
  %v2121 = vadd.f32 %v444, %v2120
  %v2122 = vpop.f32.mrb[0].mxu0
  %v2123 = vpop.f32.mrb[0].mxu0
  %v2124 = vadd.f32 %v444, %v2123
  %v2125 = vpop.f32.mrb[0].mxu0
  %2126 = vmatprep.mubr.bf16.mxu0 %v999
  %2127 = vmatmul.mubr.bf16.gmra.mrb[0].mxu0 %v998
  %v2128 = vpop.f32.mrb[0].mxu0
  %v2129 = vadd.f32 %v444, %v2128
  %v2130 = vpop.f32.mrb[0].mxu0
  %v2131 = vpop.f32.mrb[0].mxu0
  %v2132 = vadd.f32 %v444, %v2131
  %v2133 = vpop.f32.mrb[0].mxu0
  %2134 = vmatprep.mubr.bf16.mxu0 %v1015
  %2135 = vmatmul.mubr.bf16.gmra.mrb[0].mxu0 %v1014
  %v2136 = vpop.f32.mrb[0].mxu0
  %v2137 = vadd.f32 %v444, %v2136
  %v2138 = vpop.f32.mrb[0].mxu0
  %v2139 = vpop.f32.mrb[0].mxu0
  %v2140 = vadd.f32 %v444, %v2139
  %v2141 = vpop.f32.mrb[0].mxu0
  %2142 = vmatprep.mubr.bf16.mxu0 %v1031
  %2143 = vmatmul.mubr.bf16.gmra.mrb[0].mxu0 %v1030
  %v2144 = vpop.f32.mrb[0].mxu0
  %v2145 = vadd.f32 %v444, %v2144
  %v2146 = vpop.f32.mrb[0].mxu0
  %v2147 = vpop.f32.mrb[0].mxu0
  %v2148 = vadd.f32 %v444, %v2147
  %v2149 = vpop.f32.mrb[0].mxu0
  %2150 = vmatprep.mubr.bf16.mxu0 %v1047
  %2151 = vmatmul.mubr.bf16.gmra.mrb[0].mxu0 %v1046
  %v2152 = vpop.f32.mrb[0].mxu0
  %v2153 = vadd.f32 %v444, %v2152
  %v2154 = vpop.f32.mrb[0].mxu0
  %v2155 = vpop.f32.mrb[0].mxu0
  %v2156 = vadd.f32 %v444, %v2155
  %v2157 = vpop.f32.mrb[0].mxu0
  %2158 = vmatprep.mubr.bf16.mxu0 %v1063
  %2159 = vmatmul.mubr.bf16.gmra.mrb[0].mxu0 %v1062
  %v2160 = vpop.f32.mrb[0].mxu0
  %v2161 = vadd.f32 %v444, %v2160
  %v2162 = vpop.f32.mrb[0].mxu0
  %v2163 = vpop.f32.mrb[0].mxu0
  %v2164 = vadd.f32 %v444, %v2163
  %v2165 = vpop.f32.mrb[0].mxu0
  %2166 = vmatprep.mubr.bf16.mxu0 %v1079
  %2167 = vmatmul.mubr.bf16.gmra.mrb[0].mxu0 %v1078
  %v2168 = vpop.f32.mrb[0].mxu0
  %v2169 = vadd.f32 %v444, %v2168
  %v2170 = vpop.f32.mrb[0].mxu0
  %v2171 = vpop.f32.mrb[0].mxu0
  %v2172 = vadd.f32 %v444, %v2171
  %v2173 = vpop.f32.mrb[0].mxu0
  %2174 = vmatprep.mubr.bf16.mxu0 %v1095
  %2175 = vmatmul.mubr.bf16.gmra.mrb[0].mxu0 %v1094
  %v2176 = vpop.f32.mrb[0].mxu0
  %v2177 = vadd.f32 %v444, %v2176
  %v2178 = vpop.f32.mrb[0].mxu0
  %v2179 = vpop.f32.mrb[0].mxu0
  %v2180 = vadd.f32 %v444, %v2179
  %v2181 = vpop.f32.mrb[0].mxu0
  %2182 = vmatprep.mubr.bf16.mxu0 %v1111
  %2183 = vmatmul.mubr.bf16.gmra.mrb[0].mxu0 %v1110
  %v2184 = vpop.f32.mrb[0].mxu0
  %v2185 = vadd.f32 %v444, %v2184
  %v2186 = vpop.f32.mrb[0].mxu0
  %v2187 = vpop.f32.mrb[0].mxu0
  %v2188 = vpop.f32.mrb[0].mxu0
  %2189 = vdwg.mxu0
  %2190 = vmatprep.subr.bf16.mxu0 0
  %2191 = vmatpush1.bf16.msra.mxu0 %v1830
  %2192 = vmatprep.subr.bf16.mxu0 0
  %2193 = vmatpush1.bf16.msra.mxu0 %v1831
  %2194 = vmatprep.subr.bf16.mxu0 0
  %2195 = vmatpush1.bf16.msra.mxu0 %v1832
  %2196 = vmatprep.subr.bf16.mxu0 0
  %2197 = vmatpush1.bf16.msra.mxu0 %v1833
  %2198 = vmatprep.subr.bf16.mxu0 0
  %2199 = vmatpush1.bf16.msra.mxu0 %v1834
  %2200 = vmatprep.subr.bf16.mxu0 0
  %2201 = vmatpush1.bf16.msra.mxu0 %v1835
  %2202 = vmatprep.subr.bf16.mxu0 0
  %2203 = vmatpush1.bf16.msra.mxu0 %v1836
  %2204 = vmatprep.subr.bf16.mxu0 0
  %2205 = vmatpush1.bf16.msra.mxu0 %v1837
  %2206 = vmatprep.subr.bf16.mxu0 0
  %2207 = vmatpush1.bf16.msra.mxu0 %v1838
  %2208 = vmatprep.subr.bf16.mxu0 0
  %2209 = vmatpush1.bf16.msra.mxu0 %v1839
  %2210 = vmatprep.subr.bf16.mxu0 0
  %2211 = vmatpush1.bf16.msra.mxu0 %v1840
  %2212 = vmatprep.subr.bf16.mxu0 0
  %2213 = vmatpush1.bf16.msra.mxu0 %v1841
  %2214 = vmatprep.subr.bf16.mxu0 0
  %2215 = vmatpush1.bf16.msra.mxu0 %v1842
  %2216 = vmatprep.subr.bf16.mxu0 0
  %2217 = vmatpush1.bf16.msra.mxu0 %v1843
  %2218 = vmatprep.subr.bf16.mxu0 0
  %2219 = vmatpush1.bf16.msra.mxu0 %v1844
  %2220 = vmatprep.subr.bf16.mxu0 0
  %2221 = vmatpush1.bf16.msra.mxu0 %v1845
  %2222 = vmatprep.mubr.bf16.mxu0 %v953
  %2223 = vmatmul.mubr.bf16.gmra.mrb[0].mxu0 %v952
  %v2224 = vpop.f32.mrb[0].mxu0
  %v2225 = vadd.f32 %v2105, %v2224
  %v2226 = vpop.f32.mrb[0].mxu0
  %v2227 = vpop.f32.mrb[0].mxu0
  %v2228 = vadd.f32 %v2108, %v2227
  %v2229 = vpop.f32.mrb[0].mxu0
  %2230 = vmatprep.mubr.bf16.mxu0 %v969
  %2231 = vmatmul.mubr.bf16.gmra.mrb[0].mxu0 %v968
  %v2232 = vpop.f32.mrb[0].mxu0
  %v2233 = vadd.f32 %v2113, %v2232
  %v2234 = vpop.f32.mrb[0].mxu0
  %v2235 = vpop.f32.mrb[0].mxu0
  %v2236 = vadd.f32 %v2116, %v2235
  %v2237 = vpop.f32.mrb[0].mxu0
  %2238 = vmatprep.mubr.bf16.mxu0 %v985
  %2239 = vmatmul.mubr.bf16.gmra.mrb[0].mxu0 %v984
  %v2240 = vpop.f32.mrb[0].mxu0
  %v2241 = vadd.f32 %v2121, %v2240
  %v2242 = vpop.f32.mrb[0].mxu0
  %v2243 = vpop.f32.mrb[0].mxu0
  %v2244 = vadd.f32 %v2124, %v2243
  %v2245 = vpop.f32.mrb[0].mxu0
  %2246 = vmatprep.mubr.bf16.mxu0 %v1001
  %2247 = vmatmul.mubr.bf16.gmra.mrb[0].mxu0 %v1000
  %v2248 = vpop.f32.mrb[0].mxu0
  %v2249 = vadd.f32 %v2129, %v2248
  %v2250 = vpop.f32.mrb[0].mxu0
  %v2251 = vpop.f32.mrb[0].mxu0
  %v2252 = vadd.f32 %v2132, %v2251
  %v2253 = vpop.f32.mrb[0].mxu0
  %2254 = vmatprep.mubr.bf16.mxu0 %v1017
  %2255 = vmatmul.mubr.bf16.gmra.mrb[0].mxu0 %v1016
  %v2256 = vpop.f32.mrb[0].mxu0
  %v2257 = vadd.f32 %v2137, %v2256
  %v2258 = vpop.f32.mrb[0].mxu0
  %v2259 = vpop.f32.mrb[0].mxu0
  %v2260 = vadd.f32 %v2140, %v2259
  %v2261 = vpop.f32.mrb[0].mxu0
  %2262 = vmatprep.mubr.bf16.mxu0 %v1033
  %2263 = vmatmul.mubr.bf16.gmra.mrb[0].mxu0 %v1032
  %v2264 = vpop.f32.mrb[0].mxu0
  %v2265 = vadd.f32 %v2145, %v2264
  %v2266 = vpop.f32.mrb[0].mxu0
  %v2267 = vpop.f32.mrb[0].mxu0
  %v2268 = vadd.f32 %v2148, %v2267
  %v2269 = vpop.f32.mrb[0].mxu0
  %2270 = vmatprep.mubr.bf16.mxu0 %v1049
  %2271 = vmatmul.mubr.bf16.gmra.mrb[0].mxu0 %v1048
  %v2272 = vpop.f32.mrb[0].mxu0
  %v2273 = vadd.f32 %v2153, %v2272
  %v2274 = vpop.f32.mrb[0].mxu0
  %v2275 = vpop.f32.mrb[0].mxu0
  %v2276 = vadd.f32 %v2156, %v2275
  %v2277 = vpop.f32.mrb[0].mxu0
  %2278 = vmatprep.mubr.bf16.mxu0 %v1065
  %2279 = vmatmul.mubr.bf16.gmra.mrb[0].mxu0 %v1064
  %v2280 = vpop.f32.mrb[0].mxu0
  %v2281 = vadd.f32 %v2161, %v2280
  %v2282 = vpop.f32.mrb[0].mxu0
  %v2283 = vpop.f32.mrb[0].mxu0
  %v2284 = vadd.f32 %v2164, %v2283
  %v2285 = vpop.f32.mrb[0].mxu0
  %2286 = vmatprep.mubr.bf16.mxu0 %v1081
  %2287 = vmatmul.mubr.bf16.gmra.mrb[0].mxu0 %v1080
  %v2288 = vpop.f32.mrb[0].mxu0
  %v2289 = vadd.f32 %v2169, %v2288
  %v2290 = vpop.f32.mrb[0].mxu0
  %v2291 = vpop.f32.mrb[0].mxu0
  %v2292 = vadd.f32 %v2172, %v2291
  %v2293 = vpop.f32.mrb[0].mxu0
  %2294 = vmatprep.mubr.bf16.mxu0 %v1097
  %2295 = vmatmul.mubr.bf16.gmra.mrb[0].mxu0 %v1096
  %v2296 = vpop.f32.mrb[0].mxu0
  %v2297 = vadd.f32 %v2177, %v2296
  %v2298 = vpop.f32.mrb[0].mxu0
  %v2299 = vpop.f32.mrb[0].mxu0
  %v2300 = vadd.f32 %v2180, %v2299
  %v2301 = vpop.f32.mrb[0].mxu0
  %2302 = vmatprep.mubr.bf16.mxu0 %v1113
  %2303 = vmatmul.mubr.bf16.gmra.mrb[0].mxu0 %v1112
  %v2304 = vpop.f32.mrb[0].mxu0
  %v2305 = vadd.f32 %v2185, %v2304
  %v2306 = vpop.f32.mrb[0].mxu0
  %v2307 = vpop.f32.mrb[0].mxu0
  %v2308 = vpop.f32.mrb[0].mxu0
  %2309 = vdwg.mxu0
  %2310 = vmatprep.subr.bf16.mxu0 0
  %2311 = vmatpush1.bf16.msra.mxu0 %v1846
  %2312 = vmatprep.subr.bf16.mxu0 0
  %2313 = vmatpush1.bf16.msra.mxu0 %v1847
  %2314 = vmatprep.subr.bf16.mxu0 0
  %2315 = vmatpush1.bf16.msra.mxu0 %v1848
  %2316 = vmatprep.subr.bf16.mxu0 0
  %2317 = vmatpush1.bf16.msra.mxu0 %v1849
  %2318 = vmatprep.subr.bf16.mxu0 0
  %2319 = vmatpush1.bf16.msra.mxu0 %v1850
  %2320 = vmatprep.subr.bf16.mxu0 0
  %2321 = vmatpush1.bf16.msra.mxu0 %v1851
  %2322 = vmatprep.subr.bf16.mxu0 0
  %2323 = vmatpush1.bf16.msra.mxu0 %v1852
  %2324 = vmatprep.subr.bf16.mxu0 0
  %2325 = vmatpush1.bf16.msra.mxu0 %v1853
  %2326 = vmatprep.subr.bf16.mxu0 0
  %2327 = vmatpush1.bf16.msra.mxu0 %v1854
  %2328 = vmatprep.subr.bf16.mxu0 0
  %2329 = vmatpush1.bf16.msra.mxu0 %v1855
  %2330 = vmatprep.subr.bf16.mxu0 0
  %2331 = vmatpush1.bf16.msra.mxu0 %v1856
  %2332 = vmatprep.subr.bf16.mxu0 0
  %2333 = vmatpush1.bf16.msra.mxu0 %v1857
  %2334 = vmatprep.subr.bf16.mxu0 0
  %2335 = vmatpush1.bf16.msra.mxu0 %v1858
  %2336 = vmatprep.subr.bf16.mxu0 0
  %2337 = vmatpush1.bf16.msra.mxu0 %v1859
  %2338 = vmatprep.subr.bf16.mxu0 0
  %2339 = vmatpush1.bf16.msra.mxu0 %v1860
  %2340 = vmatprep.subr.bf16.mxu0 0
  %2341 = vmatpush1.bf16.msra.mxu0 %v1861
  %2342 = vmatprep.mubr.bf16.mxu0 %v955
  %2343 = vmatmul.mubr.bf16.gmra.mrb[0].mxu0 %v954
  %v2344 = vpop.f32.mrb[0].mxu0
  %v2345 = vadd.f32 %v2225, %v2344
  %v2346 = vpop.f32.mrb[0].mxu0
  %v2347 = vpop.f32.mrb[0].mxu0
  %v2348 = vadd.f32 %v2228, %v2347
  %v2349 = vpop.f32.mrb[0].mxu0
  %2350 = vmatprep.mubr.bf16.mxu0 %v971
  %2351 = vmatmul.mubr.bf16.gmra.mrb[0].mxu0 %v970
  %v2352 = vpop.f32.mrb[0].mxu0
  %v2353 = vadd.f32 %v2233, %v2352
  %v2354 = vpop.f32.mrb[0].mxu0
  %v2355 = vpop.f32.mrb[0].mxu0
  %v2356 = vadd.f32 %v2236, %v2355
  %v2357 = vpop.f32.mrb[0].mxu0
  %2358 = vmatprep.mubr.bf16.mxu0 %v987
  %2359 = vmatmul.mubr.bf16.gmra.mrb[0].mxu0 %v986
  %v2360 = vpop.f32.mrb[0].mxu0
  %v2361 = vadd.f32 %v2241, %v2360
  %v2362 = vpop.f32.mrb[0].mxu0
  %v2363 = vpop.f32.mrb[0].mxu0
  %v2364 = vadd.f32 %v2244, %v2363
  %v2365 = vpop.f32.mrb[0].mxu0
  %2366 = vmatprep.mubr.bf16.mxu0 %v1003
  %2367 = vmatmul.mubr.bf16.gmra.mrb[0].mxu0 %v1002
  %v2368 = vpop.f32.mrb[0].mxu0
  %v2369 = vadd.f32 %v2249, %v2368
  %v2370 = vpop.f32.mrb[0].mxu0
  %v2371 = vpop.f32.mrb[0].mxu0
  %v2372 = vadd.f32 %v2252, %v2371
  %v2373 = vpop.f32.mrb[0].mxu0
  %2374 = vmatprep.mubr.bf16.mxu0 %v1019
  %2375 = vmatmul.mubr.bf16.gmra.mrb[0].mxu0 %v1018
  %v2376 = vpop.f32.mrb[0].mxu0
  %v2377 = vadd.f32 %v2257, %v2376
  %v2378 = vpop.f32.mrb[0].mxu0
  %v2379 = vpop.f32.mrb[0].mxu0
  %v2380 = vadd.f32 %v2260, %v2379
  %v2381 = vpop.f32.mrb[0].mxu0
  %2382 = vmatprep.mubr.bf16.mxu0 %v1035
  %2383 = vmatmul.mubr.bf16.gmra.mrb[0].mxu0 %v1034
  %v2384 = vpop.f32.mrb[0].mxu0
  %v2385 = vadd.f32 %v2265, %v2384
  %v2386 = vpop.f32.mrb[0].mxu0
  %v2387 = vpop.f32.mrb[0].mxu0
  %v2388 = vadd.f32 %v2268, %v2387
  %v2389 = vpop.f32.mrb[0].mxu0
  %2390 = vmatprep.mubr.bf16.mxu0 %v1051
  %2391 = vmatmul.mubr.bf16.gmra.mrb[0].mxu0 %v1050
  %v2392 = vpop.f32.mrb[0].mxu0
  %v2393 = vadd.f32 %v2273, %v2392
  %v2394 = vpop.f32.mrb[0].mxu0
  %v2395 = vpop.f32.mrb[0].mxu0
  %v2396 = vadd.f32 %v2276, %v2395
  %v2397 = vpop.f32.mrb[0].mxu0
  %2398 = vmatprep.mubr.bf16.mxu0 %v1067
  %2399 = vmatmul.mubr.bf16.gmra.mrb[0].mxu0 %v1066
  %v2400 = vpop.f32.mrb[0].mxu0
  %v2401 = vadd.f32 %v2281, %v2400
  %v2402 = vpop.f32.mrb[0].mxu0
  %v2403 = vpop.f32.mrb[0].mxu0
  %v2404 = vadd.f32 %v2284, %v2403
  %v2405 = vpop.f32.mrb[0].mxu0
  %2406 = vmatprep.mubr.bf16.mxu0 %v1083
  %2407 = vmatmul.mubr.bf16.gmra.mrb[0].mxu0 %v1082
  %v2408 = vpop.f32.mrb[0].mxu0
  %v2409 = vadd.f32 %v2289, %v2408
  %v2410 = vpop.f32.mrb[0].mxu0
  %v2411 = vpop.f32.mrb[0].mxu0
  %v2412 = vadd.f32 %v2292, %v2411
  %v2413 = vpop.f32.mrb[0].mxu0
  %2414 = vmatprep.mubr.bf16.mxu0 %v1099
  %2415 = vmatmul.mubr.bf16.gmra.mrb[0].mxu0 %v1098
  %v2416 = vpop.f32.mrb[0].mxu0
  %v2417 = vadd.f32 %v2297, %v2416
  %v2418 = vpop.f32.mrb[0].mxu0
  %v2419 = vpop.f32.mrb[0].mxu0
  %v2420 = vadd.f32 %v2300, %v2419
  %v2421 = vpop.f32.mrb[0].mxu0
  %2422 = vmatprep.mubr.bf16.mxu0 %v1115
  %2423 = vmatmul.mubr.bf16.gmra.mrb[0].mxu0 %v1114
  %v2424 = vpop.f32.mrb[0].mxu0
  %v2425 = vadd.f32 %v2305, %v2424
  %v2426 = vpop.f32.mrb[0].mxu0
  %v2427 = vpop.f32.mrb[0].mxu0
  %v2428 = vpop.f32.mrb[0].mxu0
  %2429 = vdwg.mxu0
  %2430 = vmatprep.subr.bf16.mxu0 0
  %2431 = vmatpush1.bf16.msra.mxu0 %v1862
  %2432 = vmatprep.subr.bf16.mxu0 0
  %2433 = vmatpush1.bf16.msra.mxu0 %v1863
  %2434 = vmatprep.subr.bf16.mxu0 0
  %2435 = vmatpush1.bf16.msra.mxu0 %v1864
  %2436 = vmatprep.subr.bf16.mxu0 0
  %2437 = vmatpush1.bf16.msra.mxu0 %v1865
  %2438 = vmatprep.subr.bf16.mxu0 0
  %2439 = vmatpush1.bf16.msra.mxu0 %v1866
  %2440 = vmatprep.subr.bf16.mxu0 0
  %2441 = vmatpush1.bf16.msra.mxu0 %v1867
  %2442 = vmatprep.subr.bf16.mxu0 0
  %2443 = vmatpush1.bf16.msra.mxu0 %v1868
  %2444 = vmatprep.subr.bf16.mxu0 0
  %2445 = vmatpush1.bf16.msra.mxu0 %v1869
  %2446 = vmatprep.subr.bf16.mxu0 0
  %2447 = vmatpush1.bf16.msra.mxu0 %v1870
  %2448 = vmatprep.subr.bf16.mxu0 0
  %2449 = vmatpush1.bf16.msra.mxu0 %v1871
  %2450 = vmatprep.subr.bf16.mxu0 0
  %2451 = vmatpush1.bf16.msra.mxu0 %v1872
  %2452 = vmatprep.subr.bf16.mxu0 0
  %2453 = vmatpush1.bf16.msra.mxu0 %v1873
  %2454 = vmatprep.subr.bf16.mxu0 0
  %2455 = vmatpush1.bf16.msra.mxu0 %v1874
  %2456 = vmatprep.subr.bf16.mxu0 0
  %2457 = vmatpush1.bf16.msra.mxu0 %v1875
  %2458 = vmatprep.subr.bf16.mxu0 0
  %2459 = vmatpush1.bf16.msra.mxu0 %v1876
  %2460 = vmatprep.subr.bf16.mxu0 0
  %2461 = vmatpush1.bf16.msra.mxu0 %v1877
  %2462 = vmatprep.mubr.bf16.mxu0 %v957
  %2463 = vmatmul.mubr.bf16.gmra.mrb[0].mxu0 %v956
  %v2464 = vpop.f32.mrb[0].mxu0
  %v2465 = vadd.f32 %v2345, %v2464
  %v2466 = vpop.f32.mrb[0].mxu0
  %v2467 = vpop.f32.mrb[0].mxu0
  %v2468 = vadd.f32 %v2348, %v2467
  %v2469 = vpop.f32.mrb[0].mxu0
  %2470 = vmatprep.mubr.bf16.mxu0 %v973
  %2471 = vmatmul.mubr.bf16.gmra.mrb[0].mxu0 %v972
  %v2472 = vpop.f32.mrb[0].mxu0
  %v2473 = vadd.f32 %v2353, %v2472
  %v2474 = vpop.f32.mrb[0].mxu0
  %v2475 = vpop.f32.mrb[0].mxu0
  %v2476 = vadd.f32 %v2356, %v2475
  %v2477 = vpop.f32.mrb[0].mxu0
  %2478 = vmatprep.mubr.bf16.mxu0 %v989
  %2479 = vmatmul.mubr.bf16.gmra.mrb[0].mxu0 %v988
  %v2480 = vpop.f32.mrb[0].mxu0
  %v2481 = vadd.f32 %v2361, %v2480
  %v2482 = vpop.f32.mrb[0].mxu0
  %v2483 = vpop.f32.mrb[0].mxu0
  %v2484 = vadd.f32 %v2364, %v2483
  %v2485 = vpop.f32.mrb[0].mxu0
  %2486 = vmatprep.mubr.bf16.mxu0 %v1005
  %2487 = vmatmul.mubr.bf16.gmra.mrb[0].mxu0 %v1004
  %v2488 = vpop.f32.mrb[0].mxu0
  %v2489 = vadd.f32 %v2369, %v2488
  %v2490 = vpop.f32.mrb[0].mxu0
  %v2491 = vpop.f32.mrb[0].mxu0
  %v2492 = vadd.f32 %v2372, %v2491
  %v2493 = vpop.f32.mrb[0].mxu0
  %2494 = vmatprep.mubr.bf16.mxu0 %v1021
  %2495 = vmatmul.mubr.bf16.gmra.mrb[0].mxu0 %v1020
  %v2496 = vpop.f32.mrb[0].mxu0
  %v2497 = vadd.f32 %v2377, %v2496
  %v2498 = vpop.f32.mrb[0].mxu0
  %v2499 = vpop.f32.mrb[0].mxu0
  %v2500 = vadd.f32 %v2380, %v2499
  %v2501 = vpop.f32.mrb[0].mxu0
  %2502 = vmatprep.mubr.bf16.mxu0 %v1037
  %2503 = vmatmul.mubr.bf16.gmra.mrb[0].mxu0 %v1036
  %v2504 = vpop.f32.mrb[0].mxu0
  %v2505 = vadd.f32 %v2385, %v2504
  %v2506 = vpop.f32.mrb[0].mxu0
  %v2507 = vpop.f32.mrb[0].mxu0
  %v2508 = vadd.f32 %v2388, %v2507
  %v2509 = vpop.f32.mrb[0].mxu0
  %2510 = vmatprep.mubr.bf16.mxu0 %v1053
  %2511 = vmatmul.mubr.bf16.gmra.mrb[0].mxu0 %v1052
  %v2512 = vpop.f32.mrb[0].mxu0
  %v2513 = vadd.f32 %v2393, %v2512
  %v2514 = vpop.f32.mrb[0].mxu0
  %v2515 = vpop.f32.mrb[0].mxu0
  %v2516 = vadd.f32 %v2396, %v2515
  %v2517 = vpop.f32.mrb[0].mxu0
  %2518 = vmatprep.mubr.bf16.mxu0 %v1069
  %2519 = vmatmul.mubr.bf16.gmra.mrb[0].mxu0 %v1068
  %v2520 = vpop.f32.mrb[0].mxu0
  %v2521 = vadd.f32 %v2401, %v2520
  %v2522 = vpop.f32.mrb[0].mxu0
  %v2523 = vpop.f32.mrb[0].mxu0
  %v2524 = vadd.f32 %v2404, %v2523
  %v2525 = vpop.f32.mrb[0].mxu0
  %2526 = vmatprep.mubr.bf16.mxu0 %v1085
  %2527 = vmatmul.mubr.bf16.gmra.mrb[0].mxu0 %v1084
  %v2528 = vpop.f32.mrb[0].mxu0
  %v2529 = vadd.f32 %v2409, %v2528
  %v2530 = vpop.f32.mrb[0].mxu0
  %v2531 = vpop.f32.mrb[0].mxu0
  %v2532 = vadd.f32 %v2412, %v2531
  %v2533 = vpop.f32.mrb[0].mxu0
  %2534 = vmatprep.mubr.bf16.mxu0 %v1101
  %2535 = vmatmul.mubr.bf16.gmra.mrb[0].mxu0 %v1100
  %v2536 = vpop.f32.mrb[0].mxu0
  %v2537 = vadd.f32 %v2417, %v2536
  %v2538 = vpop.f32.mrb[0].mxu0
  %v2539 = vpop.f32.mrb[0].mxu0
  %v2540 = vadd.f32 %v2420, %v2539
  %v2541 = vpop.f32.mrb[0].mxu0
  %2542 = vmatprep.mubr.bf16.mxu0 %v1117
  %2543 = vmatmul.mubr.bf16.gmra.mrb[0].mxu0 %v1116
  %v2544 = vpop.f32.mrb[0].mxu0
  %v2545 = vadd.f32 %v2425, %v2544
  %v2546 = vpop.f32.mrb[0].mxu0
  %v2547 = vpop.f32.mrb[0].mxu0
  %v2548 = vpop.f32.mrb[0].mxu0
  %2549 = vdwg.mxu0
  %2550 = vmatprep.subr.bf16.mxu0 0
  %2551 = vmatpush1.bf16.msra.mxu0 %v1878
  %2552 = vmatprep.subr.bf16.mxu0 0
  %2553 = vmatpush1.bf16.msra.mxu0 %v1879
  %2554 = vmatprep.subr.bf16.mxu0 0
  %2555 = vmatpush1.bf16.msra.mxu0 %v1880
  %2556 = vmatprep.subr.bf16.mxu0 0
  %2557 = vmatpush1.bf16.msra.mxu0 %v1881
  %2558 = vmatprep.subr.bf16.mxu0 0
  %2559 = vmatpush1.bf16.msra.mxu0 %v1882
  %2560 = vmatprep.subr.bf16.mxu0 0
  %2561 = vmatpush1.bf16.msra.mxu0 %v1883
  %2562 = vmatprep.subr.bf16.mxu0 0
  %2563 = vmatpush1.bf16.msra.mxu0 %v1884
  %2564 = vmatprep.subr.bf16.mxu0 0
  %2565 = vmatpush1.bf16.msra.mxu0 %v1885
  %2566 = vmatprep.subr.bf16.mxu0 0
  %2567 = vmatpush1.bf16.msra.mxu0 %v1886
  %2568 = vmatprep.subr.bf16.mxu0 0
  %2569 = vmatpush1.bf16.msra.mxu0 %v1887
  %2570 = vmatprep.subr.bf16.mxu0 0
  %2571 = vmatpush1.bf16.msra.mxu0 %v1888
  %2572 = vmatprep.subr.bf16.mxu0 0
  %2573 = vmatpush1.bf16.msra.mxu0 %v1889
  %2574 = vmatprep.subr.bf16.mxu0 0
  %2575 = vmatpush1.bf16.msra.mxu0 %v1890
  %2576 = vmatprep.subr.bf16.mxu0 0
  %2577 = vmatpush1.bf16.msra.mxu0 %v1891
  %2578 = vmatprep.subr.bf16.mxu0 0
  %2579 = vmatpush1.bf16.msra.mxu0 %v1892
  %2580 = vmatprep.subr.bf16.mxu0 0
  %2581 = vmatpush1.bf16.msra.mxu0 %v1893
  %2582 = vmatprep.mubr.bf16.mxu0 %v959
  %2583 = vmatmul.mubr.bf16.gmra.mrb[0].mxu0 %v958
  %v2584 = vpop.f32.mrb[0].mxu0
  %v2585 = vadd.f32 %v2465, %v2584
  %v2586 = vpop.f32.mrb[0].mxu0
  %v2587 = vpop.f32.mrb[0].mxu0
  %v2588 = vadd.f32 %v2468, %v2587
  %v2589 = vpop.f32.mrb[0].mxu0
  %2590 = vmatprep.mubr.bf16.mxu0 %v975
  %2591 = vmatmul.mubr.bf16.gmra.mrb[0].mxu0 %v974
  %v2592 = vpop.f32.mrb[0].mxu0
  %v2593 = vadd.f32 %v2473, %v2592
  %v2594 = vpop.f32.mrb[0].mxu0
  %v2595 = vpop.f32.mrb[0].mxu0
  %v2596 = vadd.f32 %v2476, %v2595
  %v2597 = vpop.f32.mrb[0].mxu0
  %2598 = vmatprep.mubr.bf16.mxu0 %v991
  %2599 = vmatmul.mubr.bf16.gmra.mrb[0].mxu0 %v990
  %v2600 = vpop.f32.mrb[0].mxu0
  %v2601 = vadd.f32 %v2481, %v2600
  %v2602 = vpop.f32.mrb[0].mxu0
  %v2603 = vpop.f32.mrb[0].mxu0
  %v2604 = vadd.f32 %v2484, %v2603
  %v2605 = vpop.f32.mrb[0].mxu0
  %2606 = vmatprep.mubr.bf16.mxu0 %v1007
  %2607 = vmatmul.mubr.bf16.gmra.mrb[0].mxu0 %v1006
  %v2608 = vpop.f32.mrb[0].mxu0
  %v2609 = vadd.f32 %v2489, %v2608
  %v2610 = vpop.f32.mrb[0].mxu0
  %v2611 = vpop.f32.mrb[0].mxu0
  %v2612 = vadd.f32 %v2492, %v2611
  %v2613 = vpop.f32.mrb[0].mxu0
  %2614 = vmatprep.mubr.bf16.mxu0 %v1023
  %2615 = vmatmul.mubr.bf16.gmra.mrb[0].mxu0 %v1022
  %v2616 = vpop.f32.mrb[0].mxu0
  %v2617 = vadd.f32 %v2497, %v2616
  %v2618 = vpop.f32.mrb[0].mxu0
  %v2619 = vpop.f32.mrb[0].mxu0
  %v2620 = vadd.f32 %v2500, %v2619
  %v2621 = vpop.f32.mrb[0].mxu0
  %2622 = vmatprep.mubr.bf16.mxu0 %v1039
  %2623 = vmatmul.mubr.bf16.gmra.mrb[0].mxu0 %v1038
  %v2624 = vpop.f32.mrb[0].mxu0
  %v2625 = vadd.f32 %v2505, %v2624
  %v2626 = vpop.f32.mrb[0].mxu0
  %v2627 = vpop.f32.mrb[0].mxu0
  %v2628 = vadd.f32 %v2508, %v2627
  %v2629 = vpop.f32.mrb[0].mxu0
  %2630 = vmatprep.mubr.bf16.mxu0 %v1055
  %2631 = vmatmul.mubr.bf16.gmra.mrb[0].mxu0 %v1054
  %v2632 = vpop.f32.mrb[0].mxu0
  %v2633 = vadd.f32 %v2513, %v2632
  %v2634 = vpop.f32.mrb[0].mxu0
  %v2635 = vpop.f32.mrb[0].mxu0
  %v2636 = vadd.f32 %v2516, %v2635
  %v2637 = vpop.f32.mrb[0].mxu0
  %2638 = vmatprep.mubr.bf16.mxu0 %v1071
  %2639 = vmatmul.mubr.bf16.gmra.mrb[0].mxu0 %v1070
  %v2640 = vpop.f32.mrb[0].mxu0
  %v2641 = vadd.f32 %v2521, %v2640
  %v2642 = vpop.f32.mrb[0].mxu0
  %v2643 = vpop.f32.mrb[0].mxu0
  %v2644 = vadd.f32 %v2524, %v2643
  %v2645 = vpop.f32.mrb[0].mxu0
  %2646 = vmatprep.mubr.bf16.mxu0 %v1087
  %2647 = vmatmul.mubr.bf16.gmra.mrb[0].mxu0 %v1086
  %v2648 = vpop.f32.mrb[0].mxu0
  %v2649 = vadd.f32 %v2529, %v2648
  %v2650 = vpop.f32.mrb[0].mxu0
  %v2651 = vpop.f32.mrb[0].mxu0
  %v2652 = vadd.f32 %v2532, %v2651
  %v2653 = vpop.f32.mrb[0].mxu0
  %2654 = vmatprep.mubr.bf16.mxu0 %v1103
  %2655 = vmatmul.mubr.bf16.gmra.mrb[0].mxu0 %v1102
  %v2656 = vpop.f32.mrb[0].mxu0
  %v2657 = vadd.f32 %v2537, %v2656
  %v2658 = vpop.f32.mrb[0].mxu0
  %v2659 = vpop.f32.mrb[0].mxu0
  %v2660 = vadd.f32 %v2540, %v2659
  %v2661 = vpop.f32.mrb[0].mxu0
  %2662 = vmatprep.mubr.bf16.mxu0 %v1119
  %2663 = vmatmul.mubr.bf16.gmra.mrb[0].mxu0 %v1118
  %v2664 = vpop.f32.mrb[0].mxu0
  %v2665 = vadd.f32 %v2545, %v2664
  %v2666 = vpop.f32.mrb[0].mxu0
  %v2667 = vpop.f32.mrb[0].mxu0
  %v2668 = vpop.f32.mrb[0].mxu0
  %2669 = vdwg.mxu0
  %2670 = vmatprep.subr.bf16.mxu0 0
  %2671 = vmatpush1.bf16.msra.mxu0 %v1894
  %2672 = vmatprep.subr.bf16.mxu0 0
  %2673 = vmatpush1.bf16.msra.mxu0 %v1895
  %2674 = vmatprep.subr.bf16.mxu0 0
  %2675 = vmatpush1.bf16.msra.mxu0 %v1896
  %2676 = vmatprep.subr.bf16.mxu0 0
  %2677 = vmatpush1.bf16.msra.mxu0 %v1897
  %2678 = vmatprep.subr.bf16.mxu0 0
  %2679 = vmatpush1.bf16.msra.mxu0 %v1898
  %2680 = vmatprep.subr.bf16.mxu0 0
  %2681 = vmatpush1.bf16.msra.mxu0 %v1899
  %2682 = vmatprep.subr.bf16.mxu0 0
  %2683 = vmatpush1.bf16.msra.mxu0 %v1900
  %2684 = vmatprep.subr.bf16.mxu0 0
  %2685 = vmatpush1.bf16.msra.mxu0 %v1901
  %2686 = vmatprep.subr.bf16.mxu0 0
  %2687 = vmatpush1.bf16.msra.mxu0 %v1902
  %2688 = vmatprep.subr.bf16.mxu0 0
  %2689 = vmatpush1.bf16.msra.mxu0 %v1903
  %2690 = vmatprep.subr.bf16.mxu0 0
  %2691 = vmatpush1.bf16.msra.mxu0 %v1904
  %2692 = vmatprep.subr.bf16.mxu0 0
  %2693 = vmatpush1.bf16.msra.mxu0 %v1905
  %2694 = vmatprep.subr.bf16.mxu0 0
  %2695 = vmatpush1.bf16.msra.mxu0 %v1906
  %2696 = vmatprep.subr.bf16.mxu0 0
  %2697 = vmatpush1.bf16.msra.mxu0 %v1907
  %2698 = vmatprep.subr.bf16.mxu0 0
  %2699 = vmatpush1.bf16.msra.mxu0 %v1908
  %2700 = vmatprep.subr.bf16.mxu0 0
  %2701 = vmatpush1.bf16.msra.mxu0 %v1909
  %2702 = vmatprep.mubr.bf16.mxu0 %v961
  %2703 = vmatmul.mubr.bf16.gmra.mrb[0].mxu0 %v960
  %v2704 = vpop.f32.mrb[0].mxu0
  %v2705 = vadd.f32 %v2585, %v2704
  %v2706 = vpop.f32.mrb[0].mxu0
  %v2707 = vpop.f32.mrb[0].mxu0
  %v2708 = vadd.f32 %v2588, %v2707
  %v2709 = vpop.f32.mrb[0].mxu0
  %2710 = vmatprep.mubr.bf16.mxu0 %v977
  %2711 = vmatmul.mubr.bf16.gmra.mrb[0].mxu0 %v976
  %v2712 = vpop.f32.mrb[0].mxu0
  %v2713 = vadd.f32 %v2593, %v2712
  %v2714 = vpop.f32.mrb[0].mxu0
  %v2715 = vpop.f32.mrb[0].mxu0
  %v2716 = vadd.f32 %v2596, %v2715
  %v2717 = vpop.f32.mrb[0].mxu0
  %2718 = vmatprep.mubr.bf16.mxu0 %v993
  %2719 = vmatmul.mubr.bf16.gmra.mrb[0].mxu0 %v992
  %v2720 = vpop.f32.mrb[0].mxu0
  %v2721 = vadd.f32 %v2601, %v2720
  %v2722 = vpop.f32.mrb[0].mxu0
  %v2723 = vpop.f32.mrb[0].mxu0
  %v2724 = vadd.f32 %v2604, %v2723
  %v2725 = vpop.f32.mrb[0].mxu0
  %2726 = vmatprep.mubr.bf16.mxu0 %v1009
  %2727 = vmatmul.mubr.bf16.gmra.mrb[0].mxu0 %v1008
  %v2728 = vpop.f32.mrb[0].mxu0
  %v2729 = vadd.f32 %v2609, %v2728
  %v2730 = vpop.f32.mrb[0].mxu0
  %v2731 = vpop.f32.mrb[0].mxu0
  %v2732 = vadd.f32 %v2612, %v2731
  %v2733 = vpop.f32.mrb[0].mxu0
  %2734 = vmatprep.mubr.bf16.mxu0 %v1025
  %2735 = vmatmul.mubr.bf16.gmra.mrb[0].mxu0 %v1024
  %v2736 = vpop.f32.mrb[0].mxu0
  %v2737 = vadd.f32 %v2617, %v2736
  %v2738 = vpop.f32.mrb[0].mxu0
  %v2739 = vpop.f32.mrb[0].mxu0
  %v2740 = vadd.f32 %v2620, %v2739
  %v2741 = vpop.f32.mrb[0].mxu0
  %2742 = vmatprep.mubr.bf16.mxu0 %v1041
  %2743 = vmatmul.mubr.bf16.gmra.mrb[0].mxu0 %v1040
  %v2744 = vpop.f32.mrb[0].mxu0
  %v2745 = vadd.f32 %v2625, %v2744
  %v2746 = vpop.f32.mrb[0].mxu0
  %v2747 = vpop.f32.mrb[0].mxu0
  %v2748 = vadd.f32 %v2628, %v2747
  %v2749 = vpop.f32.mrb[0].mxu0
  %2750 = vmatprep.mubr.bf16.mxu0 %v1057
  %2751 = vmatmul.mubr.bf16.gmra.mrb[0].mxu0 %v1056
  %v2752 = vpop.f32.mrb[0].mxu0
  %v2753 = vadd.f32 %v2633, %v2752
  %v2754 = vpop.f32.mrb[0].mxu0
  %v2755 = vpop.f32.mrb[0].mxu0
  %v2756 = vadd.f32 %v2636, %v2755
  %v2757 = vpop.f32.mrb[0].mxu0
  %2758 = vmatprep.mubr.bf16.mxu0 %v1073
  %2759 = vmatmul.mubr.bf16.gmra.mrb[0].mxu0 %v1072
  %v2760 = vpop.f32.mrb[0].mxu0
  %v2761 = vadd.f32 %v2641, %v2760
  %v2762 = vpop.f32.mrb[0].mxu0
  %v2763 = vpop.f32.mrb[0].mxu0
  %v2764 = vadd.f32 %v2644, %v2763
  %v2765 = vpop.f32.mrb[0].mxu0
  %2766 = vmatprep.mubr.bf16.mxu0 %v1089
  %2767 = vmatmul.mubr.bf16.gmra.mrb[0].mxu0 %v1088
  %v2768 = vpop.f32.mrb[0].mxu0
  %v2769 = vadd.f32 %v2649, %v2768
  %v2770 = vpop.f32.mrb[0].mxu0
  %v2771 = vpop.f32.mrb[0].mxu0
  %v2772 = vadd.f32 %v2652, %v2771
  %v2773 = vpop.f32.mrb[0].mxu0
  %2774 = vmatprep.mubr.bf16.mxu0 %v1105
  %2775 = vmatmul.mubr.bf16.gmra.mrb[0].mxu0 %v1104
  %v2776 = vpop.f32.mrb[0].mxu0
  %v2777 = vadd.f32 %v2657, %v2776
  %v2778 = vpop.f32.mrb[0].mxu0
  %v2779 = vpop.f32.mrb[0].mxu0
  %v2780 = vadd.f32 %v2660, %v2779
  %v2781 = vpop.f32.mrb[0].mxu0
  %2782 = vmatprep.mubr.bf16.mxu0 %v1121
  %2783 = vmatmul.mubr.bf16.gmra.mrb[0].mxu0 %v1120
  %v2784 = vpop.f32.mrb[0].mxu0
  %v2785 = vadd.f32 %v2665, %v2784
  %v2786 = vpop.f32.mrb[0].mxu0
  %v2787 = vpop.f32.mrb[0].mxu0
  %v2788 = vpop.f32.mrb[0].mxu0
  %2789 = vdwg.mxu0
  %2790 = vmatprep.subr.bf16.mxu0 0
  %2791 = vmatpush1.bf16.msra.mxu0 %v1910
  %2792 = vmatprep.subr.bf16.mxu0 0
  %2793 = vmatpush1.bf16.msra.mxu0 %v1911
  %2794 = vmatprep.subr.bf16.mxu0 0
  %2795 = vmatpush1.bf16.msra.mxu0 %v1912
  %2796 = vmatprep.subr.bf16.mxu0 0
  %2797 = vmatpush1.bf16.msra.mxu0 %v1913
  %2798 = vmatprep.subr.bf16.mxu0 0
  %2799 = vmatpush1.bf16.msra.mxu0 %v1914
  %2800 = vmatprep.subr.bf16.mxu0 0
  %2801 = vmatpush1.bf16.msra.mxu0 %v1915
  %2802 = vmatprep.subr.bf16.mxu0 0
  %2803 = vmatpush1.bf16.msra.mxu0 %v1916
  %2804 = vmatprep.subr.bf16.mxu0 0
  %2805 = vmatpush1.bf16.msra.mxu0 %v1917
  %2806 = vmatprep.subr.bf16.mxu0 0
  %2807 = vmatpush1.bf16.msra.mxu0 %v1918
  %2808 = vmatprep.subr.bf16.mxu0 0
  %2809 = vmatpush1.bf16.msra.mxu0 %v1919
  %2810 = vmatprep.subr.bf16.mxu0 0
  %2811 = vmatpush1.bf16.msra.mxu0 %v1920
  %2812 = vmatprep.subr.bf16.mxu0 0
  %2813 = vmatpush1.bf16.msra.mxu0 %v1921
  %2814 = vmatprep.subr.bf16.mxu0 0
  %2815 = vmatpush1.bf16.msra.mxu0 %v1922
  %2816 = vmatprep.subr.bf16.mxu0 0
  %2817 = vmatpush1.bf16.msra.mxu0 %v1923
  %2818 = vmatprep.subr.bf16.mxu0 0
  %2819 = vmatpush1.bf16.msra.mxu0 %v1924
  %2820 = vmatprep.subr.bf16.mxu0 0
  %2821 = vmatpush1.bf16.msra.mxu0 %v1925
  %2822 = vmatprep.mubr.bf16.mxu0 %v963
  %2823 = vmatmul.mubr.bf16.gmra.mrb[0].mxu0 %v962
  %v2824 = vpop.f32.mrb[0].mxu0
  %v2825 = vadd.f32 %v2705, %v2824
  %v2826 = vpop.f32.mrb[0].mxu0
  %v2827 = vpop.f32.mrb[0].mxu0
  %v2828 = vadd.f32 %v2708, %v2827
  %v2829 = vpop.f32.mrb[0].mxu0
  %2830 = vmatprep.mubr.bf16.mxu0 %v979
  %2831 = vmatmul.mubr.bf16.gmra.mrb[0].mxu0 %v978
  %v2832 = vpop.f32.mrb[0].mxu0
  %v2833 = vadd.f32 %v2713, %v2832
  %v2834 = vpop.f32.mrb[0].mxu0
  %v2835 = vpop.f32.mrb[0].mxu0
  %v2836 = vadd.f32 %v2716, %v2835
  %v2837 = vpop.f32.mrb[0].mxu0
  %2838 = vmatprep.mubr.bf16.mxu0 %v995
  %2839 = vmatmul.mubr.bf16.gmra.mrb[0].mxu0 %v994
  %v2840 = vpop.f32.mrb[0].mxu0
  %v2841 = vadd.f32 %v2721, %v2840
  %v2842 = vpop.f32.mrb[0].mxu0
  %v2843 = vpop.f32.mrb[0].mxu0
  %v2844 = vadd.f32 %v2724, %v2843
  %v2845 = vpop.f32.mrb[0].mxu0
  %2846 = vmatprep.mubr.bf16.mxu0 %v1011
  %2847 = vmatmul.mubr.bf16.gmra.mrb[0].mxu0 %v1010
  %v2848 = vpop.f32.mrb[0].mxu0
  %v2849 = vadd.f32 %v2729, %v2848
  %v2850 = vpop.f32.mrb[0].mxu0
  %v2851 = vpop.f32.mrb[0].mxu0
  %v2852 = vadd.f32 %v2732, %v2851
  %v2853 = vpop.f32.mrb[0].mxu0
  %2854 = vmatprep.mubr.bf16.mxu0 %v1027
  %2855 = vmatmul.mubr.bf16.gmra.mrb[0].mxu0 %v1026
  %v2856 = vpop.f32.mrb[0].mxu0
  %v2857 = vadd.f32 %v2737, %v2856
  %v2858 = vpop.f32.mrb[0].mxu0
  %v2859 = vpop.f32.mrb[0].mxu0
  %v2860 = vadd.f32 %v2740, %v2859
  %v2861 = vpop.f32.mrb[0].mxu0
  %2862 = vmatprep.mubr.bf16.mxu0 %v1043
  %2863 = vmatmul.mubr.bf16.gmra.mrb[0].mxu0 %v1042
  %v2864 = vpop.f32.mrb[0].mxu0
  %v2865 = vadd.f32 %v2745, %v2864
  %v2866 = vpop.f32.mrb[0].mxu0
  %v2867 = vpop.f32.mrb[0].mxu0
  %v2868 = vadd.f32 %v2748, %v2867
  %v2869 = vpop.f32.mrb[0].mxu0
  %2870 = vmatprep.mubr.bf16.mxu0 %v1059
  %2871 = vmatmul.mubr.bf16.gmra.mrb[0].mxu0 %v1058
  %v2872 = vpop.f32.mrb[0].mxu0
  %v2873 = vadd.f32 %v2753, %v2872
  %v2874 = vpop.f32.mrb[0].mxu0
  %v2875 = vpop.f32.mrb[0].mxu0
  %v2876 = vadd.f32 %v2756, %v2875
  %v2877 = vpop.f32.mrb[0].mxu0
  %2878 = vmatprep.mubr.bf16.mxu0 %v1075
  %2879 = vmatmul.mubr.bf16.gmra.mrb[0].mxu0 %v1074
  %v2880 = vpop.f32.mrb[0].mxu0
  %v2881 = vadd.f32 %v2761, %v2880
  %v2882 = vpop.f32.mrb[0].mxu0
  %v2883 = vpop.f32.mrb[0].mxu0
  %v2884 = vadd.f32 %v2764, %v2883
  %v2885 = vpop.f32.mrb[0].mxu0
  %2886 = vmatprep.mubr.bf16.mxu0 %v1091
  %2887 = vmatmul.mubr.bf16.gmra.mrb[0].mxu0 %v1090
  %v2888 = vpop.f32.mrb[0].mxu0
  %v2889 = vadd.f32 %v2769, %v2888
  %v2890 = vpop.f32.mrb[0].mxu0
  %v2891 = vpop.f32.mrb[0].mxu0
  %v2892 = vadd.f32 %v2772, %v2891
  %v2893 = vpop.f32.mrb[0].mxu0
  %2894 = vmatprep.mubr.bf16.mxu0 %v1107
  %2895 = vmatmul.mubr.bf16.gmra.mrb[0].mxu0 %v1106
  %v2896 = vpop.f32.mrb[0].mxu0
  %v2897 = vadd.f32 %v2777, %v2896
  %v2898 = vpop.f32.mrb[0].mxu0
  %v2899 = vpop.f32.mrb[0].mxu0
  %v2900 = vadd.f32 %v2780, %v2899
  %v2901 = vpop.f32.mrb[0].mxu0
  %2902 = vmatprep.mubr.bf16.mxu0 %v1123
  %2903 = vmatmul.mubr.bf16.gmra.mrb[0].mxu0 %v1122
  %v2904 = vpop.f32.mrb[0].mxu0
  %v2905 = vadd.f32 %v2785, %v2904
  %v2906 = vpop.f32.mrb[0].mxu0
  %v2907 = vpop.f32.mrb[0].mxu0
  %v2908 = vpop.f32.mrb[0].mxu0
  %2909 = vdwg.mxu0
  %2910 = vmatprep.subr.bf16.mxu0 0
  %2911 = vmatpush1.bf16.msra.mxu0 %v1926
  %2912 = vmatprep.subr.bf16.mxu0 0
  %2913 = vmatpush1.bf16.msra.mxu0 %v1927
  %2914 = vmatprep.subr.bf16.mxu0 0
  %2915 = vmatpush1.bf16.msra.mxu0 %v1928
  %2916 = vmatprep.subr.bf16.mxu0 0
  %2917 = vmatpush1.bf16.msra.mxu0 %v1929
  %2918 = vmatprep.subr.bf16.mxu0 0
  %2919 = vmatpush1.bf16.msra.mxu0 %v1930
  %2920 = vmatprep.subr.bf16.mxu0 0
  %2921 = vmatpush1.bf16.msra.mxu0 %v1931
  %2922 = vmatprep.subr.bf16.mxu0 0
  %2923 = vmatpush1.bf16.msra.mxu0 %v1932
  %2924 = vmatprep.subr.bf16.mxu0 0
  %2925 = vmatpush1.bf16.msra.mxu0 %v1933
  %2926 = vmatprep.subr.bf16.mxu0 0
  %2927 = vmatpush1.bf16.msra.mxu0 %v1934
  %2928 = vmatprep.subr.bf16.mxu0 0
  %2929 = vmatpush1.bf16.msra.mxu0 %v1935
  %2930 = vmatprep.subr.bf16.mxu0 0
  %2931 = vmatpush1.bf16.msra.mxu0 %v1936
  %2932 = vmatprep.subr.bf16.mxu0 0
  %2933 = vmatpush1.bf16.msra.mxu0 %v1937
  %2934 = vmatprep.subr.bf16.mxu0 0
  %2935 = vmatpush1.bf16.msra.mxu0 %v1938
  %2936 = vmatprep.subr.bf16.mxu0 0
  %2937 = vmatpush1.bf16.msra.mxu0 %v1939
  %2938 = vmatprep.subr.bf16.mxu0 0
  %2939 = vmatpush1.bf16.msra.mxu0 %v1940
  %2940 = vmatprep.subr.bf16.mxu0 0
  %2941 = vmatpush1.bf16.msra.mxu0 %v1941
  %2942 = vmatprep.mubr.bf16.mxu0 %v965
  %2943 = vmatmul.mubr.bf16.gmra.mrb[0].mxu0 %v964
  %v2944 = vpop.f32.mrb[0].mxu0
  %v2945 = vadd.f32 %v2825, %v2944
  %v2946 = vpop.f32.mrb[0].mxu0
  %v2947 = vpop.f32.mrb[0].mxu0
  %v2948 = vadd.f32 %v2828, %v2947
  %v2949 = vpop.f32.mrb[0].mxu0
  %2950 = vmatprep.mubr.bf16.mxu0 %v981
  %2951 = vmatmul.mubr.bf16.gmra.mrb[0].mxu0 %v980
  %v2952 = vpop.f32.mrb[0].mxu0
  %v2953 = vadd.f32 %v2833, %v2952
  %v2954 = vpop.f32.mrb[0].mxu0
  %v2955 = vpop.f32.mrb[0].mxu0
  %v2956 = vadd.f32 %v2836, %v2955
  %v2957 = vpop.f32.mrb[0].mxu0
  %2958 = vmatprep.mubr.bf16.mxu0 %v997
  %2959 = vmatmul.mubr.bf16.gmra.mrb[0].mxu0 %v996
  %v2960 = vpop.f32.mrb[0].mxu0
  %v2961 = vadd.f32 %v2841, %v2960
  %v2962 = vpop.f32.mrb[0].mxu0
  %v2963 = vpop.f32.mrb[0].mxu0
  %v2964 = vadd.f32 %v2844, %v2963
  %v2965 = vpop.f32.mrb[0].mxu0
  %2966 = vmatprep.mubr.bf16.mxu0 %v1013
  %2967 = vmatmul.mubr.bf16.gmra.mrb[0].mxu0 %v1012
  %v2968 = vpop.f32.mrb[0].mxu0
  %v2969 = vadd.f32 %v2849, %v2968
  %v2970 = vpop.f32.mrb[0].mxu0
  %v2971 = vpop.f32.mrb[0].mxu0
  %v2972 = vadd.f32 %v2852, %v2971
  %v2973 = vpop.f32.mrb[0].mxu0
  %2974 = vmatprep.mubr.bf16.mxu0 %v1029
  %2975 = vmatmul.mubr.bf16.gmra.mrb[0].mxu0 %v1028
  %v2976 = vpop.f32.mrb[0].mxu0
  %v2977 = vadd.f32 %v2857, %v2976
  %v2978 = vpop.f32.mrb[0].mxu0
  %v2979 = vpop.f32.mrb[0].mxu0
  %v2980 = vadd.f32 %v2860, %v2979
  %v2981 = vpop.f32.mrb[0].mxu0
  %2982 = vmatprep.mubr.bf16.mxu0 %v1045
  %2983 = vmatmul.mubr.bf16.gmra.mrb[0].mxu0 %v1044
  %v2984 = vpop.f32.mrb[0].mxu0
  %v2985 = vadd.f32 %v2865, %v2984
  %v2986 = vpop.f32.mrb[0].mxu0
  %v2987 = vpop.f32.mrb[0].mxu0
  %v2988 = vadd.f32 %v2868, %v2987
  %v2989 = vpop.f32.mrb[0].mxu0
  %2990 = vmatprep.mubr.bf16.mxu0 %v1061
  %2991 = vmatmul.mubr.bf16.gmra.mrb[0].mxu0 %v1060
  %v2992 = vpop.f32.mrb[0].mxu0
  %v2993 = vadd.f32 %v2873, %v2992
  %v2994 = vpop.f32.mrb[0].mxu0
  %v2995 = vpop.f32.mrb[0].mxu0
  %v2996 = vadd.f32 %v2876, %v2995
  %v2997 = vpop.f32.mrb[0].mxu0
  %2998 = vmatprep.mubr.bf16.mxu0 %v1077
  %2999 = vmatmul.mubr.bf16.gmra.mrb[0].mxu0 %v1076
  %v3000 = vpop.f32.mrb[0].mxu0
  %v3001 = vadd.f32 %v2881, %v3000
  %v3002 = vpop.f32.mrb[0].mxu0
  %v3003 = vpop.f32.mrb[0].mxu0
  %v3004 = vadd.f32 %v2884, %v3003
  %v3005 = vpop.f32.mrb[0].mxu0
  %3006 = vmatprep.mubr.bf16.mxu0 %v1093
  %3007 = vmatmul.mubr.bf16.gmra.mrb[0].mxu0 %v1092
  %v3008 = vpop.f32.mrb[0].mxu0
  %v3009 = vadd.f32 %v2889, %v3008
  %v3010 = vpop.f32.mrb[0].mxu0
  %v3011 = vpop.f32.mrb[0].mxu0
  %v3012 = vadd.f32 %v2892, %v3011
  %v3013 = vpop.f32.mrb[0].mxu0
  %3014 = vmatprep.mubr.bf16.mxu0 %v1109
  %3015 = vmatmul.mubr.bf16.gmra.mrb[0].mxu0 %v1108
  %v3016 = vpop.f32.mrb[0].mxu0
  %v3017 = vadd.f32 %v2897, %v3016
  %v3018 = vpop.f32.mrb[0].mxu0
  %v3019 = vpop.f32.mrb[0].mxu0
  %v3020 = vadd.f32 %v2900, %v3019
  %v3021 = vpop.f32.mrb[0].mxu0
  %3022 = vmatprep.mubr.bf16.mxu0 %v1125
  %3023 = vmatmul.mubr.bf16.gmra.mrb[0].mxu0 %v1124
  %v3024 = vpop.f32.mrb[0].mxu0
  %v3025 = vadd.f32 %v2905, %v3024
  %v3026 = vpop.f32.mrb[0].mxu0
  %v3027 = vpop.f32.mrb[0].mxu0
  %v3028 = vpop.f32.mrb[0].mxu0
  %3029 = vdwg.mxu0
  %v3030 = vmax.f32 %v2945, 0.0
  %v3031 = vmax.f32 %v2948, 0.0
  %v3032 = vmax.f32 %v2953, 0.0
  %v3033 = vmax.f32 %v2956, 0.0
  %v3034 = vmax.f32 %v2961, 0.0
  %v3035 = vmax.f32 %v2964, 0.0
  %v3036 = vmax.f32 %v2969, 0.0
  %v3037 = vmax.f32 %v2972, 0.0
  %v3038 = vmax.f32 %v2977, 0.0
  %v3039 = vmax.f32 %v2980, 0.0
  %v3040 = vmax.f32 %v2985, 0.0
  %v3041 = vmax.f32 %v2988, 0.0
  %v3042 = vmax.f32 %v2993, 0.0
  %v3043 = vmax.f32 %v2996, 0.0
  %v3044 = vmax.f32 %v3001, 0.0
  %v3045 = vmax.f32 %v3004, 0.0
  %v3046 = vmax.f32 %v3009, 0.0
  %v3047 = vmax.f32 %v3012, 0.0
  %v3048 = vmax.f32 %v3017, 0.0
  %v3049 = vmax.f32 %v3020, 0.0
  %v3050 = vmax.f32 %v3025, 0.0
  %v3051 = vpack.c.bf16 %v3031, %v3030
  %v3052 = vpack.c.bf16 %v3033, %v3032
  %v3053 = vpack.c.bf16 %v3035, %v3034
  %v3054 = vpack.c.bf16 %v3037, %v3036
  %v3055 = vpack.c.bf16 %v3039, %v3038
  %v3056 = vpack.c.bf16 %v3041, %v3040
  %v3057 = vpack.c.bf16 %v3043, %v3042
  %v3058 = vpack.c.bf16 %v3045, %v3044
  %v3059 = vpack.c.bf16 %v3047, %v3046
  %v3060 = vpack.c.bf16 %v3049, %v3048
  %v3061 = vpack.c.bf16 %v3050, %v3050
  %v3073 = vunpack.c.l.b16 %v3051
  %v3074 = vunpack.c.h.b16 %v3051
  %v3075 = vunpack.c.l.b16 %v3052
  %v3076 = vunpack.c.h.b16 %v3052
  %v3077 = vunpack.c.l.b16 %v3053
  %v3078 = vunpack.c.h.b16 %v3053
  %v3079 = vunpack.c.l.b16 %v3054
  %v3080 = vunpack.c.h.b16 %v3054
  %v3081 = vunpack.c.l.b16 %v3055
  %v3082 = vunpack.c.h.b16 %v3055
  %v3083 = vunpack.c.l.b16 %v3056
  %v3084 = vunpack.c.h.b16 %v3056
  %v3085 = vunpack.c.l.b16 %v3057
  %v3086 = vunpack.c.h.b16 %v3057
  %v3087 = vunpack.c.l.b16 %v3058
  %v3088 = vunpack.c.h.b16 %v3058
  %v3089 = vunpack.c.l.b16 %v3059
  %v3090 = vunpack.c.h.b16 %v3059
  %v3091 = vunpack.c.l.b16 %v3060
  %v3092 = vunpack.c.h.b16 %v3060
  %v3093 = vunpack.c.l.b16 %v3061
  %v3094 = vpack.c.b16 %v3073, %v3073
  %v3095 = vpack.c.b16 %v3074, %v3074
  %v3096 = vpack.c.b16 %v3075, %v3075
  %v3097 = vpack.c.b16 %v3076, %v3076
  %v3098 = vpack.c.b16 %v3077, %v3077
  %v3099 = vpack.c.b16 %v3078, %v3078
  %v3100 = vpack.c.b16 %v3079, %v3079
  %v3101 = vpack.c.b16 %v3080, %v3080
  %v3102 = vpack.c.b16 %v3081, %v3081
  %v3103 = vpack.c.b16 %v3082, %v3082
  %v3104 = vpack.c.b16 %v3083, %v3083
  %v3105 = vpack.c.b16 %v3084, %v3084
  %v3106 = vpack.c.b16 %v3085, %v3085
  %v3107 = vpack.c.b16 %v3086, %v3086
  %v3108 = vpack.c.b16 %v3087, %v3087
  %v3109 = vpack.c.b16 %v3088, %v3088
  %v3110 = vpack.c.b16 %v3089, %v3089
  %v3111 = vpack.c.b16 %v3090, %v3090
  %v3112 = vpack.c.b16 %v3091, %v3091
  %v3113 = vpack.c.b16 %v3092, %v3092
  %v3114 = vpack.c.b16 %v3093, %v3093
  %3136 = vst [vmem:[%s3] sm:$0xf] %v3094
  %3137 = vst [vmem:[%s3 + $0x4] sm:$0xf] %v3095
  %3138 = vst [vmem:[%s3 + $0x8] sm:$0xf] %v3096
  %3139 = vst [vmem:[%s3 + $0xc] sm:$0xf] %v3097
  %3140 = vst [vmem:[%s3 + $0x10] sm:$0xf] %v3098
  %3141 = vst [vmem:[%s3 + $0x14] sm:$0xf] %v3099
  %3142 = vst [vmem:[%s3 + $0x18] sm:$0xf] %v3100
  %3143 = vst [vmem:[%s3 + $0x1c] sm:$0xf] %v3101
  %3144 = vst [vmem:[%s3 + $0x20] sm:$0xf] %v3102
  %3145 = vst [vmem:[%s3 + $0x24] sm:$0xf] %v3103
  %3146 = vst [vmem:[%s3 + $0x28] sm:$0xf] %v3104
  %3147 = vst [vmem:[%s3 + $0x2c] sm:$0xf] %v3105
  %3148 = vst [vmem:[%s3 + $0x30] sm:$0xf] %v3106
  %3149 = vst [vmem:[%s3 + $0x34] sm:$0xf] %v3107
  %3150 = vst [vmem:[%s3 + $0x38] sm:$0xf] %v3108
  %3151 = vst [vmem:[%s3 + $0x3c] sm:$0xf] %v3109
  %3152 = vst [vmem:[%s3 + $0x40] sm:$0xf] %v3110
  %3153 = vst [vmem:[%s3 + $0x44] sm:$0xf] %v3111
  %3154 = vst [vmem:[%s3 + $0x48] sm:$0xf] %v3112
  %3155 = vst [vmem:[%s3 + $0x4c] sm:$0xf] %v3113
  %3156 = vst [vmem:[%s3 + $0x50] sm:$0x1] %v3114
  // Predicated region
  $region14: #{dqn_forward.4} parent=0 // pred_check
    _
  $region15: #{dqn_forward.4} parent=0 // pred_check_branch
    %3158 = sbr.rel (0) target = $region17
  $region16: #{dqn_forward.4} parent=0 // pred_region
    _
  $region17: #{dqn_forward.4} parent=0 // pred_fallthru
    _
  // Predicated region
  $region18: #{dqn_forward.4} parent=0 // pred_check
    _
  $region19: #{dqn_forward.4} parent=0 // pred_check_branch
    %3160 = sbr.rel (0) target = $region21
  $region20: #{dqn_forward.4} parent=0 // pred_region
    _
  $region21: #{dqn_forward.4} parent=0 // pred_fallthru
    _

// kernel: dqn_forward.5
$region0: #{dqn_forward.5}
  #allocation0 [shape = 'u32[]', space=smem, size = 0x4, offset = 0x4, fixed_abs, tag = 'smem constant byte address 0x4 - core index']
  #allocation1 [shape = 'u32[144,128]{1,0:T(1,128)}', space=vmem, size = 0x12000, scoped, tag = 'internal scratch']
  #allocation2 [shape = 'f32[8,512]{1,0:T(8,128)}', space=vmem, size = 0x4000, scoped, tag = 'scratch operand']
  %s0 = inlined_call_operand.vmem [shape: bf16[49,8,1152], index: 0, kind: input, shape index: {}]
  %s1 = inlined_call_operand.vmem [shape: bf16[1152,64], index: 1, kind: input, shape index: {}]
  %s2 = inlined_call_operand.vmem [shape: f32[1,64], index: 2, kind: input, shape index: {}]
  %s3 = inlined_call_operand.vmem [shape: bf16[49,64,512], index: 3, kind: input, shape index: {}]
  %s4 = inlined_call_operand.vmem [shape: f32[1,512], index: 4, kind: input, shape index: {}]
  %s5 = inlined_call_operand.vmem [shape: bf16[512,128], index: 5, kind: input, shape index: {}]
  %s6 = inlined_call_operand.vmem [shape: f32[1,128], index: 6, kind: input, shape index: {}]
  %s7 = inlined_call_operand.vmem [shape: f32[8,128], index: 7, kind: output, shape index: {}]
  %s8 = sld [smem:[#allocation0]]
  $region45: #{dqn_forward.5} parent=0
    _
  %s10 = ssub.s32 1, %s8
  %s11 = scalar_select 0, %s10, %s8
  // Predicated region
  $region2: #{dqn_forward.5} parent=0 // pred_check
    _
  $region3: #{dqn_forward.5} parent=0 // pred_check_branch
    %13 = sbr.rel (0) target = $region5
  $region4: #{dqn_forward.5} parent=0 // pred_region
    _
  $region5: #{dqn_forward.5} parent=0 // pred_fallthru
    _
  // Predicated region
  $region6: #{dqn_forward.5} parent=0 // pred_check
    _
  $region7: #{dqn_forward.5} parent=0 // pred_check_branch
    %15 = sbr.rel (0) target = $region9
  $region8: #{dqn_forward.5} parent=0 // pred_region
    _
  $region9: #{dqn_forward.5} parent=0 // pred_fallthru
    _
  // Predicated region
  $region10: #{dqn_forward.5} parent=0 // pred_check
    _
  $region11: #{dqn_forward.5} parent=0 // pred_check_branch
    %17 = sbr.rel (0) target = $region13
  $region12: #{dqn_forward.5} parent=0 // pred_region
    _
  $region13: #{dqn_forward.5} parent=0 // pred_fallthru
    _
  // Predicated region
  $region14: #{dqn_forward.5} parent=0 // pred_check
    _
  $region15: #{dqn_forward.5} parent=0 // pred_check_branch
    %19 = sbr.rel (0) target = $region17
  $region16: #{dqn_forward.5} parent=0 // pred_region
    _
  $region17: #{dqn_forward.5} parent=0 // pred_fallthru
    _
  // Predicated region
  $region18: #{dqn_forward.5} parent=0 // pred_check
    _
  $region19: #{dqn_forward.5} parent=0 // pred_check_branch
    %21 = sbr.rel (0) target = $region21
  $region20: #{dqn_forward.5} parent=0 // pred_region
    _
  $region21: #{dqn_forward.5} parent=0 // pred_fallthru
    _
  // Predicated region
  $region22: #{dqn_forward.5} parent=0 // pred_check
    _
  $region23: #{dqn_forward.5} parent=0 // pred_check_branch
    %23 = sbr.rel (0) target = $region25
  $region24: #{dqn_forward.5} parent=0 // pred_region
    _
  $region25: #{dqn_forward.5} parent=0 // pred_fallthru
    _
  // Predicated region
  $region26: #{dqn_forward.5} parent=0 // pred_check
    _
  $region27: #{dqn_forward.5} parent=0 // pred_check_branch
    %25 = sbr.rel (0) target = $region29
  $region28: #{dqn_forward.5} parent=0 // pred_region
    _
  $region29: #{dqn_forward.5} parent=0 // pred_fallthru
    _
  %27 = vst [vmem:[#allocation2] sm:$0xff] 0.0
  %28 = vst [vmem:[#allocation2 + $0x8] sm:$0xff] 0.0
  %29 = vst [vmem:[#allocation2 + $0x10] sm:$0xff] 0.0
  %30 = vst [vmem:[#allocation2 + $0x18] sm:$0xff] 0.0
  loop: start=0, step=1, limit=49
  $region30: #{dqn_forward.5} parent=0 // loop_pre_header
    _
  $region31: #{dqn_forward.5} parent=0 // loop_header
    %s32 = sphi 0, %s36
    %p33 = scmp.ge.s32.totalorder %s32, 49
  $region32: #{dqn_forward.5} parent=0 // loop_header_branch
    %35 = sbr.rel (%p33) target = $region36
  $region33: #{dqn_forward.5} parent=0 // loop_body
    %s37 = smul.u32 %s32, 9
    %s38 = smul.addr %s37, 4
    %s39 = scalar_lea.vmem %s0, %s38
    %v40 = vld [vmem:[%s39] sm:$0xff]
    %v41 = vld [vmem:[%s39 + $0x8] sm:$0xff]
    %v42 = vld [vmem:[%s39 + $0x10] sm:$0xff]
    %v43 = vld [vmem:[%s39 + $0x18] sm:$0xff]
    %v44 = vld [vmem:[%s39 + $0x20] sm:$0xf]
    %v45 = vld [vmem:[%s1] sm:$0xf]
    %v46 = vld [vmem:[%s1 + $0x4] sm:$0xf]
    %v47 = vld [vmem:[%s1 + $0x8] sm:$0xf]
    %v48 = vld [vmem:[%s1 + $0xc] sm:$0xf]
    %v49 = vld [vmem:[%s1 + $0x10] sm:$0xf]
    %v50 = vld [vmem:[%s1 + $0x14] sm:$0xf]
    %v51 = vld [vmem:[%s1 + $0x18] sm:$0xf]
    %v52 = vld [vmem:[%s1 + $0x1c] sm:$0xf]
    %v53 = vld [vmem:[%s1 + $0x20] sm:$0xf]
    %v54 = vld [vmem:[%s1 + $0x24] sm:$0xf]
    %v55 = vld [vmem:[%s1 + $0x28] sm:$0xf]
    %v56 = vld [vmem:[%s1 + $0x2c] sm:$0xf]
    %v57 = vld [vmem:[%s1 + $0x30] sm:$0xf]
    %v58 = vld [vmem:[%s1 + $0x34] sm:$0xf]
    %v59 = vld [vmem:[%s1 + $0x38] sm:$0xf]
    %v60 = vld [vmem:[%s1 + $0x3c] sm:$0xf]
    %v61 = vld [vmem:[%s1 + $0x40] sm:$0xf]
    %v62 = vld [vmem:[%s1 + $0x44] sm:$0xf]
    %v63 = vld [vmem:[%s1 + $0x48] sm:$0xf]
    %v64 = vld [vmem:[%s1 + $0x4c] sm:$0xf]
    %v65 = vld [vmem:[%s1 + $0x50] sm:$0xf]
    %v66 = vld [vmem:[%s1 + $0x54] sm:$0xf]
    %v67 = vld [vmem:[%s1 + $0x58] sm:$0xf]
    %v68 = vld [vmem:[%s1 + $0x5c] sm:$0xf]
    %v69 = vld [vmem:[%s1 + $0x60] sm:$0xf]
    %v70 = vld [vmem:[%s1 + $0x64] sm:$0xf]
    %v71 = vld [vmem:[%s1 + $0x68] sm:$0xf]
    %v72 = vld [vmem:[%s1 + $0x6c] sm:$0xf]
    %v73 = vld [vmem:[%s1 + $0x70] sm:$0xf]
    %v74 = vld [vmem:[%s1 + $0x74] sm:$0xf]
    %v75 = vld [vmem:[%s1 + $0x78] sm:$0xf]
    %v76 = vld [vmem:[%s1 + $0x7c] sm:$0xf]
    %v77 = vld [vmem:[%s1 + $0x80] sm:$0xf]
    %v78 = vld [vmem:[%s1 + $0x84] sm:$0xf]
    %v79 = vld [vmem:[%s1 + $0x88] sm:$0xf]
    %v80 = vld [vmem:[%s1 + $0x8c] sm:$0xf]
    %v81 = vld [vmem:[%s1 + $0x90] sm:$0xf]
    %v82 = vld [vmem:[%s1 + $0x94] sm:$0xf]
    %v83 = vld [vmem:[%s1 + $0x98] sm:$0xf]
    %v84 = vld [vmem:[%s1 + $0x9c] sm:$0xf]
    %v85 = vld [vmem:[%s1 + $0xa0] sm:$0xf]
    %v86 = vld [vmem:[%s1 + $0xa4] sm:$0xf]
    %v87 = vld [vmem:[%s1 + $0xa8] sm:$0xf]
    %v88 = vld [vmem:[%s1 + $0xac] sm:$0xf]
    %v89 = vld [vmem:[%s1 + $0xb0] sm:$0xf]
    %v90 = vld [vmem:[%s1 + $0xb4] sm:$0xf]
    %v91 = vld [vmem:[%s1 + $0xb8] sm:$0xf]
    %v92 = vld [vmem:[%s1 + $0xbc] sm:$0xf]
    %v93 = vld [vmem:[%s1 + $0xc0] sm:$0xf]
    %v94 = vld [vmem:[%s1 + $0xc4] sm:$0xf]
    %v95 = vld [vmem:[%s1 + $0xc8] sm:$0xf]
    %v96 = vld [vmem:[%s1 + $0xcc] sm:$0xf]
    %v97 = vld [vmem:[%s1 + $0xd0] sm:$0xf]
    %v98 = vld [vmem:[%s1 + $0xd4] sm:$0xf]
    %v99 = vld [vmem:[%s1 + $0xd8] sm:$0xf]
    %v100 = vld [vmem:[%s1 + $0xdc] sm:$0xf]
    %v101 = vld [vmem:[%s1 + $0xe0] sm:$0xf]
    %v102 = vld [vmem:[%s1 + $0xe4] sm:$0xf]
    %v103 = vld [vmem:[%s1 + $0xe8] sm:$0xf]
    %v104 = vld [vmem:[%s1 + $0xec] sm:$0xf]
    %v105 = vld [vmem:[%s1 + $0xf0] sm:$0xf]
    %v106 = vld [vmem:[%s1 + $0xf4] sm:$0xf]
    %v107 = vld [vmem:[%s1 + $0xf8] sm:$0xf]
    %v108 = vld [vmem:[%s1 + $0xfc] sm:$0xf]
    %v109 = vld [vmem:[%s1 + $0x100] sm:$0xf]
    %v110 = vld [vmem:[%s1 + $0x104] sm:$0xf]
    %v111 = vld [vmem:[%s1 + $0x108] sm:$0xf]
    %v112 = vld [vmem:[%s1 + $0x10c] sm:$0xf]
    %v113 = vld [vmem:[%s1 + $0x110] sm:$0xf]
    %v114 = vld [vmem:[%s1 + $0x114] sm:$0xf]
    %v115 = vld [vmem:[%s1 + $0x118] sm:$0xf]
    %v116 = vld [vmem:[%s1 + $0x11c] sm:$0xf]
    %v117 = vld [vmem:[%s1 + $0x120] sm:$0xf]
    %v118 = vld [vmem:[%s1 + $0x124] sm:$0xf]
    %v119 = vld [vmem:[%s1 + $0x128] sm:$0xf]
    %v120 = vld [vmem:[%s1 + $0x12c] sm:$0xf]
    %v121 = vld [vmem:[%s1 + $0x130] sm:$0xf]
    %v122 = vld [vmem:[%s1 + $0x134] sm:$0xf]
    %v123 = vld [vmem:[%s1 + $0x138] sm:$0xf]
    %v124 = vld [vmem:[%s1 + $0x13c] sm:$0xf]
    %v125 = vld [vmem:[%s1 + $0x140] sm:$0xf]
    %v126 = vld [vmem:[%s1 + $0x144] sm:$0xf]
    %v127 = vld [vmem:[%s1 + $0x148] sm:$0xf]
    %v128 = vld [vmem:[%s1 + $0x14c] sm:$0xf]
    %v129 = vld [vmem:[%s1 + $0x150] sm:$0xf]
    %v130 = vld [vmem:[%s1 + $0x154] sm:$0xf]
    %v131 = vld [vmem:[%s1 + $0x158] sm:$0xf]
    %v132 = vld [vmem:[%s1 + $0x15c] sm:$0xf]
    %v133 = vld [vmem:[%s1 + $0x160] sm:$0xf]
    %v134 = vld [vmem:[%s1 + $0x164] sm:$0xf]
    %v135 = vld [vmem:[%s1 + $0x168] sm:$0xf]
    %v136 = vld [vmem:[%s1 + $0x16c] sm:$0xf]
    %v137 = vld [vmem:[%s1 + $0x170] sm:$0xf]
    %v138 = vld [vmem:[%s1 + $0x174] sm:$0xf]
    %v139 = vld [vmem:[%s1 + $0x178] sm:$0xf]
    %v140 = vld [vmem:[%s1 + $0x17c] sm:$0xf]
    %v141 = vld [vmem:[%s1 + $0x180] sm:$0xf]
    %v142 = vld [vmem:[%s1 + $0x184] sm:$0xf]
    %v143 = vld [vmem:[%s1 + $0x188] sm:$0xf]
    %v144 = vld [vmem:[%s1 + $0x18c] sm:$0xf]
    %v145 = vld [vmem:[%s1 + $0x190] sm:$0xf]
    %v146 = vld [vmem:[%s1 + $0x194] sm:$0xf]
    %v147 = vld [vmem:[%s1 + $0x198] sm:$0xf]
    %v148 = vld [vmem:[%s1 + $0x19c] sm:$0xf]
    %v149 = vld [vmem:[%s1 + $0x1a0] sm:$0xf]
    %v150 = vld [vmem:[%s1 + $0x1a4] sm:$0xf]
    %v151 = vld [vmem:[%s1 + $0x1a8] sm:$0xf]
    %v152 = vld [vmem:[%s1 + $0x1ac] sm:$0xf]
    %v153 = vld [vmem:[%s1 + $0x1b0] sm:$0xf]
    %v154 = vld [vmem:[%s1 + $0x1b4] sm:$0xf]
    %v155 = vld [vmem:[%s1 + $0x1b8] sm:$0xf]
    %v156 = vld [vmem:[%s1 + $0x1bc] sm:$0xf]
    %v157 = vld [vmem:[%s1 + $0x1c0] sm:$0xf]
    %v158 = vld [vmem:[%s1 + $0x1c4] sm:$0xf]
    %v159 = vld [vmem:[%s1 + $0x1c8] sm:$0xf]
    %v160 = vld [vmem:[%s1 + $0x1cc] sm:$0xf]
    %v161 = vld [vmem:[%s1 + $0x1d0] sm:$0xf]
    %v162 = vld [vmem:[%s1 + $0x1d4] sm:$0xf]
    %v163 = vld [vmem:[%s1 + $0x1d8] sm:$0xf]
    %v164 = vld [vmem:[%s1 + $0x1dc] sm:$0xf]
    %v165 = vld [vmem:[%s1 + $0x1e0] sm:$0xf]
    %v166 = vld [vmem:[%s1 + $0x1e4] sm:$0xf]
    %v167 = vld [vmem:[%s1 + $0x1e8] sm:$0xf]
    %v168 = vld [vmem:[%s1 + $0x1ec] sm:$0xf]
    %v169 = vld [vmem:[%s1 + $0x1f0] sm:$0xf]
    %v170 = vld [vmem:[%s1 + $0x1f4] sm:$0xf]
    %v171 = vld [vmem:[%s1 + $0x1f8] sm:$0xf]
    %v172 = vld [vmem:[%s1 + $0x1fc] sm:$0xf]
    %v173 = vld [vmem:[%s1 + $0x200] sm:$0xf]
    %v174 = vld [vmem:[%s1 + $0x204] sm:$0xf]
    %v175 = vld [vmem:[%s1 + $0x208] sm:$0xf]
    %v176 = vld [vmem:[%s1 + $0x20c] sm:$0xf]
    %v177 = vld [vmem:[%s1 + $0x210] sm:$0xf]
    %v178 = vld [vmem:[%s1 + $0x214] sm:$0xf]
    %v179 = vld [vmem:[%s1 + $0x218] sm:$0xf]
    %v180 = vld [vmem:[%s1 + $0x21c] sm:$0xf]
    %v181 = vld [vmem:[%s1 + $0x220] sm:$0xf]
    %v182 = vld [vmem:[%s1 + $0x224] sm:$0xf]
    %v183 = vld [vmem:[%s1 + $0x228] sm:$0xf]
    %v184 = vld [vmem:[%s1 + $0x22c] sm:$0xf]
    %v185 = vld [vmem:[%s1 + $0x230] sm:$0xf]
    %v186 = vld [vmem:[%s1 + $0x234] sm:$0xf]
    %v187 = vld [vmem:[%s1 + $0x238] sm:$0xf]
    %v188 = vld [vmem:[%s1 + $0x23c] sm:$0xf]
    %v189 = vld [vmem:[%s2] sm:$0x1]
    %v191 = vlaneseq
    %v192 = vshrl.u32 %v191, 7
    %v193 = vsub.s32 0, %v192
    %v194 = vrot.slane %v189, %v193
    %v201 = vunpack.c.l.b16 %v40
    %v202 = vunpack.c.h.b16 %v40
    %v203 = vunpack.c.l.b16 %v41
    %v204 = vunpack.c.h.b16 %v41
    %v205 = vunpack.c.l.b16 %v42
    %v206 = vunpack.c.h.b16 %v42
    %v207 = vunpack.c.l.b16 %v43
    %v208 = vunpack.c.h.b16 %v43
    %v209 = vunpack.c.l.b16 %v44
    %v210 = vpack.c.b16 %v201, %v201
    %v211 = vpack.c.b16 %v202, %v202
    %v212 = vpack.c.b16 %v203, %v203
    %v213 = vpack.c.b16 %v204, %v204
    %v214 = vpack.c.b16 %v205, %v205
    %v215 = vpack.c.b16 %v206, %v206
    %v216 = vpack.c.b16 %v207, %v207
    %v217 = vpack.c.b16 %v208, %v208
    %v218 = vpack.c.b16 %v209, %v209
    %v372 = vunpack.c.l.b16 %v45
    %v373 = vunpack.c.l.b16 %v46
    %v374 = vunpack.c.l.b16 %v47
    %v375 = vunpack.c.l.b16 %v48
    %v376 = vunpack.c.l.b16 %v49
    %v377 = vunpack.c.l.b16 %v50
    %v378 = vunpack.c.l.b16 %v51
    %v379 = vunpack.c.l.b16 %v52
    %v380 = vunpack.c.l.b16 %v53
    %v381 = vunpack.c.l.b16 %v54
    %v382 = vunpack.c.l.b16 %v55
    %v383 = vunpack.c.l.b16 %v56
    %v384 = vunpack.c.l.b16 %v57
    %v385 = vunpack.c.l.b16 %v58
    %v386 = vunpack.c.l.b16 %v59
    %v387 = vunpack.c.l.b16 %v60
    %v388 = vunpack.c.l.b16 %v61
    %v389 = vunpack.c.l.b16 %v62
    %v390 = vunpack.c.l.b16 %v63
    %v391 = vunpack.c.l.b16 %v64
    %v392 = vunpack.c.l.b16 %v65
    %v393 = vunpack.c.l.b16 %v66
    %v394 = vunpack.c.l.b16 %v67
    %v395 = vunpack.c.l.b16 %v68
    %v396 = vunpack.c.l.b16 %v69
    %v397 = vunpack.c.l.b16 %v70
    %v398 = vunpack.c.l.b16 %v71
    %v399 = vunpack.c.l.b16 %v72
    %v400 = vunpack.c.l.b16 %v73
    %v401 = vunpack.c.l.b16 %v74
    %v402 = vunpack.c.l.b16 %v75
    %v403 = vunpack.c.l.b16 %v76
    %v404 = vunpack.c.l.b16 %v77
    %v405 = vunpack.c.l.b16 %v78
    %v406 = vunpack.c.l.b16 %v79
    %v407 = vunpack.c.l.b16 %v80
    %v408 = vunpack.c.l.b16 %v81
    %v409 = vunpack.c.l.b16 %v82
    %v410 = vunpack.c.l.b16 %v83
    %v411 = vunpack.c.l.b16 %v84
    %v412 = vunpack.c.l.b16 %v85
    %v413 = vunpack.c.l.b16 %v86
    %v414 = vunpack.c.l.b16 %v87
    %v415 = vunpack.c.l.b16 %v88
    %v416 = vunpack.c.l.b16 %v89
    %v417 = vunpack.c.l.b16 %v90
    %v418 = vunpack.c.l.b16 %v91
    %v419 = vunpack.c.l.b16 %v92
    %v420 = vunpack.c.l.b16 %v93
    %v421 = vunpack.c.l.b16 %v94
    %v422 = vunpack.c.l.b16 %v95
    %v423 = vunpack.c.l.b16 %v96
    %v424 = vunpack.c.l.b16 %v97
    %v425 = vunpack.c.l.b16 %v98
    %v426 = vunpack.c.l.b16 %v99
    %v427 = vunpack.c.l.b16 %v100
    %v428 = vunpack.c.l.b16 %v101
    %v429 = vunpack.c.l.b16 %v102
    %v430 = vunpack.c.l.b16 %v103
    %v431 = vunpack.c.l.b16 %v104
    %v432 = vunpack.c.l.b16 %v105
    %v433 = vunpack.c.l.b16 %v106
    %v434 = vunpack.c.l.b16 %v107
    %v435 = vunpack.c.l.b16 %v108
    %v436 = vunpack.c.l.b16 %v109
    %v437 = vunpack.c.l.b16 %v110
    %v438 = vunpack.c.l.b16 %v111
    %v439 = vunpack.c.l.b16 %v112
    %v440 = vunpack.c.l.b16 %v113
    %v441 = vunpack.c.l.b16 %v114
    %v442 = vunpack.c.l.b16 %v115
    %v443 = vunpack.c.l.b16 %v116
    %v444 = vunpack.c.l.b16 %v117
    %v445 = vunpack.c.l.b16 %v118
    %v446 = vunpack.c.l.b16 %v119
    %v447 = vunpack.c.l.b16 %v120
    %v448 = vunpack.c.l.b16 %v121
    %v449 = vunpack.c.l.b16 %v122
    %v450 = vunpack.c.l.b16 %v123
    %v451 = vunpack.c.l.b16 %v124
    %v452 = vunpack.c.l.b16 %v125
    %v453 = vunpack.c.l.b16 %v126
    %v454 = vunpack.c.l.b16 %v127
    %v455 = vunpack.c.l.b16 %v128
    %v456 = vunpack.c.l.b16 %v129
    %v457 = vunpack.c.l.b16 %v130
    %v458 = vunpack.c.l.b16 %v131
    %v459 = vunpack.c.l.b16 %v132
    %v460 = vunpack.c.l.b16 %v133
    %v461 = vunpack.c.l.b16 %v134
    %v462 = vunpack.c.l.b16 %v135
    %v463 = vunpack.c.l.b16 %v136
    %v464 = vunpack.c.l.b16 %v137
    %v465 = vunpack.c.l.b16 %v138
    %v466 = vunpack.c.l.b16 %v139
    %v467 = vunpack.c.l.b16 %v140
    %v468 = vunpack.c.l.b16 %v141
    %v469 = vunpack.c.l.b16 %v142
    %v470 = vunpack.c.l.b16 %v143
    %v471 = vunpack.c.l.b16 %v144
    %v472 = vunpack.c.l.b16 %v145
    %v473 = vunpack.c.l.b16 %v146
    %v474 = vunpack.c.l.b16 %v147
    %v475 = vunpack.c.l.b16 %v148
    %v476 = vunpack.c.l.b16 %v149
    %v477 = vunpack.c.l.b16 %v150
    %v478 = vunpack.c.l.b16 %v151
    %v479 = vunpack.c.l.b16 %v152
    %v480 = vunpack.c.l.b16 %v153
    %v481 = vunpack.c.l.b16 %v154
    %v482 = vunpack.c.l.b16 %v155
    %v483 = vunpack.c.l.b16 %v156
    %v484 = vunpack.c.l.b16 %v157
    %v485 = vunpack.c.l.b16 %v158
    %v486 = vunpack.c.l.b16 %v159
    %v487 = vunpack.c.l.b16 %v160
    %v488 = vunpack.c.l.b16 %v161
    %v489 = vunpack.c.l.b16 %v162
    %v490 = vunpack.c.l.b16 %v163
    %v491 = vunpack.c.l.b16 %v164
    %v492 = vunpack.c.l.b16 %v165
    %v493 = vunpack.c.l.b16 %v166
    %v494 = vunpack.c.l.b16 %v167
    %v495 = vunpack.c.l.b16 %v168
    %v496 = vunpack.c.l.b16 %v169
    %v497 = vunpack.c.l.b16 %v170
    %v498 = vunpack.c.l.b16 %v171
    %v499 = vunpack.c.l.b16 %v172
    %v500 = vunpack.c.l.b16 %v173
    %v501 = vunpack.c.l.b16 %v174
    %v502 = vunpack.c.l.b16 %v175
    %v503 = vunpack.c.l.b16 %v176
    %v504 = vunpack.c.l.b16 %v177
    %v505 = vunpack.c.l.b16 %v178
    %v506 = vunpack.c.l.b16 %v179
    %v507 = vunpack.c.l.b16 %v180
    %v508 = vunpack.c.l.b16 %v181
    %v509 = vunpack.c.l.b16 %v182
    %v510 = vunpack.c.l.b16 %v183
    %v511 = vunpack.c.l.b16 %v184
    %v512 = vunpack.c.l.b16 %v185
    %v513 = vunpack.c.l.b16 %v186
    %v514 = vunpack.c.l.b16 %v187
    %v515 = vunpack.c.l.b16 %v188
    %v516 = vpack.c.b16 %v373, %v372
    %v517 = vpack.c.b16 %v375, %v374
    %v518 = vpack.c.b16 %v377, %v376
    %v519 = vpack.c.b16 %v379, %v378
    %v520 = vpack.c.b16 %v381, %v380
    %v521 = vpack.c.b16 %v383, %v382
    %v522 = vpack.c.b16 %v385, %v384
    %v523 = vpack.c.b16 %v387, %v386
    %v524 = vpack.c.b16 %v389, %v388
    %v525 = vpack.c.b16 %v391, %v390
    %v526 = vpack.c.b16 %v393, %v392
    %v527 = vpack.c.b16 %v395, %v394
    %v528 = vpack.c.b16 %v397, %v396
    %v529 = vpack.c.b16 %v399, %v398
    %v530 = vpack.c.b16 %v401, %v400
    %v531 = vpack.c.b16 %v403, %v402
    %v532 = vpack.c.b16 %v405, %v404
    %v533 = vpack.c.b16 %v407, %v406
    %v534 = vpack.c.b16 %v409, %v408
    %v535 = vpack.c.b16 %v411, %v410
    %v536 = vpack.c.b16 %v413, %v412
    %v537 = vpack.c.b16 %v415, %v414
    %v538 = vpack.c.b16 %v417, %v416
    %v539 = vpack.c.b16 %v419, %v418
    %v540 = vpack.c.b16 %v421, %v420
    %v541 = vpack.c.b16 %v423, %v422
    %v542 = vpack.c.b16 %v425, %v424
    %v543 = vpack.c.b16 %v427, %v426
    %v544 = vpack.c.b16 %v429, %v428
    %v545 = vpack.c.b16 %v431, %v430
    %v546 = vpack.c.b16 %v433, %v432
    %v547 = vpack.c.b16 %v435, %v434
    %v548 = vpack.c.b16 %v437, %v436
    %v549 = vpack.c.b16 %v439, %v438
    %v550 = vpack.c.b16 %v441, %v440
    %v551 = vpack.c.b16 %v443, %v442
    %v552 = vpack.c.b16 %v445, %v444
    %v553 = vpack.c.b16 %v447, %v446
    %v554 = vpack.c.b16 %v449, %v448
    %v555 = vpack.c.b16 %v451, %v450
    %v556 = vpack.c.b16 %v453, %v452
    %v557 = vpack.c.b16 %v455, %v454
    %v558 = vpack.c.b16 %v457, %v456
    %v559 = vpack.c.b16 %v459, %v458
    %v560 = vpack.c.b16 %v461, %v460
    %v561 = vpack.c.b16 %v463, %v462
    %v562 = vpack.c.b16 %v465, %v464
    %v563 = vpack.c.b16 %v467, %v466
    %v564 = vpack.c.b16 %v469, %v468
    %v565 = vpack.c.b16 %v471, %v470
    %v566 = vpack.c.b16 %v473, %v472
    %v567 = vpack.c.b16 %v475, %v474
    %v568 = vpack.c.b16 %v477, %v476
    %v569 = vpack.c.b16 %v479, %v478
    %v570 = vpack.c.b16 %v481, %v480
    %v571 = vpack.c.b16 %v483, %v482
    %v572 = vpack.c.b16 %v485, %v484
    %v573 = vpack.c.b16 %v487, %v486
    %v574 = vpack.c.b16 %v489, %v488
    %v575 = vpack.c.b16 %v491, %v490
    %v576 = vpack.c.b16 %v493, %v492
    %v577 = vpack.c.b16 %v495, %v494
    %v578 = vpack.c.b16 %v497, %v496
    %v579 = vpack.c.b16 %v499, %v498
    %v580 = vpack.c.b16 %v501, %v500
    %v581 = vpack.c.b16 %v503, %v502
    %v582 = vpack.c.b16 %v505, %v504
    %v583 = vpack.c.b16 %v507, %v506
    %v584 = vpack.c.b16 %v509, %v508
    %v585 = vpack.c.b16 %v511, %v510
    %v586 = vpack.c.b16 %v513, %v512
    %v587 = vpack.c.b16 %v515, %v514
    %660 = vmatprep.subr.bf16.mxu0 0
    %661 = vmatpush1.bf16.msra.mxu0 %v516
    %662 = vmatprep.subr.bf16.mxu0 0
    %663 = vmatpush1.bf16.msra.mxu0 %v517
    %664 = vmatprep.subr.bf16.mxu0 0
    %665 = vmatpush1.bf16.msra.mxu0 %v518
    %666 = vmatprep.subr.bf16.mxu0 0
    %667 = vmatpush1.bf16.msra.mxu0 %v519
    %668 = vmatprep.subr.bf16.mxu0 0
    %669 = vmatpush1.bf16.msra.mxu0 %v520
    %670 = vmatprep.subr.bf16.mxu0 0
    %671 = vmatpush1.bf16.msra.mxu0 %v521
    %672 = vmatprep.subr.bf16.mxu0 0
    %673 = vmatpush1.bf16.msra.mxu0 %v522
    %674 = vmatprep.subr.bf16.mxu0 0
    %675 = vmatpush1.bf16.msra.mxu0 %v523
    %676 = vmatprep.subr.bf16.mxu0 0
    %677 = vmatpush1.bf16.msra.mxu0 %v524
    %678 = vmatprep.subr.bf16.mxu0 0
    %679 = vmatpush1.bf16.msra.mxu0 %v525
    %680 = vmatprep.subr.bf16.mxu0 0
    %681 = vmatpush1.bf16.msra.mxu0 %v526
    %682 = vmatprep.subr.bf16.mxu0 0
    %683 = vmatpush1.bf16.msra.mxu0 %v527
    %684 = vmatprep.subr.bf16.mxu0 0
    %685 = vmatpush1.bf16.msra.mxu0 %v528
    %686 = vmatprep.subr.bf16.mxu0 0
    %687 = vmatpush1.bf16.msra.mxu0 %v529
    %688 = vmatprep.subr.bf16.mxu0 0
    %689 = vmatpush1.bf16.msra.mxu0 %v530
    %690 = vmatprep.subr.bf16.mxu0 0
    %691 = vmatpush1.bf16.msra.mxu0 %v531
    %692 = vmatprep.mubr.bf16.mxu0 %v211
    %693 = vmatmul.mubr.bf16.gmra.mrb[0].mxu0 %v210
    %v694 = vpop.f32.mrb[0].mxu0
    %v695 = vadd.f32 %v194, %v694
    %v696 = vpop.f32.mrb[0].mxu0
    %v697 = vpop.f32.mrb[0].mxu0
    %v698 = vpop.f32.mrb[0].mxu0
    %699 = vdwg.mxu0
    %700 = vmatprep.subr.bf16.mxu0 0
    %701 = vmatpush1.bf16.msra.mxu0 %v532
    %702 = vmatprep.subr.bf16.mxu0 0
    %703 = vmatpush1.bf16.msra.mxu0 %v533
    %704 = vmatprep.subr.bf16.mxu0 0
    %705 = vmatpush1.bf16.msra.mxu0 %v534
    %706 = vmatprep.subr.bf16.mxu0 0
    %707 = vmatpush1.bf16.msra.mxu0 %v535
    %708 = vmatprep.subr.bf16.mxu0 0
    %709 = vmatpush1.bf16.msra.mxu0 %v536
    %710 = vmatprep.subr.bf16.mxu0 0
    %711 = vmatpush1.bf16.msra.mxu0 %v537
    %712 = vmatprep.subr.bf16.mxu0 0
    %713 = vmatpush1.bf16.msra.mxu0 %v538
    %714 = vmatprep.subr.bf16.mxu0 0
    %715 = vmatpush1.bf16.msra.mxu0 %v539
    %716 = vmatprep.subr.bf16.mxu0 0
    %717 = vmatpush1.bf16.msra.mxu0 %v540
    %718 = vmatprep.subr.bf16.mxu0 0
    %719 = vmatpush1.bf16.msra.mxu0 %v541
    %720 = vmatprep.subr.bf16.mxu0 0
    %721 = vmatpush1.bf16.msra.mxu0 %v542
    %722 = vmatprep.subr.bf16.mxu0 0
    %723 = vmatpush1.bf16.msra.mxu0 %v543
    %724 = vmatprep.subr.bf16.mxu0 0
    %725 = vmatpush1.bf16.msra.mxu0 %v544
    %726 = vmatprep.subr.bf16.mxu0 0
    %727 = vmatpush1.bf16.msra.mxu0 %v545
    %728 = vmatprep.subr.bf16.mxu0 0
    %729 = vmatpush1.bf16.msra.mxu0 %v546
    %730 = vmatprep.subr.bf16.mxu0 0
    %731 = vmatpush1.bf16.msra.mxu0 %v547
    %732 = vmatprep.mubr.bf16.mxu0 %v213
    %733 = vmatmul.mubr.bf16.gmra.mrb[0].mxu0 %v212
    %v734 = vpop.f32.mrb[0].mxu0
    %v735 = vadd.f32 %v695, %v734
    %v736 = vpop.f32.mrb[0].mxu0
    %v737 = vpop.f32.mrb[0].mxu0
    %v738 = vpop.f32.mrb[0].mxu0
    %739 = vdwg.mxu0
    %740 = vmatprep.subr.bf16.mxu0 0
    %741 = vmatpush1.bf16.msra.mxu0 %v548
    %742 = vmatprep.subr.bf16.mxu0 0
    %743 = vmatpush1.bf16.msra.mxu0 %v549
    %744 = vmatprep.subr.bf16.mxu0 0
    %745 = vmatpush1.bf16.msra.mxu0 %v550
    %746 = vmatprep.subr.bf16.mxu0 0
    %747 = vmatpush1.bf16.msra.mxu0 %v551
    %748 = vmatprep.subr.bf16.mxu0 0
    %749 = vmatpush1.bf16.msra.mxu0 %v552
    %750 = vmatprep.subr.bf16.mxu0 0
    %751 = vmatpush1.bf16.msra.mxu0 %v553
    %752 = vmatprep.subr.bf16.mxu0 0
    %753 = vmatpush1.bf16.msra.mxu0 %v554
    %754 = vmatprep.subr.bf16.mxu0 0
    %755 = vmatpush1.bf16.msra.mxu0 %v555
    %756 = vmatprep.subr.bf16.mxu0 0
    %757 = vmatpush1.bf16.msra.mxu0 %v556
    %758 = vmatprep.subr.bf16.mxu0 0
    %759 = vmatpush1.bf16.msra.mxu0 %v557
    %760 = vmatprep.subr.bf16.mxu0 0
    %761 = vmatpush1.bf16.msra.mxu0 %v558
    %762 = vmatprep.subr.bf16.mxu0 0
    %763 = vmatpush1.bf16.msra.mxu0 %v559
    %764 = vmatprep.subr.bf16.mxu0 0
    %765 = vmatpush1.bf16.msra.mxu0 %v560
    %766 = vmatprep.subr.bf16.mxu0 0
    %767 = vmatpush1.bf16.msra.mxu0 %v561
    %768 = vmatprep.subr.bf16.mxu0 0
    %769 = vmatpush1.bf16.msra.mxu0 %v562
    %770 = vmatprep.subr.bf16.mxu0 0
    %771 = vmatpush1.bf16.msra.mxu0 %v563
    %772 = vmatprep.mubr.bf16.mxu0 %v215
    %773 = vmatmul.mubr.bf16.gmra.mrb[0].mxu0 %v214
    %v774 = vpop.f32.mrb[0].mxu0
    %v775 = vadd.f32 %v735, %v774
    %v776 = vpop.f32.mrb[0].mxu0
    %v777 = vpop.f32.mrb[0].mxu0
    %v778 = vpop.f32.mrb[0].mxu0
    %779 = vdwg.mxu0
    %780 = vmatprep.subr.bf16.mxu0 0
    %781 = vmatpush1.bf16.msra.mxu0 %v564
    %782 = vmatprep.subr.bf16.mxu0 0
    %783 = vmatpush1.bf16.msra.mxu0 %v565
    %784 = vmatprep.subr.bf16.mxu0 0
    %785 = vmatpush1.bf16.msra.mxu0 %v566
    %786 = vmatprep.subr.bf16.mxu0 0
    %787 = vmatpush1.bf16.msra.mxu0 %v567
    %788 = vmatprep.subr.bf16.mxu0 0
    %789 = vmatpush1.bf16.msra.mxu0 %v568
    %790 = vmatprep.subr.bf16.mxu0 0
    %791 = vmatpush1.bf16.msra.mxu0 %v569
    %792 = vmatprep.subr.bf16.mxu0 0
    %793 = vmatpush1.bf16.msra.mxu0 %v570
    %794 = vmatprep.subr.bf16.mxu0 0
    %795 = vmatpush1.bf16.msra.mxu0 %v571
    %796 = vmatprep.subr.bf16.mxu0 0
    %797 = vmatpush1.bf16.msra.mxu0 %v572
    %798 = vmatprep.subr.bf16.mxu0 0
    %799 = vmatpush1.bf16.msra.mxu0 %v573
    %800 = vmatprep.subr.bf16.mxu0 0
    %801 = vmatpush1.bf16.msra.mxu0 %v574
    %802 = vmatprep.subr.bf16.mxu0 0
    %803 = vmatpush1.bf16.msra.mxu0 %v575
    %804 = vmatprep.subr.bf16.mxu0 0
    %805 = vmatpush1.bf16.msra.mxu0 %v576
    %806 = vmatprep.subr.bf16.mxu0 0
    %807 = vmatpush1.bf16.msra.mxu0 %v577
    %808 = vmatprep.subr.bf16.mxu0 0
    %809 = vmatpush1.bf16.msra.mxu0 %v578
    %810 = vmatprep.subr.bf16.mxu0 0
    %811 = vmatpush1.bf16.msra.mxu0 %v579
    %812 = vmatprep.mubr.bf16.mxu0 %v217
    %813 = vmatmul.mubr.bf16.gmra.mrb[0].mxu0 %v216
    %v814 = vpop.f32.mrb[0].mxu0
    %v815 = vadd.f32 %v775, %v814
    %v816 = vpop.f32.mrb[0].mxu0
    %v817 = vpop.f32.mrb[0].mxu0
    %v818 = vpop.f32.mrb[0].mxu0
    %819 = vdwg.mxu0
    %820 = vmatprep.subr.bf16.mxu0 0
    %821 = vmatpush1.bf16.msra.mxu0 %v580
    %822 = vmatprep.subr.bf16.mxu0 0
    %823 = vmatpush1.bf16.msra.mxu0 %v581
    %824 = vmatprep.subr.bf16.mxu0 0
    %825 = vmatpush1.bf16.msra.mxu0 %v582
    %826 = vmatprep.subr.bf16.mxu0 0
    %827 = vmatpush1.bf16.msra.mxu0 %v583
    %828 = vmatprep.subr.bf16.mxu0 0
    %829 = vmatpush1.bf16.msra.mxu0 %v584
    %830 = vmatprep.subr.bf16.mxu0 0
    %831 = vmatpush1.bf16.msra.mxu0 %v585
    %832 = vmatprep.subr.bf16.mxu0 0
    %833 = vmatpush1.bf16.msra.mxu0 %v586
    %834 = vmatprep.subr.bf16.mxu0 0
    %835 = vmatpush1.bf16.msra.mxu0 %v587
    %836 = vmatprep.subr.bf16.mxu0 0
    %837 = vmatpush1.bf16.msra.mxu0 0
    %838 = vmatprep.subr.bf16.mxu0 0
    %839 = vmatpush1.bf16.msra.mxu0 0
    %840 = vmatprep.subr.bf16.mxu0 0
    %841 = vmatpush1.bf16.msra.mxu0 0
    %842 = vmatprep.subr.bf16.mxu0 0
    %843 = vmatpush1.bf16.msra.mxu0 0
    %844 = vmatprep.subr.bf16.mxu0 0
    %845 = vmatpush1.bf16.msra.mxu0 0
    %846 = vmatprep.subr.bf16.mxu0 0
    %847 = vmatpush1.bf16.msra.mxu0 0
    %848 = vmatprep.subr.bf16.mxu0 0
    %849 = vmatpush1.bf16.msra.mxu0 0
    %850 = vmatprep.subr.bf16.mxu0 0
    %851 = vmatpush1.bf16.msra.mxu0 0
    %852 = vmatprep.mubr.bf16.mxu0 0
    %853 = vmatmul.mubr.bf16.gmra.mrb[0].mxu0 %v218
    %v854 = vpop.f32.mrb[0].mxu0
    %v855 = vadd.f32 %v815, %v854
    %v856 = vpop.f32.mrb[0].mxu0
    %v857 = vpop.f32.mrb[0].mxu0
    %v858 = vpop.f32.mrb[0].mxu0
    %859 = vdwg.mxu0
    %v860 = vmax.f32 %v855, 0.0
    %v861 = vpack.c.bf16 %v860, %v860
    %v862 = vld [vmem:[#allocation2] sm:$0xff]
    %v863 = vld [vmem:[#allocation2 + $0x8] sm:$0xff]
    %v864 = vld [vmem:[#allocation2 + $0x10] sm:$0xff]
    %v865 = vld [vmem:[#allocation2 + $0x18] sm:$0xff]
    %s866 = smul.u32 %s32, 32
    %s867 = smul.addr %s866, 4
    %s868 = scalar_lea.vmem %s3, %s867
    %v869 = vld [vmem:[%s868] sm:$0xff]
    %v870 = vld [vmem:[%s868 + $0x8] sm:$0xff]
    %v871 = vld [vmem:[%s868 + $0x10] sm:$0xff]
    %v872 = vld [vmem:[%s868 + $0x18] sm:$0xff]
    %v873 = vld [vmem:[%s868 + $0x20] sm:$0xff]
    %v874 = vld [vmem:[%s868 + $0x28] sm:$0xff]
    %v875 = vld [vmem:[%s868 + $0x30] sm:$0xff]
    %v876 = vld [vmem:[%s868 + $0x38] sm:$0xff]
    %v877 = vld [vmem:[%s868 + $0x40] sm:$0xff]
    %v878 = vld [vmem:[%s868 + $0x48] sm:$0xff]
    %v879 = vld [vmem:[%s868 + $0x50] sm:$0xff]
    %v880 = vld [vmem:[%s868 + $0x58] sm:$0xff]
    %v881 = vld [vmem:[%s868 + $0x60] sm:$0xff]
    %v882 = vld [vmem:[%s868 + $0x68] sm:$0xff]
    %v883 = vld [vmem:[%s868 + $0x70] sm:$0xff]
    %v884 = vld [vmem:[%s868 + $0x78] sm:$0xff]
    %v901 = vunpack.c.l.b16 %v869
    %v902 = vunpack.c.h.b16 %v869
    %v903 = vunpack.c.l.b16 %v870
    %v904 = vunpack.c.h.b16 %v870
    %v905 = vunpack.c.l.b16 %v871
    %v906 = vunpack.c.h.b16 %v871
    %v907 = vunpack.c.l.b16 %v872
    %v908 = vunpack.c.h.b16 %v872
    %v909 = vunpack.c.l.b16 %v873
    %v910 = vunpack.c.h.b16 %v873
    %v911 = vunpack.c.l.b16 %v874
    %v912 = vunpack.c.h.b16 %v874
    %v913 = vunpack.c.l.b16 %v875
    %v914 = vunpack.c.h.b16 %v875
    %v915 = vunpack.c.l.b16 %v876
    %v916 = vunpack.c.h.b16 %v876
    %v917 = vunpack.c.l.b16 %v877
    %v918 = vunpack.c.h.b16 %v877
    %v919 = vunpack.c.l.b16 %v878
    %v920 = vunpack.c.h.b16 %v878
    %v921 = vunpack.c.l.b16 %v879
    %v922 = vunpack.c.h.b16 %v879
    %v923 = vunpack.c.l.b16 %v880
    %v924 = vunpack.c.h.b16 %v880
    %v925 = vunpack.c.l.b16 %v881
    %v926 = vunpack.c.h.b16 %v881
    %v927 = vunpack.c.l.b16 %v882
    %v928 = vunpack.c.h.b16 %v882
    %v929 = vunpack.c.l.b16 %v883
    %v930 = vunpack.c.h.b16 %v883
    %v931 = vunpack.c.l.b16 %v884
    %v932 = vunpack.c.h.b16 %v884
    %v933 = vpack.c.b16 %v905, %v901
    %v934 = vpack.c.b16 %v906, %v902
    %v935 = vpack.c.b16 %v907, %v903
    %v936 = vpack.c.b16 %v908, %v904
    %v937 = vpack.c.b16 %v913, %v909
    %v938 = vpack.c.b16 %v914, %v910
    %v939 = vpack.c.b16 %v915, %v911
    %v940 = vpack.c.b16 %v916, %v912
    %v941 = vpack.c.b16 %v921, %v917
    %v942 = vpack.c.b16 %v922, %v918
    %v943 = vpack.c.b16 %v923, %v919
    %v944 = vpack.c.b16 %v924, %v920
    %v945 = vpack.c.b16 %v929, %v925
    %v946 = vpack.c.b16 %v930, %v926
    %v947 = vpack.c.b16 %v931, %v927
    %v948 = vpack.c.b16 %v932, %v928
    %vm965 = vcmask 523264
    %v967 = vsel %vm965, %v861, 0
    %969 = vmatprep.subr.bf16.mxu0 %v934
    %970 = vmatpush1.bf16.msra.mxu0 %v933
    %971 = vmatprep.subr.bf16.mxu0 %v938
    %972 = vmatpush1.bf16.msra.mxu0 %v937
    %973 = vmatprep.subr.bf16.mxu0 %v942
    %974 = vmatpush1.bf16.msra.mxu0 %v941
    %975 = vmatprep.subr.bf16.mxu0 %v946
    %976 = vmatpush1.bf16.msra.mxu0 %v945
    %977 = vmatprep.subr.bf16.mxu0 0
    %978 = vmatpush1.bf16.msra.mxu0 0
    %979 = vmatprep.subr.bf16.mxu0 0
    %980 = vmatpush1.bf16.msra.mxu0 0
    %981 = vmatprep.subr.bf16.mxu0 0
    %982 = vmatpush1.bf16.msra.mxu0 0
    %983 = vmatprep.subr.bf16.mxu0 0
    %984 = vmatpush1.bf16.msra.mxu0 0
    %985 = vmatprep.subr.bf16.mxu0 0
    %986 = vmatpush1.bf16.msra.mxu0 0
    %987 = vmatprep.subr.bf16.mxu0 0
    %988 = vmatpush1.bf16.msra.mxu0 0
    %989 = vmatprep.subr.bf16.mxu0 0
    %990 = vmatpush1.bf16.msra.mxu0 0
    %991 = vmatprep.subr.bf16.mxu0 0
    %992 = vmatpush1.bf16.msra.mxu0 0
    %993 = vmatprep.subr.bf16.mxu0 0
    %994 = vmatpush1.bf16.msra.mxu0 0
    %995 = vmatprep.subr.bf16.mxu0 0
    %996 = vmatpush1.bf16.msra.mxu0 0
    %997 = vmatprep.subr.bf16.mxu0 0
    %998 = vmatpush1.bf16.msra.mxu0 0
    %999 = vmatprep.subr.bf16.mxu0 0
    %1000 = vmatpush1.bf16.msra.mxu0 0
    %1001 = vmatprep.mubr.bf16.mxu0 0
    %1002 = vmatmul.mubr.bf16.gmra.mrb[0].mxu0 %v967
    %v1003 = vpop.f32.mrb[0].mxu0
    %v1004 = vadd.f32 0.0, %v1003
    %v1005 = vpop.f32.mrb[0].mxu0
    %v1006 = vadd.f32 0.0, %v1005
    %v1007 = vpop.f32.mrb[0].mxu0
    %v1008 = vpop.f32.mrb[0].mxu0
    %1009 = vdwg.mxu0
    %1010 = vmatprep.subr.bf16.mxu0 %v936
    %1011 = vmatpush1.bf16.msra.mxu0 %v935
    %1012 = vmatprep.subr.bf16.mxu0 %v940
    %1013 = vmatpush1.bf16.msra.mxu0 %v939
    %1014 = vmatprep.subr.bf16.mxu0 %v944
    %1015 = vmatpush1.bf16.msra.mxu0 %v943
    %1016 = vmatprep.subr.bf16.mxu0 %v948
    %1017 = vmatpush1.bf16.msra.mxu0 %v947
    %1018 = vmatprep.subr.bf16.mxu0 0
    %1019 = vmatpush1.bf16.msra.mxu0 0
    %1020 = vmatprep.subr.bf16.mxu0 0
    %1021 = vmatpush1.bf16.msra.mxu0 0
    %1022 = vmatprep.subr.bf16.mxu0 0
    %1023 = vmatpush1.bf16.msra.mxu0 0
    %1024 = vmatprep.subr.bf16.mxu0 0
    %1025 = vmatpush1.bf16.msra.mxu0 0
    %1026 = vmatprep.subr.bf16.mxu0 0
    %1027 = vmatpush1.bf16.msra.mxu0 0
    %1028 = vmatprep.subr.bf16.mxu0 0
    %1029 = vmatpush1.bf16.msra.mxu0 0
    %1030 = vmatprep.subr.bf16.mxu0 0
    %1031 = vmatpush1.bf16.msra.mxu0 0
    %1032 = vmatprep.subr.bf16.mxu0 0
    %1033 = vmatpush1.bf16.msra.mxu0 0
    %1034 = vmatprep.subr.bf16.mxu0 0
    %1035 = vmatpush1.bf16.msra.mxu0 0
    %1036 = vmatprep.subr.bf16.mxu0 0
    %1037 = vmatpush1.bf16.msra.mxu0 0
    %1038 = vmatprep.subr.bf16.mxu0 0
    %1039 = vmatpush1.bf16.msra.mxu0 0
    %1040 = vmatprep.subr.bf16.mxu0 0
    %1041 = vmatpush1.bf16.msra.mxu0 0
    %1042 = vmatprep.mubr.bf16.mxu0 0
    %1043 = vmatmul.mubr.bf16.gmra.mrb[0].mxu0 %v967
    %v1044 = vpop.f32.mrb[0].mxu0
    %v1045 = vadd.f32 0.0, %v1044
    %v1046 = vpop.f32.mrb[0].mxu0
    %v1047 = vadd.f32 0.0, %v1046
    %v1048 = vpop.f32.mrb[0].mxu0
    %v1049 = vpop.f32.mrb[0].mxu0
    %1050 = vdwg.mxu0
    %v1051 = vadd.f32 %v862, %v1004
    %v1052 = vadd.f32 %v863, %v1006
    %v1053 = vadd.f32 %v864, %v1045
    %v1054 = vadd.f32 %v865, %v1047
    %1055 = vst [vmem:[#allocation2] sm:$0xff] %v1051
    %1056 = vst [vmem:[#allocation2 + $0x8] sm:$0xff] %v1052
    %1057 = vst [vmem:[#allocation2 + $0x10] sm:$0xff] %v1053
    %1058 = vst [vmem:[#allocation2 + $0x18] sm:$0xff] %v1054
  $region34: #{dqn_forward.5} parent=0 // loop_footer
    %s36 = sadd.s32 1, %s32
  $region35: #{dqn_forward.5} parent=0 // loop_footer_branch
    %31 = sbr.rel target = $region31
  $region36: #{dqn_forward.5} parent=0 // loop_exit
    _
  %v1059 = vld [vmem:[#allocation2] sm:$0xff]
  %v1060 = vld [vmem:[#allocation2 + $0x8] sm:$0xff]
  %v1061 = vld [vmem:[#allocation2 + $0x10] sm:$0xff]
  %v1062 = vld [vmem:[#allocation2 + $0x18] sm:$0xff]
  %v1063 = vld [vmem:[%s4] sm:$0xf]
  %v1065 = vlaneseq
  %v1066 = vshrl.u32 %v1065, 7
  %v1067 = vsub.s32 0, %v1066
  %v1068 = vrot.slane %v1063, %v1067
  %v1069 = vlaneseq
  %v1070 = vshrl.u32 %v1069, 7
  %v1071 = vsub.s32 1, %v1070
  %v1072 = vrot.slane %v1063, %v1071
  %v1073 = vlaneseq
  %v1074 = vshrl.u32 %v1073, 7
  %v1075 = vsub.s32 2, %v1074
  %v1076 = vrot.slane %v1063, %v1075
  %v1077 = vlaneseq
  %v1078 = vshrl.u32 %v1077, 7
  %v1079 = vsub.s32 3, %v1078
  %v1080 = vrot.slane %v1063, %v1079
  %v1085 = vadd.f32 %v1059, %v1068
  %v1086 = vadd.f32 %v1060, %v1072
  %v1087 = vadd.f32 %v1061, %v1076
  %v1088 = vadd.f32 %v1062, %v1080
  %v1089 = vmul.f32 %v1085, 0.01
  %v1090 = vmul.f32 %v1086, 0.01
  %v1091 = vmul.f32 %v1087, 0.01
  %v1092 = vmul.f32 %v1088, 0.01
  %v1093 = vmax.f32 %v1085, %v1089
  %v1094 = vmax.f32 %v1086, %v1090
  %v1095 = vmax.f32 %v1087, %v1091
  %v1096 = vmax.f32 %v1088, %v1092
  %v1097 = vpack.c.bf16 %v1093, %v1093
  %v1098 = vpack.c.bf16 %v1094, %v1094
  %v1099 = vpack.c.bf16 %v1095, %v1095
  %v1100 = vpack.c.bf16 %v1096, %v1096
  %v1101 = vld [vmem:[%s5] sm:$0xf]
  %v1102 = vld [vmem:[%s5 + $0x4] sm:$0xf]
  %v1103 = vld [vmem:[%s5 + $0x8] sm:$0xf]
  %v1104 = vld [vmem:[%s5 + $0xc] sm:$0xf]
  %v1105 = vld [vmem:[%s5 + $0x10] sm:$0xf]
  %v1106 = vld [vmem:[%s5 + $0x14] sm:$0xf]
  %v1107 = vld [vmem:[%s5 + $0x18] sm:$0xf]
  %v1108 = vld [vmem:[%s5 + $0x1c] sm:$0xf]
  %v1109 = vld [vmem:[%s5 + $0x20] sm:$0xf]
  %v1110 = vld [vmem:[%s5 + $0x24] sm:$0xf]
  %v1111 = vld [vmem:[%s5 + $0x28] sm:$0xf]
  %v1112 = vld [vmem:[%s5 + $0x2c] sm:$0xf]
  %v1113 = vld [vmem:[%s5 + $0x30] sm:$0xf]
  %v1114 = vld [vmem:[%s5 + $0x34] sm:$0xf]
  %v1115 = vld [vmem:[%s5 + $0x38] sm:$0xf]
  %v1116 = vld [vmem:[%s5 + $0x3c] sm:$0xf]
  %v1117 = vld [vmem:[%s5 + $0x40] sm:$0xf]
  %v1118 = vld [vmem:[%s5 + $0x44] sm:$0xf]
  %v1119 = vld [vmem:[%s5 + $0x48] sm:$0xf]
  %v1120 = vld [vmem:[%s5 + $0x4c] sm:$0xf]
  %v1121 = vld [vmem:[%s5 + $0x50] sm:$0xf]
  %v1122 = vld [vmem:[%s5 + $0x54] sm:$0xf]
  %v1123 = vld [vmem:[%s5 + $0x58] sm:$0xf]
  %v1124 = vld [vmem:[%s5 + $0x5c] sm:$0xf]
  %v1125 = vld [vmem:[%s5 + $0x60] sm:$0xf]
  %v1126 = vld [vmem:[%s5 + $0x64] sm:$0xf]
  %v1127 = vld [vmem:[%s5 + $0x68] sm:$0xf]
  %v1128 = vld [vmem:[%s5 + $0x6c] sm:$0xf]
  %v1129 = vld [vmem:[%s5 + $0x70] sm:$0xf]
  %v1130 = vld [vmem:[%s5 + $0x74] sm:$0xf]
  %v1131 = vld [vmem:[%s5 + $0x78] sm:$0xf]
  %v1132 = vld [vmem:[%s5 + $0x7c] sm:$0xf]
  %v1133 = vld [vmem:[%s5 + $0x80] sm:$0xf]
  %v1134 = vld [vmem:[%s5 + $0x84] sm:$0xf]
  %v1135 = vld [vmem:[%s5 + $0x88] sm:$0xf]
  %v1136 = vld [vmem:[%s5 + $0x8c] sm:$0xf]
  %v1137 = vld [vmem:[%s5 + $0x90] sm:$0xf]
  %v1138 = vld [vmem:[%s5 + $0x94] sm:$0xf]
  %v1139 = vld [vmem:[%s5 + $0x98] sm:$0xf]
  %v1140 = vld [vmem:[%s5 + $0x9c] sm:$0xf]
  %v1141 = vld [vmem:[%s5 + $0xa0] sm:$0xf]
  %v1142 = vld [vmem:[%s5 + $0xa4] sm:$0xf]
  %v1143 = vld [vmem:[%s5 + $0xa8] sm:$0xf]
  %v1144 = vld [vmem:[%s5 + $0xac] sm:$0xf]
  %v1145 = vld [vmem:[%s5 + $0xb0] sm:$0xf]
  %v1146 = vld [vmem:[%s5 + $0xb4] sm:$0xf]
  %v1147 = vld [vmem:[%s5 + $0xb8] sm:$0xf]
  %v1148 = vld [vmem:[%s5 + $0xbc] sm:$0xf]
  %v1149 = vld [vmem:[%s5 + $0xc0] sm:$0xf]
  %v1150 = vld [vmem:[%s5 + $0xc4] sm:$0xf]
  %v1151 = vld [vmem:[%s5 + $0xc8] sm:$0xf]
  %v1152 = vld [vmem:[%s5 + $0xcc] sm:$0xf]
  %v1153 = vld [vmem:[%s5 + $0xd0] sm:$0xf]
  %v1154 = vld [vmem:[%s5 + $0xd4] sm:$0xf]
  %v1155 = vld [vmem:[%s5 + $0xd8] sm:$0xf]
  %v1156 = vld [vmem:[%s5 + $0xdc] sm:$0xf]
  %v1157 = vld [vmem:[%s5 + $0xe0] sm:$0xf]
  %v1158 = vld [vmem:[%s5 + $0xe4] sm:$0xf]
  %v1159 = vld [vmem:[%s5 + $0xe8] sm:$0xf]
  %v1160 = vld [vmem:[%s5 + $0xec] sm:$0xf]
  %v1161 = vld [vmem:[%s5 + $0xf0] sm:$0xf]
  %v1162 = vld [vmem:[%s5 + $0xf4] sm:$0xf]
  %v1163 = vld [vmem:[%s5 + $0xf8] sm:$0xf]
  %v1164 = vld [vmem:[%s5 + $0xfc] sm:$0xf]
  %v1165 = vld [vmem:[%s6] sm:$0x1]
  %v1167 = vlaneseq
  %v1168 = vshrl.u32 %v1167, 7
  %v1169 = vsub.s32 0, %v1168
  %v1170 = vrot.slane %v1165, %v1169
  %v1236 = vunpack.c.l.b16 %v1101
  %v1237 = vunpack.c.l.b16 %v1102
  %v1238 = vunpack.c.l.b16 %v1103
  %v1239 = vunpack.c.l.b16 %v1104
  %v1240 = vunpack.c.l.b16 %v1105
  %v1241 = vunpack.c.l.b16 %v1106
  %v1242 = vunpack.c.l.b16 %v1107
  %v1243 = vunpack.c.l.b16 %v1108
  %v1244 = vunpack.c.l.b16 %v1109
  %v1245 = vunpack.c.l.b16 %v1110
  %v1246 = vunpack.c.l.b16 %v1111
  %v1247 = vunpack.c.l.b16 %v1112
  %v1248 = vunpack.c.l.b16 %v1113
  %v1249 = vunpack.c.l.b16 %v1114
  %v1250 = vunpack.c.l.b16 %v1115
  %v1251 = vunpack.c.l.b16 %v1116
  %v1252 = vunpack.c.l.b16 %v1117
  %v1253 = vunpack.c.l.b16 %v1118
  %v1254 = vunpack.c.l.b16 %v1119
  %v1255 = vunpack.c.l.b16 %v1120
  %v1256 = vunpack.c.l.b16 %v1121
  %v1257 = vunpack.c.l.b16 %v1122
  %v1258 = vunpack.c.l.b16 %v1123
  %v1259 = vunpack.c.l.b16 %v1124
  %v1260 = vunpack.c.l.b16 %v1125
  %v1261 = vunpack.c.l.b16 %v1126
  %v1262 = vunpack.c.l.b16 %v1127
  %v1263 = vunpack.c.l.b16 %v1128
  %v1264 = vunpack.c.l.b16 %v1129
  %v1265 = vunpack.c.l.b16 %v1130
  %v1266 = vunpack.c.l.b16 %v1131
  %v1267 = vunpack.c.l.b16 %v1132
  %v1268 = vunpack.c.l.b16 %v1133
  %v1269 = vunpack.c.l.b16 %v1134
  %v1270 = vunpack.c.l.b16 %v1135
  %v1271 = vunpack.c.l.b16 %v1136
  %v1272 = vunpack.c.l.b16 %v1137
  %v1273 = vunpack.c.l.b16 %v1138
  %v1274 = vunpack.c.l.b16 %v1139
  %v1275 = vunpack.c.l.b16 %v1140
  %v1276 = vunpack.c.l.b16 %v1141
  %v1277 = vunpack.c.l.b16 %v1142
  %v1278 = vunpack.c.l.b16 %v1143
  %v1279 = vunpack.c.l.b16 %v1144
  %v1280 = vunpack.c.l.b16 %v1145
  %v1281 = vunpack.c.l.b16 %v1146
  %v1282 = vunpack.c.l.b16 %v1147
  %v1283 = vunpack.c.l.b16 %v1148
  %v1284 = vunpack.c.l.b16 %v1149
  %v1285 = vunpack.c.l.b16 %v1150
  %v1286 = vunpack.c.l.b16 %v1151
  %v1287 = vunpack.c.l.b16 %v1152
  %v1288 = vunpack.c.l.b16 %v1153
  %v1289 = vunpack.c.l.b16 %v1154
  %v1290 = vunpack.c.l.b16 %v1155
  %v1291 = vunpack.c.l.b16 %v1156
  %v1292 = vunpack.c.l.b16 %v1157
  %v1293 = vunpack.c.l.b16 %v1158
  %v1294 = vunpack.c.l.b16 %v1159
  %v1295 = vunpack.c.l.b16 %v1160
  %v1296 = vunpack.c.l.b16 %v1161
  %v1297 = vunpack.c.l.b16 %v1162
  %v1298 = vunpack.c.l.b16 %v1163
  %v1299 = vunpack.c.l.b16 %v1164
  %v1300 = vpack.c.b16 %v1237, %v1236
  %v1301 = vpack.c.b16 %v1239, %v1238
  %v1302 = vpack.c.b16 %v1241, %v1240
  %v1303 = vpack.c.b16 %v1243, %v1242
  %v1304 = vpack.c.b16 %v1245, %v1244
  %v1305 = vpack.c.b16 %v1247, %v1246
  %v1306 = vpack.c.b16 %v1249, %v1248
  %v1307 = vpack.c.b16 %v1251, %v1250
  %v1308 = vpack.c.b16 %v1253, %v1252
  %v1309 = vpack.c.b16 %v1255, %v1254
  %v1310 = vpack.c.b16 %v1257, %v1256
  %v1311 = vpack.c.b16 %v1259, %v1258
  %v1312 = vpack.c.b16 %v1261, %v1260
  %v1313 = vpack.c.b16 %v1263, %v1262
  %v1314 = vpack.c.b16 %v1265, %v1264
  %v1315 = vpack.c.b16 %v1267, %v1266
  %v1316 = vpack.c.b16 %v1269, %v1268
  %v1317 = vpack.c.b16 %v1271, %v1270
  %v1318 = vpack.c.b16 %v1273, %v1272
  %v1319 = vpack.c.b16 %v1275, %v1274
  %v1320 = vpack.c.b16 %v1277, %v1276
  %v1321 = vpack.c.b16 %v1279, %v1278
  %v1322 = vpack.c.b16 %v1281, %v1280
  %v1323 = vpack.c.b16 %v1283, %v1282
  %v1324 = vpack.c.b16 %v1285, %v1284
  %v1325 = vpack.c.b16 %v1287, %v1286
  %v1326 = vpack.c.b16 %v1289, %v1288
  %v1327 = vpack.c.b16 %v1291, %v1290
  %v1328 = vpack.c.b16 %v1293, %v1292
  %v1329 = vpack.c.b16 %v1295, %v1294
  %v1330 = vpack.c.b16 %v1297, %v1296
  %v1331 = vpack.c.b16 %v1299, %v1298
  %1364 = vmatprep.subr.bf16.mxu0 0
  %1365 = vmatpush1.bf16.msra.mxu0 %v1300
  %1366 = vmatprep.subr.bf16.mxu0 0
  %1367 = vmatpush1.bf16.msra.mxu0 %v1301
  %1368 = vmatprep.subr.bf16.mxu0 0
  %1369 = vmatpush1.bf16.msra.mxu0 %v1302
  %1370 = vmatprep.subr.bf16.mxu0 0
  %1371 = vmatpush1.bf16.msra.mxu0 %v1303
  %1372 = vmatprep.subr.bf16.mxu0 0
  %1373 = vmatpush1.bf16.msra.mxu0 %v1304
  %1374 = vmatprep.subr.bf16.mxu0 0
  %1375 = vmatpush1.bf16.msra.mxu0 %v1305
  %1376 = vmatprep.subr.bf16.mxu0 0
  %1377 = vmatpush1.bf16.msra.mxu0 %v1306
  %1378 = vmatprep.subr.bf16.mxu0 0
  %1379 = vmatpush1.bf16.msra.mxu0 %v1307
  %1380 = vmatprep.subr.bf16.mxu0 0
  %1381 = vmatpush1.bf16.msra.mxu0 %v1308
  %1382 = vmatprep.subr.bf16.mxu0 0
  %1383 = vmatpush1.bf16.msra.mxu0 %v1309
  %1384 = vmatprep.subr.bf16.mxu0 0
  %1385 = vmatpush1.bf16.msra.mxu0 %v1310
  %1386 = vmatprep.subr.bf16.mxu0 0
  %1387 = vmatpush1.bf16.msra.mxu0 %v1311
  %1388 = vmatprep.subr.bf16.mxu0 0
  %1389 = vmatpush1.bf16.msra.mxu0 %v1312
  %1390 = vmatprep.subr.bf16.mxu0 0
  %1391 = vmatpush1.bf16.msra.mxu0 %v1313
  %1392 = vmatprep.subr.bf16.mxu0 0
  %1393 = vmatpush1.bf16.msra.mxu0 %v1314
  %1394 = vmatprep.subr.bf16.mxu0 0
  %1395 = vmatpush1.bf16.msra.mxu0 %v1315
  %1396 = vmatprep.mubr.bf16.mxu0 %v1098
  %1397 = vmatmul.mubr.bf16.gmra.mrb[0].mxu0 %v1097
  %v1398 = vpop.f32.mrb[0].mxu0
  %v1399 = vadd.f32 %v1170, %v1398
  %v1400 = vpop.f32.mrb[0].mxu0
  %v1401 = vpop.f32.mrb[0].mxu0
  %v1402 = vpop.f32.mrb[0].mxu0
  %1403 = vdwg.mxu0
  %1404 = vmatprep.subr.bf16.mxu0 0
  %1405 = vmatpush1.bf16.msra.mxu0 %v1316
  %1406 = vmatprep.subr.bf16.mxu0 0
  %1407 = vmatpush1.bf16.msra.mxu0 %v1317
  %1408 = vmatprep.subr.bf16.mxu0 0
  %1409 = vmatpush1.bf16.msra.mxu0 %v1318
  %1410 = vmatprep.subr.bf16.mxu0 0
  %1411 = vmatpush1.bf16.msra.mxu0 %v1319
  %1412 = vmatprep.subr.bf16.mxu0 0
  %1413 = vmatpush1.bf16.msra.mxu0 %v1320
  %1414 = vmatprep.subr.bf16.mxu0 0
  %1415 = vmatpush1.bf16.msra.mxu0 %v1321
  %1416 = vmatprep.subr.bf16.mxu0 0
  %1417 = vmatpush1.bf16.msra.mxu0 %v1322
  %1418 = vmatprep.subr.bf16.mxu0 0
  %1419 = vmatpush1.bf16.msra.mxu0 %v1323
  %1420 = vmatprep.subr.bf16.mxu0 0
  %1421 = vmatpush1.bf16.msra.mxu0 %v1324
  %1422 = vmatprep.subr.bf16.mxu0 0
  %1423 = vmatpush1.bf16.msra.mxu0 %v1325
  %1424 = vmatprep.subr.bf16.mxu0 0
  %1425 = vmatpush1.bf16.msra.mxu0 %v1326
  %1426 = vmatprep.subr.bf16.mxu0 0
  %1427 = vmatpush1.bf16.msra.mxu0 %v1327
  %1428 = vmatprep.subr.bf16.mxu0 0
  %1429 = vmatpush1.bf16.msra.mxu0 %v1328
  %1430 = vmatprep.subr.bf16.mxu0 0
  %1431 = vmatpush1.bf16.msra.mxu0 %v1329
  %1432 = vmatprep.subr.bf16.mxu0 0
  %1433 = vmatpush1.bf16.msra.mxu0 %v1330
  %1434 = vmatprep.subr.bf16.mxu0 0
  %1435 = vmatpush1.bf16.msra.mxu0 %v1331
  %1436 = vmatprep.mubr.bf16.mxu0 %v1100
  %1437 = vmatmul.mubr.bf16.gmra.mrb[0].mxu0 %v1099
  %v1438 = vpop.f32.mrb[0].mxu0
  %v1439 = vadd.f32 %v1399, %v1438
  %v1440 = vpop.f32.mrb[0].mxu0
  %v1441 = vpop.f32.mrb[0].mxu0
  %v1442 = vpop.f32.mrb[0].mxu0
  %1443 = vdwg.mxu0
  %1444 = vst [vmem:[%s7] sm:$0xff] %v1439
  // Predicated region
  $region37: #{dqn_forward.5} parent=0 // pred_check
    _
  $region38: #{dqn_forward.5} parent=0 // pred_check_branch
    %1446 = sbr.rel (0) target = $region40
  $region39: #{dqn_forward.5} parent=0 // pred_region
    _
  $region40: #{dqn_forward.5} parent=0 // pred_fallthru
    _
  // Predicated region
  $region41: #{dqn_forward.5} parent=0 // pred_check
    _
  $region42: #{dqn_forward.5} parent=0 // pred_check_branch
    %1448 = sbr.rel (0) target = $region44
  $region43: #{dqn_forward.5} parent=0 // pred_region
    _
  $region44: #{dqn_forward.5} parent=0 // pred_fallthru
    _

</llo_original>
